<compile_context>
chip_gen: v7x
topology: tpu7x:2x2x1
jax: 0.10.0
libtpu: 0.0.40
codegen_flags: <defaults>
</compile_context>

<pallas_src>
import jax
import jax.numpy as jnp
from jax.experimental import pallas as pl
from jax.experimental.pallas import tpu as pltpu

# ---- model hyper-parameters (mirrors GAT.__init__) --------------------------
INPUT_DIM = 32            # opt.input_dim
NUM_NODES = 16            # opt.num_nodes (per graph)
NHIDS = [8, 16, 12]
NHEADS = [4, 3, 4]
FC_DIM = [64, 48, 32]
LIN_INPUT_DIM = 3 * NUM_NODES   # cat([x0, x1, x2], dim=1)
OMIC_DIM = 32             # opt.omic_dim
LABEL_DIM = 1             # opt.label_dim
BATCH = 2                 # number of graphs

HF1 = NHEADS[0] * NHIDS[0]      # 32
HF2 = NHEADS[1] * NHIDS[1]      # 48
BN = BATCH * NUM_NODES          # 32
HMAX = max(NHEADS[0], NHEADS[1])  # 4
LANES = 128
OUT_COLS = LIN_INPUT_DIM + OMIC_DIM + LABEL_DIM   # 81


# ---- static slab layout (row_start, n_rows, n_cols), all starts 8-aligned ----
def _build_layout():
    layout = {}
    row = 0

    def alloc(name, nrows, ncols):
        nonlocal row
        assert ncols <= LANES
        layout[name] = (row, nrows, ncols)
        row += ((nrows + 7) // 8) * 8

    alloc('w1f', INPUT_DIM, HF1 + 2 * NHEADS[0])           # [W1 | Ws1 | Wd1]
    alloc('w2f', HF1, HF2 + 2 * NHEADS[1])                  # [W2 | Ws2 | Wd2]
    alloc('rsel', HMAX * BN, BN)                            # tile(I_BN, (HMAX,1))
    alloc('hsel1', NHEADS[0] * BN, NHEADS[0])               # head one-hots (layer 1)
    alloc('hsel2', NHEADS[1] * BN, NHEADS[1])               # head one-hots (layer 2)
    alloc('cm1', NHEADS[0], HF1)                            # per-head column masks
    alloc('cm2', NHEADS[1], HF2)
    alloc('poolw', INPUT_DIM + HF1 + HF2, 3)                # block-diag pooling weights
    alloc('smat', 3, 3 * NUM_NODES)                         # column -> segment spread
    alloc('etile', BN, 3 * NUM_NODES)                       # node-position selector
    alloc('gmat', BATCH, BN)                                # graph selector
    alloc('mseg', 3 * NUM_NODES, 3 * NUM_NODES)             # per-segment averaging
    alloc('fc1w', LIN_INPUT_DIM, FC_DIM[0])
    alloc('fc2w', FC_DIM[0], FC_DIM[1])
    alloc('fc3w', FC_DIM[1], FC_DIM[2])
    alloc('fc4w', FC_DIM[2], OMIC_DIM)
    alloc('clsw', OMIC_DIM, LABEL_DIM)
    alloc('bias1', 1, HF1)
    alloc('bias2', 1, HF2)
    alloc('poolb', 1, 3 * NUM_NODES)
    alloc('lng', 1, 3 * NUM_NODES)
    alloc('lnb', 1, 3 * NUM_NODES)
    alloc('fc1b', 1, FC_DIM[0])
    alloc('fc2b', 1, FC_DIM[1])
    alloc('fc3b', 1, FC_DIM[2])
    alloc('fc4b', 1, OMIC_DIM)
    alloc('clsb', 1, LABEL_DIM)
    return layout, ((row + 7) // 8) * 8


LAYOUT, SLAB_ROWS = _build_layout()


# ---- small in-kernel helpers -------------------------------------------------
def _elu(x):
    return jnp.where(x > 0, x, jnp.exp(jnp.minimum(x, 0.0)) - 1.0)


def _leaky_relu(x, slope=0.2):
    return jnp.where(x > 0, x, slope * x)


# ---- the single fused forward kernel -----------------------------------------
def fused_gat_kernel(x_ref, adjrep_ref, p_ref, out_ref):
    def rd(name):
        s, r, c = LAYOUT[name]
        return p_ref[s:s + r, 0:c]          # static slice of the param slab

    def dotf(a, b):
        return jnp.dot(a, b, preferred_element_type=jnp.float32)

    x = x_ref[...]                           # [BN, Fin]  (all graphs stacked)

    # ---- one GATConv layer (+ fused ELU), all graphs & heads batched --------
    def gat_layer(h_in, wf_name, b_name, hsel_name, cm_name, heads, fout):
        hf = heads * fout
        rr = heads * BN
        proj = dotf(h_in, rd(wf_name))       # [BN, hf + 2*heads] fused projection
        h = proj[:, 0:hf]                    # per-head features (concatenated)
        e_src = proj[:, hf:hf + heads]       # [BN, H]
        e_dst = proj[:, hf + heads:hf + 2 * heads]
        hsel = rd(hsel_name)                 # [rr, H]   one-hot of head(row)
        rs, _, rc = LAYOUT['rsel']
        rsel = p_ref[rs:rs + rr, 0:rc]       # [rr, BN]  node(row) selector

        # heads stacked along sublanes: row r = head(r)*BN + destination i
        src_blk = dotf(hsel, e_src.T)                                    # [rr, BN]
        dst_col = jnp.sum(dotf(rsel, e_dst) * hsel, axis=-1, keepdims=True)  # [rr, 1]
        logits = _leaky_relu(dst_col + src_blk) + adjrep_ref[0:rr, :]    # additive mask
        m = jnp.max(logits, axis=-1, keepdims=True)
        pexp = jnp.exp(logits - m)           # masked entries underflow to exactly 0
        denom = jnp.sum(pexp, axis=-1, keepdims=True)   # >=1 term: self-loops present
        alpha = pexp * pl.reciprocal(denom, approx=True)

        # aggregation: one full-width MXU dot, then per-head column-mask combine
        pall = dotf(alpha, h)                # [rr, hf]
        cm = rd(cm_name)                     # [H, hf] constant column masks
        out = pall[0:BN, :] * cm[0:1, :]
        for hh in range(1, heads):
            out = out + pall[hh * BN:(hh + 1) * BN, :] * cm[hh:hh + 1, :]
        return _elu(out + rd(b_name))        # bias + F.elu fused

    h1 = gat_layer(x, 'w1f', 'bias1', 'hsel1', 'cm1', NHEADS[0], NHIDS[0])   # [BN, 32]
    h2 = gat_layer(h1, 'w2f', 'bias2', 'hsel2', 'cm2', NHEADS[1], NHIDS[1])  # [BN, 48]

    # ---- fused pooling (mean(x), pool1(h1), pool2(h2)) + scatter to rows -----
    feats = jnp.concatenate([x, h1, h2], axis=-1)          # [BN, 112]
    pooled = dotf(feats, rd('poolw'))                      # [BN, 3]
    scat = dotf(pooled, rd('smat')) * rd('etile')          # [BN, 3N]
    rows = dotf(rd('gmat'), scat) + rd('poolb')            # [B, 3N] = [x0|x1|x2]

    # ---- segmented LayerNorm over each N-wide block (ln0, ln1, ln0-quirk) ----
    mseg = rd('mseg')
    mu = dotf(rows, mseg)
    cen = rows - mu
    var = dotf(cen * cen, mseg)
    gatf = cen * jax.lax.rsqrt(var + 1e-5) * rd('lng') + rd('lnb')   # [B, 3N]

    # ---- encoder (4x Linear+ELU) + classifier + scaled sigmoid ---------------
    henc = _elu(dotf(gatf, rd('fc1w')) + rd('fc1b'))
    henc = _elu(dotf(henc, rd('fc2w')) + rd('fc2b'))
    henc = _elu(dotf(henc, rd('fc3w')) + rd('fc3b'))
    henc = _elu(dotf(henc, rd('fc4w')) + rd('fc4b'))                 # [B, 32]
    o = dotf(henc, rd('clsw')) + rd('clsb')                          # [B, 1]
    o = 1.0 / (1.0 + jnp.exp(-o))        # exact sigmoid keeps out strictly in (-3, 3)
    o = o * 6.0 - 3.0

    pad = jnp.zeros((BATCH, LANES - OUT_COLS), jnp.float32)
    out_ref[...] = jnp.concatenate([gatf, henc, o, pad], axis=-1)    # single store


# ---- host-side parameter packing (done once, NOT per forward call) ------------
def _head_blockdiag(a):
    # a: [H, f] -> block-diag [H*f, H] so  h @ blockdiag == per-head <h_h, a_h>
    H, f = a.shape
    return jnp.einsum('hf,hk->hfk', a, jnp.eye(H, dtype=a.dtype)).reshape(H * f, H)


def pack_params(p):
    N, B = NUM_NODES, BATCH
    eye = lambda n: jnp.eye(n, dtype=jnp.float32)
    ones = lambda s: jnp.ones(s, jnp.float32)

    w1f = jnp.concatenate([p['W1'],
                           p['W1'] @ _head_blockdiag(p['asrc1']),
                           p['W1'] @ _head_blockdiag(p['adst1'])], axis=1)
    w2f = jnp.concatenate([p['W2'],
                           p['W2'] @ _head_blockdiag(p['asrc2']),
                           p['W2'] @ _head_blockdiag(p['adst2'])], axis=1)

    rsel = jnp.tile(eye(BN), (HMAX, 1))
    hsel1 = jnp.kron(eye(NHEADS[0]), ones((BN, 1)))
    hsel2 = jnp.kron(eye(NHEADS[1]), ones((BN, 1)))
    cm1 = jnp.kron(eye(NHEADS[0]), ones((1, NHIDS[0])))
    cm2 = jnp.kron(eye(NHEADS[1]), ones((1, NHIDS[1])))

    poolw = jnp.zeros((INPUT_DIM + HF1 + HF2, 3), jnp.float32)
    poolw = poolw.at[0:INPUT_DIM, 0].set(1.0 / INPUT_DIM)
    poolw = poolw.at[INPUT_DIM:INPUT_DIM + HF1, 1].set(p['pool1_w'])
    poolw = poolw.at[INPUT_DIM + HF1:, 2].set(p['pool2_w'])

    smat = jnp.kron(eye(3), ones((1, N)))
    etile = jnp.tile(jnp.tile(eye(N), (B, 1)), (1, 3))
    gmat = jnp.repeat(eye(B), N, axis=1)
    mseg = jnp.kron(eye(3), jnp.full((N, N), 1.0 / N, jnp.float32))

    poolb = jnp.concatenate([jnp.zeros((N,), jnp.float32),
                             jnp.full((N,), p['pool1_b'], jnp.float32),
                             jnp.full((N,), p['pool2_b'], jnp.float32)]).reshape(1, 3 * N)
    # NOTE: the original module applies layer_norm0 (not layer_norm2) to x2 —
    # this quirk is reproduced faithfully.
    lng = jnp.concatenate([p['ln0_g'], p['ln1_g'], p['ln0_g']]).reshape(1, 3 * N)
    lnb = jnp.concatenate([p['ln0_b'], p['ln1_b'], p['ln0_b']]).reshape(1, 3 * N)

    blocks = {
        'w1f': w1f, 'w2f': w2f, 'rsel': rsel, 'hsel1': hsel1, 'hsel2': hsel2,
        'cm1': cm1, 'cm2': cm2, 'poolw': poolw, 'smat': smat, 'etile': etile,
        'gmat': gmat, 'mseg': mseg,
        'fc1w': p['fc1_w'], 'fc2w': p['fc2_w'], 'fc3w': p['fc3_w'],
        'fc4w': p['fc4_w'], 'clsw': p['cls_w'],
        'bias1': p['bias1'].reshape(1, HF1), 'bias2': p['bias2'].reshape(1, HF2),
        'poolb': poolb, 'lng': lng, 'lnb': lnb,
        'fc1b': p['fc1_b'].reshape(1, -1), 'fc2b': p['fc2_b'].reshape(1, -1),
        'fc3b': p['fc3_b'].reshape(1, -1), 'fc4b': p['fc4_b'].reshape(1, -1),
        'clsb': p['cls_b'].reshape(1, -1),
    }
    slab = jnp.zeros((SLAB_ROWS, LANES), jnp.float32)
    for name, mat in blocks.items():
        s, r, c = LAYOUT[name]
        assert mat.shape == (r, c), (name, mat.shape, (r, c))
        slab = slab.at[s:s + r, 0:c].set(mat.astype(jnp.float32))
    return slab


# ---- forward: 3 input DMAs (x, adj-bias, slab), 1 output DMA ------------------
def gat_forward(slab, x, adj):
    assert x.shape == (BATCH, NUM_NODES, INPUT_DIM)
    assert adj.shape == (BATCH, NUM_NODES, NUM_NODES)
    x_flat = x.reshape(BN, INPUT_DIM).astype(jnp.float32)

    # block-diagonal additive attention bias: 0 on edges, -1e30 elsewhere
    blockdiag = (jnp.eye(BATCH, dtype=jnp.float32)[:, None, :, None]
                 * adj.astype(jnp.float32)[:, :, None, :]).reshape(BN, BN)
    adj_bias = jnp.where(blockdiag > 0.0, 0.0, -1e30).astype(jnp.float32)
    adj_rep = jnp.tile(adj_bias, (HMAX, 1))          # [HMAX*BN, BN]

    vspec = pl.BlockSpec(memory_space=pltpu.MemorySpace.VMEM)
    out_slab = pl.pallas_call(
        fused_gat_kernel,
        out_shape=jax.ShapeDtypeStruct((BATCH, LANES), jnp.float32),
        in_specs=[vspec, vspec, vspec],
        out_specs=vspec,
    )(x_flat, adj_rep, slab)

    gat_feats = out_slab[:, 0:LIN_INPUT_DIM]
    fc_feats = out_slab[:, LIN_INPUT_DIM:LIN_INPUT_DIM + OMIC_DIM]
    out = out_slab[:, LIN_INPUT_DIM + OMIC_DIM:LIN_INPUT_DIM + OMIC_DIM + LABEL_DIM]
    return gat_feats, fc_feats, out


# ---- deterministic parameter init ---------------------------------------------
def init_params(key):
    ks = jax.random.split(key, 24)

    def nrm(k, shape, scale=0.1):
        return (scale * jax.random.normal(k, shape)).astype(jnp.float32)

    p = {}
    p['W1'] = nrm(ks[0], (INPUT_DIM, HF1))
    p['asrc1'] = nrm(ks[1], (NHEADS[0], NHIDS[0]))
    p['adst1'] = nrm(ks[2], (NHEADS[0], NHIDS[0]))
    p['bias1'] = nrm(ks[3], (HF1,), 0.01)
    p['W2'] = nrm(ks[4], (HF1, HF2))
    p['asrc2'] = nrm(ks[5], (NHEADS[1], NHIDS[1]))
    p['adst2'] = nrm(ks[6], (NHEADS[1], NHIDS[1]))
    p['bias2'] = nrm(ks[7], (HF2,), 0.01)
    p['pool1_w'] = nrm(ks[8], (HF1,)); p['pool1_b'] = 0.05
    p['pool2_w'] = nrm(ks[9], (HF2,)); p['pool2_b'] = -0.05
    p['ln0_g'] = jnp.ones((NUM_NODES,), jnp.float32)
    p['ln0_b'] = jnp.zeros((NUM_NODES,), jnp.float32)
    p['ln1_g'] = jnp.ones((NUM_NODES,), jnp.float32)
    p['ln1_b'] = jnp.zeros((NUM_NODES,), jnp.float32)
    p['fc1_w'] = nrm(ks[10], (LIN_INPUT_DIM, FC_DIM[0]))
    p['fc1_b'] = nrm(ks[11], (FC_DIM[0],), 0.01)
    p['fc2_w'] = nrm(ks[12], (FC_DIM[0], FC_DIM[1]))
    p['fc2_b'] = nrm(ks[13], (FC_DIM[1],), 0.01)
    p['fc3_w'] = nrm(ks[14], (FC_DIM[1], FC_DIM[2]))
    p['fc3_b'] = nrm(ks[15], (FC_DIM[2],), 0.01)
    p['fc4_w'] = nrm(ks[16], (FC_DIM[2], OMIC_DIM))
    p['fc4_b'] = nrm(ks[17], (OMIC_DIM,), 0.01)
    p['cls_w'] = nrm(ks[18], (OMIC_DIM, LABEL_DIM))
    p['cls_b'] = nrm(ks[19], (LABEL_DIM,), 0.01)
    return p


if __name__ == "__main__":
    key = jax.random.PRNGKey(0)
    kx, kadj, kp = jax.random.split(key, 3)

    x = jax.random.normal(kx, (BATCH, NUM_NODES, INPUT_DIM), jnp.float32)
    adj = (jax.random.uniform(kadj, (BATCH, NUM_NODES, NUM_NODES)) < 0.3
           ).astype(jnp.float32)
    adj = jnp.maximum(adj, jnp.eye(NUM_NODES, dtype=jnp.float32)[None])  # self-loops

    params = init_params(kp)
    slab = pack_params(params)          # packed once; reused across calls

    fwd = jax.jit(gat_forward)
    gat_feats, fc_feats, out = fwd(slab, x, adj)
    jax.block_until_ready((gat_feats, fc_feats, out))

    assert gat_feats.shape == (BATCH, LIN_INPUT_DIM)
    assert fc_feats.shape == (BATCH, OMIC_DIM)
    assert out.shape == (BATCH, LABEL_DIM)
    assert bool(jnp.all(jnp.isfinite(gat_feats)))
    assert bool(jnp.all(jnp.isfinite(fc_feats)))
    assert bool(jnp.all(jnp.isfinite(out)))
    assert bool(jnp.all(out >= -3.0)) and bool(jnp.all(out <= 3.0))
    print("KERNEL_OK")
</pallas_src>

<mosaic_0001>
module attributes {stable_mosaic.version = 11 : i64} {
  func.func @fused_gat_kernel(%arg0: memref<32x32xf32, #tpu.memory_space<vmem>>, %arg1: memref<128x32xf32, #tpu.memory_space<vmem>>, %arg2: memref<944x128xf32, #tpu.memory_space<vmem>>, %arg3: memref<2x128xf32, #tpu.memory_space<vmem>>) attributes {dimension_semantics = [], scalar_prefetch = 0 : i64, scratch_operands = 0 : i64, tpu.core_type = #tpu.core_type<tc>} {
    %c0 = arith.constant 0 : index
    %c0_0 = arith.constant 0 : index
    %0 = vector.load %arg0[%c0, %c0_0] : memref<32x32xf32, #tpu.memory_space<vmem>>, vector<32x32xf32>
    %c0_1 = arith.constant 0 : index
    %c0_2 = arith.constant 0 : index
    %1 = vector.load %arg2[%c0_1, %c0_2] : memref<944x128xf32, #tpu.memory_space<vmem>>, vector<32x40xf32>
    %cst = arith.constant dense<0.000000e+00> : vector<32x40xf32>
    %2 = tpu.matmul %0, %1, %cst {dimension_numbers = #tpu.dot_dimension_numbers<[1], [0], [0], [1], [0, 0, 1, 1], [], []>} : vector<32x32xf32>, vector<32x40xf32>, vector<32x40xf32> -> vector<32x40xf32>
    %3 = vector.extract_strided_slice %2 {offsets = [0, 0], sizes = [32, 32], strides = [1, 1]} : vector<32x40xf32> to vector<32x32xf32>
    %4 = vector.extract_strided_slice %2 {offsets = [0, 32], sizes = [32, 4], strides = [1, 1]} : vector<32x40xf32> to vector<32x4xf32>
    %5 = vector.extract_strided_slice %2 {offsets = [0, 36], sizes = [32, 4], strides = [1, 1]} : vector<32x40xf32> to vector<32x4xf32>
    %c192 = arith.constant 192 : index
    %c0_3 = arith.constant 0 : index
    %6 = vector.load %arg2[%c192, %c0_3] : memref<944x128xf32, #tpu.memory_space<vmem>>, vector<128x4xf32>
    %c64 = arith.constant 64 : index
    %c0_4 = arith.constant 0 : index
    %7 = vector.load %arg2[%c64, %c0_4] : memref<944x128xf32, #tpu.memory_space<vmem>>, vector<128x32xf32>
    %8 = tpu.transpose %4, [1, 0] : vector<32x4xf32> -> vector<4x32xf32>
    %cst_5 = arith.constant dense<0.000000e+00> : vector<128x32xf32>
    %9 = tpu.matmul %6, %8, %cst_5 {dimension_numbers = #tpu.dot_dimension_numbers<[1], [0], [0], [1], [0, 0, 1, 1], [], []>} : vector<128x4xf32>, vector<4x32xf32>, vector<128x32xf32> -> vector<128x32xf32>
    %cst_6 = arith.constant dense<0.000000e+00> : vector<128x4xf32>
    %10 = tpu.matmul %7, %5, %cst_6 {dimension_numbers = #tpu.dot_dimension_numbers<[1], [0], [0], [1], [0, 0, 1, 1], [], []>} : vector<128x32xf32>, vector<32x4xf32>, vector<128x4xf32> -> vector<128x4xf32>
    %11 = arith.mulf %10, %6 : vector<128x4xf32>
    %cst_7 = arith.constant dense<0.000000e+00> : vector<128xf32>
    %12 = vector.multi_reduction <add>, %11, %cst_7 [1] : vector<128x4xf32> to vector<128xf32>
    %13 = vector.shape_cast %12 : vector<128xf32> to vector<128x1xf32>
    %14 = vector.broadcast %13 : vector<128x1xf32> to vector<128x32xf32>
    %15 = arith.addf %14, %9 : vector<128x32xf32>
    %cst_8 = arith.constant 0.000000e+00 : f32
    %16 = vector.broadcast %cst_8 : f32 to vector<128x32xf32>
    %17 = arith.cmpf ogt, %15, %16 : vector<128x32xf32>
    %cst_9 = arith.constant 2.000000e-01 : f32
    %18 = vector.broadcast %cst_9 : f32 to vector<128x32xf32>
    %19 = arith.mulf %18, %15 : vector<128x32xf32>
    %20 = arith.select %17, %15, %19 : vector<128x32xi1>, vector<128x32xf32>
    %c0_10 = arith.constant 0 : index
    %c0_11 = arith.constant 0 : index
    %21 = vector.load %arg1[%c0_10, %c0_11] : memref<128x32xf32, #tpu.memory_space<vmem>>, vector<128x32xf32>
    %22 = arith.addf %20, %21 : vector<128x32xf32>
    %cst_12 = arith.constant dense<0xFF800000> : vector<128xf32>
    %23 = vector.multi_reduction <maximumf>, %22, %cst_12 [1] : vector<128x32xf32> to vector<128xf32>
    %24 = vector.shape_cast %23 : vector<128xf32> to vector<128x1xf32>
    %25 = vector.broadcast %24 : vector<128x1xf32> to vector<128x32xf32>
    %26 = arith.subf %22, %25 : vector<128x32xf32>
    %27 = math.exp %26 : vector<128x32xf32>
    %cst_13 = arith.constant dense<0.000000e+00> : vector<128xf32>
    %28 = vector.multi_reduction <add>, %27, %cst_13 [1] : vector<128x32xf32> to vector<128xf32>
    %29 = vector.shape_cast %28 : vector<128xf32> to vector<128x1xf32>
    %30 = tpu.reciprocal %29 {approx = true} : vector<128x1xf32> -> vector<128x1xf32>
    %31 = vector.broadcast %30 : vector<128x1xf32> to vector<128x32xf32>
    %32 = arith.mulf %27, %31 : vector<128x32xf32>
    %cst_14 = arith.constant dense<0.000000e+00> : vector<128x32xf32>
    %33 = tpu.matmul %32, %3, %cst_14 {dimension_numbers = #tpu.dot_dimension_numbers<[1], [0], [0], [1], [0, 0, 1, 1], [], []>} : vector<128x32xf32>, vector<32x32xf32>, vector<128x32xf32> -> vector<128x32xf32>
    %c416 = arith.constant 416 : index
    %c0_15 = arith.constant 0 : index
    %34 = vector.load %arg2[%c416, %c0_15] : memref<944x128xf32, #tpu.memory_space<vmem>>, vector<4x32xf32>
    %35 = vector.extract_strided_slice %33 {offsets = [0, 0], sizes = [32, 32], strides = [1, 1]} : vector<128x32xf32> to vector<32x32xf32>
    %36 = vector.extract_strided_slice %34 {offsets = [0, 0], sizes = [1, 32], strides = [1, 1]} : vector<4x32xf32> to vector<1x32xf32>
    %37 = vector.broadcast %36 : vector<1x32xf32> to vector<32x32xf32>
    %38 = arith.mulf %35, %37 : vector<32x32xf32>
    %39 = vector.extract_strided_slice %33 {offsets = [32, 0], sizes = [32, 32], strides = [1, 1]} : vector<128x32xf32> to vector<32x32xf32>
    %40 = vector.extract_strided_slice %34 {offsets = [1, 0], sizes = [1, 32], strides = [1, 1]} : vector<4x32xf32> to vector<1x32xf32>
    %41 = vector.broadcast %40 : vector<1x32xf32> to vector<32x32xf32>
    %42 = arith.mulf %39, %41 : vector<32x32xf32>
    %43 = arith.addf %38, %42 : vector<32x32xf32>
    %44 = vector.extract_strided_slice %33 {offsets = [64, 0], sizes = [32, 32], strides = [1, 1]} : vector<128x32xf32> to vector<32x32xf32>
    %45 = vector.extract_strided_slice %34 {offsets = [2, 0], sizes = [1, 32], strides = [1, 1]} : vector<4x32xf32> to vector<1x32xf32>
    %46 = vector.broadcast %45 : vector<1x32xf32> to vector<32x32xf32>
    %47 = arith.mulf %44, %46 : vector<32x32xf32>
    %48 = arith.addf %43, %47 : vector<32x32xf32>
    %49 = vector.extract_strided_slice %33 {offsets = [96, 0], sizes = [32, 32], strides = [1, 1]} : vector<128x32xf32> to vector<32x32xf32>
    %50 = vector.extract_strided_slice %34 {offsets = [3, 0], sizes = [1, 32], strides = [1, 1]} : vector<4x32xf32> to vector<1x32xf32>
    %51 = vector.broadcast %50 : vector<1x32xf32> to vector<32x32xf32>
    %52 = arith.mulf %49, %51 : vector<32x32xf32>
    %53 = arith.addf %48, %52 : vector<32x32xf32>
    %c864 = arith.constant 864 : index
    %c0_16 = arith.constant 0 : index
    %54 = vector.load %arg2[%c864, %c0_16] : memref<944x128xf32, #tpu.memory_space<vmem>>, vector<1x32xf32>
    %55 = vector.broadcast %54 : vector<1x32xf32> to vector<32x32xf32>
    %56 = arith.addf %53, %55 : vector<32x32xf32>
    %cst_17 = arith.constant 0.000000e+00 : f32
    %57 = vector.broadcast %cst_17 : f32 to vector<32x32xf32>
    %58 = arith.cmpf ogt, %56, %57 : vector<32x32xf32>
    %cst_18 = arith.constant 0.000000e+00 : f32
    %59 = vector.broadcast %cst_18 : f32 to vector<32x32xf32>
    %60 = arith.minimumf %56, %59 : vector<32x32xf32>
    %61 = math.exp %60 : vector<32x32xf32>
    %cst_19 = arith.constant 1.000000e+00 : f32
    %62 = vector.broadcast %cst_19 : f32 to vector<32x32xf32>
    %63 = arith.subf %61, %62 : vector<32x32xf32>
    %64 = arith.select %58, %56, %63 : vector<32x32xi1>, vector<32x32xf32>
    %c32 = arith.constant 32 : index
    %c0_20 = arith.constant 0 : index
    %65 = vector.load %arg2[%c32, %c0_20] : memref<944x128xf32, #tpu.memory_space<vmem>>, vector<32x54xf32>
    %cst_21 = arith.constant dense<0.000000e+00> : vector<32x54xf32>
    %66 = tpu.matmul %64, %65, %cst_21 {dimension_numbers = #tpu.dot_dimension_numbers<[1], [0], [0], [1], [0, 0, 1, 1], [], []>} : vector<32x32xf32>, vector<32x54xf32>, vector<32x54xf32> -> vector<32x54xf32>
    %67 = vector.extract_strided_slice %66 {offsets = [0, 0], sizes = [32, 48], strides = [1, 1]} : vector<32x54xf32> to vector<32x48xf32>
    %68 = vector.extract_strided_slice %66 {offsets = [0, 48], sizes = [32, 3], strides = [1, 1]} : vector<32x54xf32> to vector<32x3xf32>
    %69 = vector.extract_strided_slice %66 {offsets = [0, 51], sizes = [32, 3], strides = [1, 1]} : vector<32x54xf32> to vector<32x3xf32>
    %c320 = arith.constant 320 : index
    %c0_22 = arith.constant 0 : index
    %70 = vector.load %arg2[%c320, %c0_22] : memref<944x128xf32, #tpu.memory_space<vmem>>, vector<96x3xf32>
    %c64_23 = arith.constant 64 : index
    %c0_24 = arith.constant 0 : index
    %71 = vector.load %arg2[%c64_23, %c0_24] : memref<944x128xf32, #tpu.memory_space<vmem>>, vector<96x32xf32>
    %72 = tpu.transpose %68, [1, 0] : vector<32x3xf32> -> vector<3x32xf32>
    %cst_25 = arith.constant dense<0.000000e+00> : vector<96x32xf32>
    %73 = tpu.matmul %70, %72, %cst_25 {dimension_numbers = #tpu.dot_dimension_numbers<[1], [0], [0], [1], [0, 0, 1, 1], [], []>} : vector<96x3xf32>, vector<3x32xf32>, vector<96x32xf32> -> vector<96x32xf32>
    %cst_26 = arith.constant dense<0.000000e+00> : vector<96x3xf32>
    %74 = tpu.matmul %71, %69, %cst_26 {dimension_numbers = #tpu.dot_dimension_numbers<[1], [0], [0], [1], [0, 0, 1, 1], [], []>} : vector<96x32xf32>, vector<32x3xf32>, vector<96x3xf32> -> vector<96x3xf32>
    %75 = arith.mulf %74, %70 : vector<96x3xf32>
    %cst_27 = arith.constant dense<0.000000e+00> : vector<96xf32>
    %76 = vector.multi_reduction <add>, %75, %cst_27 [1] : vector<96x3xf32> to vector<96xf32>
    %77 = vector.shape_cast %76 : vector<96xf32> to vector<96x1xf32>
    %78 = vector.broadcast %77 : vector<96x1xf32> to vector<96x32xf32>
    %79 = arith.addf %78, %73 : vector<96x32xf32>
    %cst_28 = arith.constant 0.000000e+00 : f32
    %80 = vector.broadcast %cst_28 : f32 to vector<96x32xf32>
    %81 = arith.cmpf ogt, %79, %80 : vector<96x32xf32>
    %cst_29 = arith.constant 2.000000e-01 : f32
    %82 = vector.broadcast %cst_29 : f32 to vector<96x32xf32>
    %83 = arith.mulf %82, %79 : vector<96x32xf32>
    %84 = arith.select %81, %79, %83 : vector<96x32xi1>, vector<96x32xf32>
    %c0_30 = arith.constant 0 : index
    %c0_31 = arith.constant 0 : index
    %85 = vector.load %arg1[%c0_30, %c0_31] : memref<128x32xf32, #tpu.memory_space<vmem>>, vector<96x32xf32>
    %86 = arith.addf %84, %85 : vector<96x32xf32>
    %cst_32 = arith.constant dense<0xFF800000> : vector<96xf32>
    %87 = vector.multi_reduction <maximumf>, %86, %cst_32 [1] : vector<96x32xf32> to vector<96xf32>
    %88 = vector.shape_cast %87 : vector<96xf32> to vector<96x1xf32>
    %89 = vector.broadcast %88 : vector<96x1xf32> to vector<96x32xf32>
    %90 = arith.subf %86, %89 : vector<96x32xf32>
    %91 = math.exp %90 : vector<96x32xf32>
    %cst_33 = arith.constant dense<0.000000e+00> : vector<96xf32>
    %92 = vector.multi_reduction <add>, %91, %cst_33 [1] : vector<96x32xf32> to vector<96xf32>
    %93 = vector.shape_cast %92 : vector<96xf32> to vector<96x1xf32>
    %94 = tpu.reciprocal %93 {approx = true} : vector<96x1xf32> -> vector<96x1xf32>
    %95 = vector.broadcast %94 : vector<96x1xf32> to vector<96x32xf32>
    %96 = arith.mulf %91, %95 : vector<96x32xf32>
    %cst_34 = arith.constant dense<0.000000e+00> : vector<96x48xf32>
    %97 = tpu.matmul %96, %67, %cst_34 {dimension_numbers = #tpu.dot_dimension_numbers<[1], [0], [0], [1], [0, 0, 1, 1], [], []>} : vector<96x32xf32>, vector<32x48xf32>, vector<96x48xf32> -> vector<96x48xf32>
    %c424 = arith.constant 424 : index
    %c0_35 = arith.constant 0 : index
    %98 = vector.load %arg2[%c424, %c0_35] : memref<944x128xf32, #tpu.memory_space<vmem>>, vector<3x48xf32>
    %99 = vector.extract_strided_slice %97 {offsets = [0, 0], sizes = [32, 48], strides = [1, 1]} : vector<96x48xf32> to vector<32x48xf32>
    %100 = vector.extract_strided_slice %98 {offsets = [0, 0], sizes = [1, 48], strides = [1, 1]} : vector<3x48xf32> to vector<1x48xf32>
    %101 = vector.broadcast %100 : vector<1x48xf32> to vector<32x48xf32>
    %102 = arith.mulf %99, %101 : vector<32x48xf32>
    %103 = vector.extract_strided_slice %97 {offsets = [32, 0], sizes = [32, 48], strides = [1, 1]} : vector<96x48xf32> to vector<32x48xf32>
    %104 = vector.extract_strided_slice %98 {offsets = [1, 0], sizes = [1, 48], strides = [1, 1]} : vector<3x48xf32> to vector<1x48xf32>
    %105 = vector.broadcast %104 : vector<1x48xf32> to vector<32x48xf32>
    %106 = arith.mulf %103, %105 : vector<32x48xf32>
    %107 = arith.addf %102, %106 : vector<32x48xf32>
    %108 = vector.extract_strided_slice %97 {offsets = [64, 0], sizes = [32, 48], strides = [1, 1]} : vector<96x48xf32> to vector<32x48xf32>
    %109 = vector.extract_strided_slice %98 {offsets = [2, 0], sizes = [1, 48], strides = [1, 1]} : vector<3x48xf32> to vector<1x48xf32>
    %110 = vector.broadcast %109 : vector<1x48xf32> to vector<32x48xf32>
    %111 = arith.mulf %108, %110 : vector<32x48xf32>
    %112 = arith.addf %107, %111 : vector<32x48xf32>
    %c872 = arith.constant 872 : index
    %c0_36 = arith.constant 0 : index
    %113 = vector.load %arg2[%c872, %c0_36] : memref<944x128xf32, #tpu.memory_space<vmem>>, vector<1x48xf32>
    %114 = vector.broadcast %113 : vector<1x48xf32> to vector<32x48xf32>
    %115 = arith.addf %112, %114 : vector<32x48xf32>
    %cst_37 = arith.constant 0.000000e+00 : f32
    %116 = vector.broadcast %cst_37 : f32 to vector<32x48xf32>
    %117 = arith.cmpf ogt, %115, %116 : vector<32x48xf32>
    %cst_38 = arith.constant 0.000000e+00 : f32
    %118 = vector.broadcast %cst_38 : f32 to vector<32x48xf32>
    %119 = arith.minimumf %115, %118 : vector<32x48xf32>
    %120 = math.exp %119 : vector<32x48xf32>
    %cst_39 = arith.constant 1.000000e+00 : f32
    %121 = vector.broadcast %cst_39 : f32 to vector<32x48xf32>
    %122 = arith.subf %120, %121 : vector<32x48xf32>
    %123 = arith.select %117, %115, %122 : vector<32x48xi1>, vector<32x48xf32>
    %124 = tpu.concatenate %0, %64, %123 in 1 : vector<32x32xf32>, vector<32x32xf32>, vector<32x48xf32> -> vector<32x112xf32>
    %c432 = arith.constant 432 : index
    %c0_40 = arith.constant 0 : index
    %125 = vector.load %arg2[%c432, %c0_40] : memref<944x128xf32, #tpu.memory_space<vmem>>, vector<112x3xf32>
    %cst_41 = arith.constant dense<0.000000e+00> : vector<32x3xf32>
    %126 = tpu.matmul %124, %125, %cst_41 {dimension_numbers = #tpu.dot_dimension_numbers<[1], [0], [0], [1], [0, 0, 1, 1], [], []>} : vector<32x112xf32>, vector<112x3xf32>, vector<32x3xf32> -> vector<32x3xf32>
    %c544 = arith.constant 544 : index
    %c0_42 = arith.constant 0 : index
    %127 = vector.load %arg2[%c544, %c0_42] : memref<944x128xf32, #tpu.memory_space<vmem>>, vector<3x48xf32>
    %cst_43 = arith.constant dense<0.000000e+00> : vector<32x48xf32>
    %128 = tpu.matmul %126, %127, %cst_43 {dimension_numbers = #tpu.dot_dimension_numbers<[1], [0], [0], [1], [0, 0, 1, 1], [], []>} : vector<32x3xf32>, vector<3x48xf32>, vector<32x48xf32> -> vector<32x48xf32>
    %c552 = arith.constant 552 : index
    %c0_44 = arith.constant 0 : index
    %129 = vector.load %arg2[%c552, %c0_44] : memref<944x128xf32, #tpu.memory_space<vmem>>, vector<32x48xf32>
    %130 = arith.mulf %128, %129 : vector<32x48xf32>
    %c584 = arith.constant 584 : index
    %c0_45 = arith.constant 0 : index
    %131 = vector.load %arg2[%c584, %c0_45] : memref<944x128xf32, #tpu.memory_space<vmem>>, vector<2x32xf32>
    %cst_46 = arith.constant dense<0.000000e+00> : vector<2x48xf32>
    %132 = tpu.matmul %131, %130, %cst_46 {dimension_numbers = #tpu.dot_dimension_numbers<[1], [0], [0], [1], [0, 0, 1, 1], [], []>} : vector<2x32xf32>, vector<32x48xf32>, vector<2x48xf32> -> vector<2x48xf32>
    %c880 = arith.constant 880 : index
    %c0_47 = arith.constant 0 : index
    %133 = vector.load %arg2[%c880, %c0_47] : memref<944x128xf32, #tpu.memory_space<vmem>>, vector<1x48xf32>
    %134 = vector.broadcast %133 : vector<1x48xf32> to vector<2x48xf32>
    %135 = arith.addf %132, %134 : vector<2x48xf32>
    %c592 = arith.constant 592 : index
    %c0_48 = arith.constant 0 : index
    %136 = vector.load %arg2[%c592, %c0_48] : memref<944x128xf32, #tpu.memory_space<vmem>>, vector<48x48xf32>
    %cst_49 = arith.constant dense<0.000000e+00> : vector<2x48xf32>
    %137 = tpu.matmul %135, %136, %cst_49 {dimension_numbers = #tpu.dot_dimension_numbers<[1], [0], [0], [1], [0, 0, 1, 1], [], []>} : vector<2x48xf32>, vector<48x48xf32>, vector<2x48xf32> -> vector<2x48xf32>
    %138 = arith.subf %135, %137 : vector<2x48xf32>
    %139 = arith.mulf %138, %138 : vector<2x48xf32>
    %cst_50 = arith.constant dense<0.000000e+00> : vector<2x48xf32>
    %140 = tpu.matmul %139, %136, %cst_50 {dimension_numbers = #tpu.dot_dimension_numbers<[1], [0], [0], [1], [0, 0, 1, 1], [], []>} : vector<2x48xf32>, vector<48x48xf32>, vector<2x48xf32> -> vector<2x48xf32>
    %cst_51 = arith.constant 9.99999974E-6 : f32
    %141 = vector.broadcast %cst_51 : f32 to vector<2x48xf32>
    %142 = arith.addf %140, %141 : vector<2x48xf32>
    %143 = math.rsqrt %142 : vector<2x48xf32>
    %144 = arith.mulf %138, %143 : vector<2x48xf32>
    %c888 = arith.constant 888 : index
    %c0_52 = arith.constant 0 : index
    %145 = vector.load %arg2[%c888, %c0_52] : memref<944x128xf32, #tpu.memory_space<vmem>>, vector<1x48xf32>
    %146 = vector.broadcast %145 : vector<1x48xf32> to vector<2x48xf32>
    %147 = arith.mulf %144, %146 : vector<2x48xf32>
    %c896 = arith.constant 896 : index
    %c0_53 = arith.constant 0 : index
    %148 = vector.load %arg2[%c896, %c0_53] : memref<944x128xf32, #tpu.memory_space<vmem>>, vector<1x48xf32>
    %149 = vector.broadcast %148 : vector<1x48xf32> to vector<2x48xf32>
    %150 = arith.addf %147, %149 : vector<2x48xf32>
    %c640 = arith.constant 640 : index
    %c0_54 = arith.constant 0 : index
    %151 = vector.load %arg2[%c640, %c0_54] : memref<944x128xf32, #tpu.memory_space<vmem>>, vector<48x64xf32>
    %cst_55 = arith.constant dense<0.000000e+00> : vector<2x64xf32>
    %152 = tpu.matmul %150, %151, %cst_55 {dimension_numbers = #tpu.dot_dimension_numbers<[1], [0], [0], [1], [0, 0, 1, 1], [], []>} : vector<2x48xf32>, vector<48x64xf32>, vector<2x64xf32> -> vector<2x64xf32>
    %c904 = arith.constant 904 : index
    %c0_56 = arith.constant 0 : index
    %153 = vector.load %arg2[%c904, %c0_56] : memref<944x128xf32, #tpu.memory_space<vmem>>, vector<1x64xf32>
    %154 = vector.broadcast %153 : vector<1x64xf32> to vector<2x64xf32>
    %155 = arith.addf %152, %154 : vector<2x64xf32>
    %cst_57 = arith.constant 0.000000e+00 : f32
    %156 = vector.broadcast %cst_57 : f32 to vector<2x64xf32>
    %157 = arith.cmpf ogt, %155, %156 : vector<2x64xf32>
    %cst_58 = arith.constant 0.000000e+00 : f32
    %158 = vector.broadcast %cst_58 : f32 to vector<2x64xf32>
    %159 = arith.minimumf %155, %158 : vector<2x64xf32>
    %160 = math.exp %159 : vector<2x64xf32>
    %cst_59 = arith.constant 1.000000e+00 : f32
    %161 = vector.broadcast %cst_59 : f32 to vector<2x64xf32>
    %162 = arith.subf %160, %161 : vector<2x64xf32>
    %163 = arith.select %157, %155, %162 : vector<2x64xi1>, vector<2x64xf32>
    %c688 = arith.constant 688 : index
    %c0_60 = arith.constant 0 : index
    %164 = vector.load %arg2[%c688, %c0_60] : memref<944x128xf32, #tpu.memory_space<vmem>>, vector<64x48xf32>
    %cst_61 = arith.constant dense<0.000000e+00> : vector<2x48xf32>
    %165 = tpu.matmul %163, %164, %cst_61 {dimension_numbers = #tpu.dot_dimension_numbers<[1], [0], [0], [1], [0, 0, 1, 1], [], []>} : vector<2x64xf32>, vector<64x48xf32>, vector<2x48xf32> -> vector<2x48xf32>
    %c912 = arith.constant 912 : index
    %c0_62 = arith.constant 0 : index
    %166 = vector.load %arg2[%c912, %c0_62] : memref<944x128xf32, #tpu.memory_space<vmem>>, vector<1x48xf32>
    %167 = vector.broadcast %166 : vector<1x48xf32> to vector<2x48xf32>
    %168 = arith.addf %165, %167 : vector<2x48xf32>
    %cst_63 = arith.constant 0.000000e+00 : f32
    %169 = vector.broadcast %cst_63 : f32 to vector<2x48xf32>
    %170 = arith.cmpf ogt, %168, %169 : vector<2x48xf32>
    %cst_64 = arith.constant 0.000000e+00 : f32
    %171 = vector.broadcast %cst_64 : f32 to vector<2x48xf32>
    %172 = arith.minimumf %168, %171 : vector<2x48xf32>
    %173 = math.exp %172 : vector<2x48xf32>
    %cst_65 = arith.constant 1.000000e+00 : f32
    %174 = vector.broadcast %cst_65 : f32 to vector<2x48xf32>
    %175 = arith.subf %173, %174 : vector<2x48xf32>
    %176 = arith.select %170, %168, %175 : vector<2x48xi1>, vector<2x48xf32>
    %c752 = arith.constant 752 : index
    %c0_66 = arith.constant 0 : index
    %177 = vector.load %arg2[%c752, %c0_66] : memref<944x128xf32, #tpu.memory_space<vmem>>, vector<48x32xf32>
    %cst_67 = arith.constant dense<0.000000e+00> : vector<2x32xf32>
    %178 = tpu.matmul %176, %177, %cst_67 {dimension_numbers = #tpu.dot_dimension_numbers<[1], [0], [0], [1], [0, 0, 1, 1], [], []>} : vector<2x48xf32>, vector<48x32xf32>, vector<2x32xf32> -> vector<2x32xf32>
    %c920 = arith.constant 920 : index
    %c0_68 = arith.constant 0 : index
    %179 = vector.load %arg2[%c920, %c0_68] : memref<944x128xf32, #tpu.memory_space<vmem>>, vector<1x32xf32>
    %180 = vector.broadcast %179 : vector<1x32xf32> to vector<2x32xf32>
    %181 = arith.addf %178, %180 : vector<2x32xf32>
    %cst_69 = arith.constant 0.000000e+00 : f32
    %182 = vector.broadcast %cst_69 : f32 to vector<2x32xf32>
    %183 = arith.cmpf ogt, %181, %182 : vector<2x32xf32>
    %cst_70 = arith.constant 0.000000e+00 : f32
    %184 = vector.broadcast %cst_70 : f32 to vector<2x32xf32>
    %185 = arith.minimumf %181, %184 : vector<2x32xf32>
    %186 = math.exp %185 : vector<2x32xf32>
    %cst_71 = arith.constant 1.000000e+00 : f32
    %187 = vector.broadcast %cst_71 : f32 to vector<2x32xf32>
    %188 = arith.subf %186, %187 : vector<2x32xf32>
    %189 = arith.select %183, %181, %188 : vector<2x32xi1>, vector<2x32xf32>
    %c800 = arith.constant 800 : index
    %c0_72 = arith.constant 0 : index
    %190 = vector.load %arg2[%c800, %c0_72] : memref<944x128xf32, #tpu.memory_space<vmem>>, vector<32x32xf32>
    %cst_73 = arith.constant dense<0.000000e+00> : vector<2x32xf32>
    %191 = tpu.matmul %189, %190, %cst_73 {dimension_numbers = #tpu.dot_dimension_numbers<[1], [0], [0], [1], [0, 0, 1, 1], [], []>} : vector<2x32xf32>, vector<32x32xf32>, vector<2x32xf32> -> vector<2x32xf32>
    %c928 = arith.constant 928 : index
    %c0_74 = arith.constant 0 : index
    %192 = vector.load %arg2[%c928, %c0_74] : memref<944x128xf32, #tpu.memory_space<vmem>>, vector<1x32xf32>
    %193 = vector.broadcast %192 : vector<1x32xf32> to vector<2x32xf32>
    %194 = arith.addf %191, %193 : vector<2x32xf32>
    %cst_75 = arith.constant 0.000000e+00 : f32
    %195 = vector.broadcast %cst_75 : f32 to vector<2x32xf32>
    %196 = arith.cmpf ogt, %194, %195 : vector<2x32xf32>
    %cst_76 = arith.constant 0.000000e+00 : f32
    %197 = vector.broadcast %cst_76 : f32 to vector<2x32xf32>
    %198 = arith.minimumf %194, %197 : vector<2x32xf32>
    %199 = math.exp %198 : vector<2x32xf32>
    %cst_77 = arith.constant 1.000000e+00 : f32
    %200 = vector.broadcast %cst_77 : f32 to vector<2x32xf32>
    %201 = arith.subf %199, %200 : vector<2x32xf32>
    %202 = arith.select %196, %194, %201 : vector<2x32xi1>, vector<2x32xf32>
    %c832 = arith.constant 832 : index
    %c0_78 = arith.constant 0 : index
    %203 = vector.load %arg2[%c832, %c0_78] : memref<944x128xf32, #tpu.memory_space<vmem>>, vector<32x1xf32>
    %cst_79 = arith.constant dense<0.000000e+00> : vector<2x1xf32>
    %204 = tpu.matmul %202, %203, %cst_79 {dimension_numbers = #tpu.dot_dimension_numbers<[1], [0], [0], [1], [0, 0, 1, 1], [], []>} : vector<2x32xf32>, vector<32x1xf32>, vector<2x1xf32> -> vector<2x1xf32>
    %c936 = arith.constant 936 : index
    %c0_80 = arith.constant 0 : index
    %205 = vector.load %arg2[%c936, %c0_80] : memref<944x128xf32, #tpu.memory_space<vmem>>, vector<1x1xf32>
    %206 = vector.broadcast %205 : vector<1x1xf32> to vector<2x1xf32>
    %207 = arith.addf %204, %206 : vector<2x1xf32>
    %cst_81 = arith.constant 0.000000e+00 : f32
    %208 = vector.broadcast %cst_81 : f32 to vector<2x1xf32>
    %209 = arith.subf %208, %207 : vector<2x1xf32>
    %210 = math.exp %209 : vector<2x1xf32>
    %cst_82 = arith.constant 1.000000e+00 : f32
    %211 = vector.broadcast %cst_82 : f32 to vector<2x1xf32>
    %212 = arith.addf %211, %210 : vector<2x1xf32>
    %cst_83 = arith.constant 1.000000e+00 : f32
    %213 = vector.broadcast %cst_83 : f32 to vector<2x1xf32>
    %214 = arith.divf %213, %212 : vector<2x1xf32>
    %cst_84 = arith.constant 6.000000e+00 : f32
    %215 = vector.broadcast %cst_84 : f32 to vector<2x1xf32>
    %216 = arith.mulf %214, %215 : vector<2x1xf32>
    %cst_85 = arith.constant 3.000000e+00 : f32
    %217 = vector.broadcast %cst_85 : f32 to vector<2x1xf32>
    %218 = arith.subf %216, %217 : vector<2x1xf32>
    %cst_86 = arith.constant 0.000000e+00 : f32
    %219 = vector.broadcast %cst_86 : f32 to vector<2x47xf32>
    %220 = tpu.concatenate %150, %202, %218, %219 in 1 : vector<2x48xf32>, vector<2x32xf32>, vector<2x1xf32>, vector<2x47xf32> -> vector<2x128xf32>
    %c0_87 = arith.constant 0 : index
    %c0_88 = arith.constant 0 : index
    %221 = vector.load %arg3[%c0_87, %c0_88] : memref<2x128xf32, #tpu.memory_space<vmem>>, vector<2x128xf32>
    tpu.vector_store %arg3[%c0_87, %c0_88], %220 {strides = array<i32>} : memref<2x128xf32, #tpu.memory_space<vmem>>, vector<2x128xf32>,
    return
  }
}

</mosaic_0001>

<llo_original>
// kernel: gat_forward.1
$region0: #{gat_forward.1}
  #allocation0 [shape = 'u32[]', space=smem, size = 0x4, offset = 0x4, fixed_abs, tag = 'smem constant byte address 0x4 - core index']
  #allocation1 [shape = 'u32[144,128]{1,0:T(1,128)}', space=vmem, size = 0x12000, scoped, tag = 'internal scratch']
  %s0 = inlined_call_operand.vmem [shape: f32[32,32], index: 0, kind: input, shape index: {}]
  %s1 = inlined_call_operand.vmem [shape: f32[128,32], index: 1, kind: input, shape index: {}]
  %s2 = inlined_call_operand.hbm [shape: f32[944,128], index: 2, kind: input, shape index: {}]
  %s3 = inlined_call_operand.vmem [shape: f32[2,128], index: 3, kind: output, shape index: {}]
  %s4 = sld [smem:[#allocation0]]
  $region26: #{gat_forward.1} parent=0
    _
  %s6 = ssub.s32 1, %s4
  %s7 = scalar_select 0, %s6, %s4
  $region1: #{gat_forward.1} parent=0
    #allocation2 [shape = 'u8[483328]{0}', space=vmem, size = 0x76000, scoped, tag = 'input window, operand 2, single buffered']
    #allocation3 [shape = 's32[1]{0}', space=sflag, size = 0x4, scoped, tag = 'scoped memory for gat_forward.1']
    %8 = vsyncpa [#allocation3], 0
    // Predicated region
    $region2: #{gat_forward.1} parent=1 // pred_check
      _
    $region3: #{gat_forward.1} parent=1 // pred_check_branch
      %10 = sbr.rel (0) target = $region5
    $region4: #{gat_forward.1} parent=1 // pred_region
      _
    $region5: #{gat_forward.1} parent=1 // pred_fallthru
      _
    // Predicated region
    $region6: #{gat_forward.1} parent=1 // pred_check
      _
    $region7: #{gat_forward.1} parent=1 // pred_check_branch
      %12 = sbr.rel (0) target = $region9
    $region8: #{gat_forward.1} parent=1 // pred_region
      _
    $region9: #{gat_forward.1} parent=1 // pred_fallthru
      _
    // Predicated region
    $region10: #{gat_forward.1} parent=1 // pred_check
      _
    $region11: #{gat_forward.1} parent=1 // pred_check_branch
      %14 = sbr.rel (0) target = $region13
    $region12: #{gat_forward.1} parent=1 // pred_region
      %s16 = ssub.s32 15104, 15104
      %17 = vsyncadd [#allocation3], %s16
      %s18 = sshll.u32 [#allocation2], 4
      %s19 = int_to_ptr.vmem [resolvable:$true] %s18
      %24 = dma.hbm_to_vmem [thread:$0]  %s2, 15104, %s19, [#allocation3], 128, 128, 8
    $region13: #{gat_forward.1} parent=1 // pred_fallthru
      _
    // Predicated region
    $region14: #{gat_forward.1} parent=1 // pred_check
      _
    $region15: #{gat_forward.1} parent=1 // pred_check_branch
      %26 = sbr.rel (0) target = $region17
    $region16: #{gat_forward.1} parent=1 // pred_region
      %27 = dma.done [#allocation3], 15104
    $region17: #{gat_forward.1} parent=1 // pred_fallthru
      _
    %v28 = vld [vmem:[%s0] sm:$0xff]
    %v29 = vld [vmem:[%s0 + $0x8] sm:$0xff]
    %v30 = vld [vmem:[%s0 + $0x10] sm:$0xff]
    %v31 = vld [vmem:[%s0 + $0x18] sm:$0xff]
    %v32 = vld [vmem:[#allocation2] sm:$0xff]
    %v33 = vld [vmem:[#allocation2 + $0x8] sm:$0xff]
    %v34 = vld [vmem:[#allocation2 + $0x10] sm:$0xff]
    %v35 = vld [vmem:[#allocation2 + $0x18] sm:$0xff]
    %vm36 = vcmask 261120
    %v38 = vsel %vm36, %v28, 0
    %v41 = vsel %vm36, %v29, 0
    %v44 = vsel %vm36, %v30, 0
    %v47 = vsel %vm36, %v31, 0
    %49 = vmatprep.subr.mxu0 0.0
    %50 = vmatpush1.msra.mxu0 %v32
    %51 = vmatprep.subr.mxu0 0.0
    %52 = vmatpush1.msra.mxu0 %v33
    %53 = vmatprep.subr.mxu0 0.0
    %54 = vmatpush1.msra.mxu0 %v34
    %55 = vmatprep.subr.mxu0 0.0
    %56 = vmatpush1.msra.mxu0 %v35
    %57 = vmatprep.subr.mxu0 0.0
    %58 = vmatpush1.msra.mxu0 0.0
    %59 = vmatprep.subr.mxu0 0.0
    %60 = vmatpush1.msra.mxu0 0.0
    %61 = vmatprep.subr.mxu0 0.0
    %62 = vmatpush1.msra.mxu0 0.0
    %63 = vmatprep.subr.mxu0 0.0
    %64 = vmatpush1.msra.mxu0 0.0
    %65 = vmatprep.subr.mxu0 0.0
    %66 = vmatpush1.msra.mxu0 0.0
    %67 = vmatprep.subr.mxu0 0.0
    %68 = vmatpush1.msra.mxu0 0.0
    %69 = vmatprep.subr.mxu0 0.0
    %70 = vmatpush1.msra.mxu0 0.0
    %71 = vmatprep.subr.mxu0 0.0
    %72 = vmatpush1.msra.mxu0 0.0
    %73 = vmatprep.subr.mxu0 0.0
    %74 = vmatpush1.msra.mxu0 0.0
    %75 = vmatprep.subr.mxu0 0.0
    %76 = vmatpush1.msra.mxu0 0.0
    %77 = vmatprep.subr.mxu0 0.0
    %78 = vmatpush1.msra.mxu0 0.0
    %79 = vmatprep.subr.mxu0 0.0
    %80 = vmatpush1.msra.mxu0 0.0
    %81 = vmatprep.subr.mxu0 0.0
    %82 = vmatpush1.msra.mxu0 0.0
    %83 = vmatprep.subr.mxu0 0.0
    %84 = vmatpush1.msra.mxu0 0.0
    %85 = vmatprep.subr.mxu0 0.0
    %86 = vmatpush1.msra.mxu0 0.0
    %87 = vmatprep.subr.mxu0 0.0
    %88 = vmatpush1.msra.mxu0 0.0
    %89 = vmatprep.subr.mxu0 0.0
    %90 = vmatpush1.msra.mxu0 0.0
    %91 = vmatprep.subr.mxu0 0.0
    %92 = vmatpush1.msra.mxu0 0.0
    %93 = vmatprep.subr.mxu0 0.0
    %94 = vmatpush1.msra.mxu0 0.0
    %95 = vmatprep.subr.mxu0 0.0
    %96 = vmatpush1.msra.mxu0 0.0
    %97 = vmatprep.subr.mxu0 0.0
    %98 = vmatpush1.msra.mxu0 0.0
    %99 = vmatprep.subr.mxu0 0.0
    %100 = vmatpush1.msra.mxu0 0.0
    %101 = vmatprep.subr.mxu0 0.0
    %102 = vmatpush1.msra.mxu0 0.0
    %103 = vmatprep.subr.mxu0 0.0
    %104 = vmatpush1.msra.mxu0 0.0
    %105 = vmatprep.subr.mxu0 0.0
    %106 = vmatpush1.msra.mxu0 0.0
    %107 = vmatprep.subr.mxu0 0.0
    %108 = vmatpush1.msra.mxu0 0.0
    %109 = vmatprep.subr.mxu0 0.0
    %110 = vmatpush1.msra.mxu0 0.0
    %111 = vmatprep.subr.mxu0 0.0
    %112 = vmatpush1.msra.mxu0 0.0
    %113 = vmatprep.mubr.f32.mxu0 0.0
    %114 = vmatmul.mubr.f32.gmra.mrb[0].mxu0 %v38
    %v115 = vpop.f32.mrb[0].mxu0
    %v116 = vadd.f32 0.0, %v115
    %v117 = vpop.f32.mrb[0].mxu0
    %118 = vmatprep.mubr.f32.mxu0 0.0
    %119 = vmatmul.mubr.f32.gmra.mrb[0].mxu0 %v41
    %v120 = vpop.f32.mrb[0].mxu0
    %v121 = vadd.f32 0.0, %v120
    %v122 = vpop.f32.mrb[0].mxu0
    %123 = vmatprep.mubr.f32.mxu0 0.0
    %124 = vmatmul.mubr.f32.gmra.mrb[0].mxu0 %v44
    %v125 = vpop.f32.mrb[0].mxu0
    %v126 = vadd.f32 0.0, %v125
    %v127 = vpop.f32.mrb[0].mxu0
    %128 = vmatprep.mubr.f32.mxu0 0.0
    %129 = vmatmul.mubr.f32.gmra.mrb[0].mxu0 %v47
    %v130 = vpop.f32.mrb[0].mxu0
    %v131 = vadd.f32 0.0, %v130
    %v132 = vpop.f32.mrb[0].mxu0
    %133 = vdwg.mxu0
    %v134 = vld [vmem:[#allocation2 + $0xc0] sm:$0xff]
    %v135 = vld [vmem:[#allocation2 + $0xc8] sm:$0xff]
    %v136 = vld [vmem:[#allocation2 + $0xd0] sm:$0xff]
    %v137 = vld [vmem:[#allocation2 + $0xd8] sm:$0xff]
    %v138 = vld [vmem:[#allocation2 + $0xe0] sm:$0xff]
    %v139 = vld [vmem:[#allocation2 + $0xe8] sm:$0xff]
    %v140 = vld [vmem:[#allocation2 + $0xf0] sm:$0xff]
    %v141 = vld [vmem:[#allocation2 + $0xf8] sm:$0xff]
    %v142 = vld [vmem:[#allocation2 + $0x100] sm:$0xff]
    %v143 = vld [vmem:[#allocation2 + $0x108] sm:$0xff]
    %v144 = vld [vmem:[#allocation2 + $0x110] sm:$0xff]
    %v145 = vld [vmem:[#allocation2 + $0x118] sm:$0xff]
    %v146 = vld [vmem:[#allocation2 + $0x120] sm:$0xff]
    %v147 = vld [vmem:[#allocation2 + $0x128] sm:$0xff]
    %v148 = vld [vmem:[#allocation2 + $0x130] sm:$0xff]
    %v149 = vld [vmem:[#allocation2 + $0x138] sm:$0xff]
    %v150 = vld [vmem:[#allocation2 + $0x40] sm:$0xff]
    %v151 = vld [vmem:[#allocation2 + $0x48] sm:$0xff]
    %v152 = vld [vmem:[#allocation2 + $0x50] sm:$0xff]
    %v153 = vld [vmem:[#allocation2 + $0x58] sm:$0xff]
    %v154 = vld [vmem:[#allocation2 + $0x60] sm:$0xff]
    %v155 = vld [vmem:[#allocation2 + $0x68] sm:$0xff]
    %v156 = vld [vmem:[#allocation2 + $0x70] sm:$0xff]
    %v157 = vld [vmem:[#allocation2 + $0x78] sm:$0xff]
    %v158 = vld [vmem:[#allocation2 + $0x80] sm:$0xff]
    %v159 = vld [vmem:[#allocation2 + $0x88] sm:$0xff]
    %v160 = vld [vmem:[#allocation2 + $0x90] sm:$0xff]
    %v161 = vld [vmem:[#allocation2 + $0x98] sm:$0xff]
    %v162 = vld [vmem:[#allocation2 + $0xa0] sm:$0xff]
    %v163 = vld [vmem:[#allocation2 + $0xa8] sm:$0xff]
    %v164 = vld [vmem:[#allocation2 + $0xb0] sm:$0xff]
    %v165 = vld [vmem:[#allocation2 + $0xb8] sm:$0xff]
    %170 = vrot.lane.b32.xlu0 %v116, 96
    %v171 = vpop.permute.xlu0 %170
    %172 = vrot.lane.b32.xlu0 %v121, 96
    %v173 = vpop.permute.xlu0 %172
    %174 = vrot.lane.b32.xlu0 %v126, 96
    %v175 = vpop.permute.xlu0 %174
    %176 = vrot.lane.b32.xlu0 %v131, 96
    %v177 = vpop.permute.xlu0 %176
    %vm178 = vcmask 31744
    %v180 = vsel %vm178, %v134, 0
    %v183 = vsel %vm178, %v135, 0
    %v186 = vsel %vm178, %v136, 0
    %v189 = vsel %vm178, %v137, 0
    %v192 = vsel %vm178, %v138, 0
    %v195 = vsel %vm178, %v139, 0
    %v198 = vsel %vm178, %v140, 0
    %v201 = vsel %vm178, %v141, 0
    %v204 = vsel %vm178, %v142, 0
    %v207 = vsel %vm178, %v143, 0
    %v210 = vsel %vm178, %v144, 0
    %v213 = vsel %vm178, %v145, 0
    %v216 = vsel %vm178, %v146, 0
    %v219 = vsel %vm178, %v147, 0
    %v222 = vsel %vm178, %v148, 0
    %v225 = vsel %vm178, %v149, 0
    %v227 = vsel %vm178, %v171, 0
    %v229 = vsel %vm178, %v173, 0
    %v231 = vsel %vm178, %v175, 0
    %v233 = vsel %vm178, %v177, 0
    %235 = vmatprep.subr.mxu0 0.0
    %236 = vmatpush1.xpose.msra.mxu0 %v227
    %237 = vmatprep.subr.mxu0 0.0
    %238 = vmatpush1.xpose.msra.mxu0 %v229
    %239 = vmatprep.subr.mxu0 0.0
    %240 = vmatpush1.xpose.msra.mxu0 %v231
    %241 = vmatprep.subr.mxu0 0.0
    %242 = vmatpush1.xpose.msra.mxu0 %v233
    %243 = vmatprep.subr.mxu0 0.0
    %244 = vmatpush1.xpose.msra.mxu0 0.0
    %245 = vmatprep.subr.mxu0 0.0
    %246 = vmatpush1.xpose.msra.mxu0 0.0
    %247 = vmatprep.subr.mxu0 0.0
    %248 = vmatpush1.xpose.msra.mxu0 0.0
    %249 = vmatprep.subr.mxu0 0.0
    %250 = vmatpush1.xpose.msra.mxu0 0.0
    %251 = vmatprep.subr.mxu0 0.0
    %252 = vmatpush1.xpose.msra.mxu0 0.0
    %253 = vmatprep.subr.mxu0 0.0
    %254 = vmatpush1.xpose.msra.mxu0 0.0
    %255 = vmatprep.subr.mxu0 0.0
    %256 = vmatpush1.xpose.msra.mxu0 0.0
    %257 = vmatprep.subr.mxu0 0.0
    %258 = vmatpush1.xpose.msra.mxu0 0.0
    %259 = vmatprep.subr.mxu0 0.0
    %260 = vmatpush1.xpose.msra.mxu0 0.0
    %261 = vmatprep.subr.mxu0 0.0
    %262 = vmatpush1.xpose.msra.mxu0 0.0
    %263 = vmatprep.subr.mxu0 0.0
    %264 = vmatpush1.xpose.msra.mxu0 0.0
    %265 = vmatprep.subr.mxu0 0.0
    %266 = vmatpush1.xpose.msra.mxu0 0.0
    %267 = vmatprep.subr.mxu0 0.0
    %268 = vmatpush1.xpose.msra.mxu0 0.0
    %269 = vmatprep.subr.mxu0 0.0
    %270 = vmatpush1.xpose.msra.mxu0 0.0
    %271 = vmatprep.subr.mxu0 0.0
    %272 = vmatpush1.xpose.msra.mxu0 0.0
    %273 = vmatprep.subr.mxu0 0.0
    %274 = vmatpush1.xpose.msra.mxu0 0.0
    %275 = vmatprep.subr.mxu0 0.0
    %276 = vmatpush1.xpose.msra.mxu0 0.0
    %277 = vmatprep.subr.mxu0 0.0
    %278 = vmatpush1.xpose.msra.mxu0 0.0
    %279 = vmatprep.subr.mxu0 0.0
    %280 = vmatpush1.xpose.msra.mxu0 0.0
    %281 = vmatprep.subr.mxu0 0.0
    %282 = vmatpush1.xpose.msra.mxu0 0.0
    %283 = vmatprep.subr.mxu0 0.0
    %284 = vmatpush1.xpose.msra.mxu0 0.0
    %285 = vmatprep.subr.mxu0 0.0
    %286 = vmatpush1.xpose.msra.mxu0 0.0
    %287 = vmatprep.subr.mxu0 0.0
    %288 = vmatpush1.xpose.msra.mxu0 0.0
    %289 = vmatprep.subr.mxu0 0.0
    %290 = vmatpush1.xpose.msra.mxu0 0.0
    %291 = vmatprep.subr.mxu0 0.0
    %292 = vmatpush1.xpose.msra.mxu0 0.0
    %293 = vmatprep.subr.mxu0 0.0
    %294 = vmatpush1.xpose.msra.mxu0 0.0
    %295 = vmatprep.subr.mxu0 0.0
    %296 = vmatpush1.xpose.msra.mxu0 0.0
    %297 = vmatprep.subr.mxu0 0.0
    %298 = vmatpush1.xpose.msra.mxu0 0.0
    %299 = vmatprep.mubr.f32.mxu0 0.0
    %300 = vmatmul.mubr.f32.gmra.mrb[0].mxu0 %v180
    %v301 = vpop.f32.mrb[0].mxu0
    %v302 = vadd.f32 0.0, %v301
    %v303 = vpop.f32.mrb[0].mxu0
    %304 = vmatprep.mubr.f32.mxu0 0.0
    %305 = vmatmul.mubr.f32.gmra.mrb[0].mxu0 %v183
    %v306 = vpop.f32.mrb[0].mxu0
    %v307 = vadd.f32 0.0, %v306
    %v308 = vpop.f32.mrb[0].mxu0
    %309 = vmatprep.mubr.f32.mxu0 0.0
    %310 = vmatmul.mubr.f32.gmra.mrb[0].mxu0 %v186
    %v311 = vpop.f32.mrb[0].mxu0
    %v312 = vadd.f32 0.0, %v311
    %v313 = vpop.f32.mrb[0].mxu0
    %314 = vmatprep.mubr.f32.mxu0 0.0
    %315 = vmatmul.mubr.f32.gmra.mrb[0].mxu0 %v189
    %v316 = vpop.f32.mrb[0].mxu0
    %v317 = vadd.f32 0.0, %v316
    %v318 = vpop.f32.mrb[0].mxu0
    %319 = vmatprep.mubr.f32.mxu0 0.0
    %320 = vmatmul.mubr.f32.gmra.mrb[0].mxu0 %v192
    %v321 = vpop.f32.mrb[0].mxu0
    %v322 = vadd.f32 0.0, %v321
    %v323 = vpop.f32.mrb[0].mxu0
    %324 = vmatprep.mubr.f32.mxu0 0.0
    %325 = vmatmul.mubr.f32.gmra.mrb[0].mxu0 %v195
    %v326 = vpop.f32.mrb[0].mxu0
    %v327 = vadd.f32 0.0, %v326
    %v328 = vpop.f32.mrb[0].mxu0
    %329 = vmatprep.mubr.f32.mxu0 0.0
    %330 = vmatmul.mubr.f32.gmra.mrb[0].mxu0 %v198
    %v331 = vpop.f32.mrb[0].mxu0
    %v332 = vadd.f32 0.0, %v331
    %v333 = vpop.f32.mrb[0].mxu0
    %334 = vmatprep.mubr.f32.mxu0 0.0
    %335 = vmatmul.mubr.f32.gmra.mrb[0].mxu0 %v201
    %v336 = vpop.f32.mrb[0].mxu0
    %v337 = vadd.f32 0.0, %v336
    %v338 = vpop.f32.mrb[0].mxu0
    %339 = vmatprep.mubr.f32.mxu0 0.0
    %340 = vmatmul.mubr.f32.gmra.mrb[0].mxu0 %v204
    %v341 = vpop.f32.mrb[0].mxu0
    %v342 = vadd.f32 0.0, %v341
    %v343 = vpop.f32.mrb[0].mxu0
    %344 = vmatprep.mubr.f32.mxu0 0.0
    %345 = vmatmul.mubr.f32.gmra.mrb[0].mxu0 %v207
    %v346 = vpop.f32.mrb[0].mxu0
    %v347 = vadd.f32 0.0, %v346
    %v348 = vpop.f32.mrb[0].mxu0
    %349 = vmatprep.mubr.f32.mxu0 0.0
    %350 = vmatmul.mubr.f32.gmra.mrb[0].mxu0 %v210
    %v351 = vpop.f32.mrb[0].mxu0
    %v352 = vadd.f32 0.0, %v351
    %v353 = vpop.f32.mrb[0].mxu0
    %354 = vmatprep.mubr.f32.mxu0 0.0
    %355 = vmatmul.mubr.f32.gmra.mrb[0].mxu0 %v213
    %v356 = vpop.f32.mrb[0].mxu0
    %v357 = vadd.f32 0.0, %v356
    %v358 = vpop.f32.mrb[0].mxu0
    %359 = vmatprep.mubr.f32.mxu0 0.0
    %360 = vmatmul.mubr.f32.gmra.mrb[0].mxu0 %v216
    %v361 = vpop.f32.mrb[0].mxu0
    %v362 = vadd.f32 0.0, %v361
    %v363 = vpop.f32.mrb[0].mxu0
    %364 = vmatprep.mubr.f32.mxu0 0.0
    %365 = vmatmul.mubr.f32.gmra.mrb[0].mxu0 %v219
    %v366 = vpop.f32.mrb[0].mxu0
    %v367 = vadd.f32 0.0, %v366
    %v368 = vpop.f32.mrb[0].mxu0
    %369 = vmatprep.mubr.f32.mxu0 0.0
    %370 = vmatmul.mubr.f32.gmra.mrb[0].mxu0 %v222
    %v371 = vpop.f32.mrb[0].mxu0
    %v372 = vadd.f32 0.0, %v371
    %v373 = vpop.f32.mrb[0].mxu0
    %374 = vmatprep.mubr.f32.mxu0 0.0
    %375 = vmatmul.mubr.f32.gmra.mrb[0].mxu0 %v225
    %v376 = vpop.f32.mrb[0].mxu0
    %v377 = vadd.f32 0.0, %v376
    %v378 = vpop.f32.mrb[0].mxu0
    %379 = vdwg.mxu0
    %380 = vrot.lane.b32.xlu0 %v116, 92
    %v381 = vpop.permute.xlu0 %380
    %382 = vrot.lane.b32.xlu0 %v121, 92
    %v383 = vpop.permute.xlu0 %382
    %384 = vrot.lane.b32.xlu0 %v126, 92
    %v385 = vpop.permute.xlu0 %384
    %386 = vrot.lane.b32.xlu0 %v131, 92
    %v387 = vpop.permute.xlu0 %386
    %v393 = vsel %vm36, %v150, 0
    %v396 = vsel %vm36, %v151, 0
    %v399 = vsel %vm36, %v152, 0
    %v402 = vsel %vm36, %v153, 0
    %v405 = vsel %vm36, %v154, 0
    %v408 = vsel %vm36, %v155, 0
    %v411 = vsel %vm36, %v156, 0
    %v414 = vsel %vm36, %v157, 0
    %v417 = vsel %vm36, %v158, 0
    %v420 = vsel %vm36, %v159, 0
    %v423 = vsel %vm36, %v160, 0
    %v426 = vsel %vm36, %v161, 0
    %v429 = vsel %vm36, %v162, 0
    %v432 = vsel %vm36, %v163, 0
    %v435 = vsel %vm36, %v164, 0
    %v438 = vsel %vm36, %v165, 0
    %440 = vmatprep.subr.mxu0 0.0
    %441 = vmatpush1.msra.mxu0 %v381
    %442 = vmatprep.subr.mxu0 0.0
    %443 = vmatpush1.msra.mxu0 %v383
    %444 = vmatprep.subr.mxu0 0.0
    %445 = vmatpush1.msra.mxu0 %v385
    %446 = vmatprep.subr.mxu0 0.0
    %447 = vmatpush1.msra.mxu0 %v387
    %448 = vmatprep.subr.mxu0 0.0
    %449 = vmatpush1.msra.mxu0 0.0
    %450 = vmatprep.subr.mxu0 0.0
    %451 = vmatpush1.msra.mxu0 0.0
    %452 = vmatprep.subr.mxu0 0.0
    %453 = vmatpush1.msra.mxu0 0.0
    %454 = vmatprep.subr.mxu0 0.0
    %455 = vmatpush1.msra.mxu0 0.0
    %456 = vmatprep.subr.mxu0 0.0
    %457 = vmatpush1.msra.mxu0 0.0
    %458 = vmatprep.subr.mxu0 0.0
    %459 = vmatpush1.msra.mxu0 0.0
    %460 = vmatprep.subr.mxu0 0.0
    %461 = vmatpush1.msra.mxu0 0.0
    %462 = vmatprep.subr.mxu0 0.0
    %463 = vmatpush1.msra.mxu0 0.0
    %464 = vmatprep.subr.mxu0 0.0
    %465 = vmatpush1.msra.mxu0 0.0
    %466 = vmatprep.subr.mxu0 0.0
    %467 = vmatpush1.msra.mxu0 0.0
    %468 = vmatprep.subr.mxu0 0.0
    %469 = vmatpush1.msra.mxu0 0.0
    %470 = vmatprep.subr.mxu0 0.0
    %471 = vmatpush1.msra.mxu0 0.0
    %472 = vmatprep.subr.mxu0 0.0
    %473 = vmatpush1.msra.mxu0 0.0
    %474 = vmatprep.subr.mxu0 0.0
    %475 = vmatpush1.msra.mxu0 0.0
    %476 = vmatprep.subr.mxu0 0.0
    %477 = vmatpush1.msra.mxu0 0.0
    %478 = vmatprep.subr.mxu0 0.0
    %479 = vmatpush1.msra.mxu0 0.0
    %480 = vmatprep.subr.mxu0 0.0
    %481 = vmatpush1.msra.mxu0 0.0
    %482 = vmatprep.subr.mxu0 0.0
    %483 = vmatpush1.msra.mxu0 0.0
    %484 = vmatprep.subr.mxu0 0.0
    %485 = vmatpush1.msra.mxu0 0.0
    %486 = vmatprep.subr.mxu0 0.0
    %487 = vmatpush1.msra.mxu0 0.0
    %488 = vmatprep.subr.mxu0 0.0
    %489 = vmatpush1.msra.mxu0 0.0
    %490 = vmatprep.subr.mxu0 0.0
    %491 = vmatpush1.msra.mxu0 0.0
    %492 = vmatprep.subr.mxu0 0.0
    %493 = vmatpush1.msra.mxu0 0.0
    %494 = vmatprep.subr.mxu0 0.0
    %495 = vmatpush1.msra.mxu0 0.0
    %496 = vmatprep.subr.mxu0 0.0
    %497 = vmatpush1.msra.mxu0 0.0
    %498 = vmatprep.subr.mxu0 0.0
    %499 = vmatpush1.msra.mxu0 0.0
    %500 = vmatprep.subr.mxu0 0.0
    %501 = vmatpush1.msra.mxu0 0.0
    %502 = vmatprep.subr.mxu0 0.0
    %503 = vmatpush1.msra.mxu0 0.0
    %504 = vmatprep.mubr.f32.mxu0 0.0
    %505 = vmatmul.mubr.f32.gmra.mrb[0].mxu0 %v393
    %v506 = vpop.f32.mrb[0].mxu0
    %v507 = vadd.f32 0.0, %v506
    %v508 = vpop.f32.mrb[0].mxu0
    %509 = vmatprep.mubr.f32.mxu0 0.0
    %510 = vmatmul.mubr.f32.gmra.mrb[0].mxu0 %v396
    %v511 = vpop.f32.mrb[0].mxu0
    %v512 = vadd.f32 0.0, %v511
    %v513 = vpop.f32.mrb[0].mxu0
    %514 = vmatprep.mubr.f32.mxu0 0.0
    %515 = vmatmul.mubr.f32.gmra.mrb[0].mxu0 %v399
    %v516 = vpop.f32.mrb[0].mxu0
    %v517 = vadd.f32 0.0, %v516
    %v518 = vpop.f32.mrb[0].mxu0
    %519 = vmatprep.mubr.f32.mxu0 0.0
    %520 = vmatmul.mubr.f32.gmra.mrb[0].mxu0 %v402
    %v521 = vpop.f32.mrb[0].mxu0
    %v522 = vadd.f32 0.0, %v521
    %v523 = vpop.f32.mrb[0].mxu0
    %524 = vmatprep.mubr.f32.mxu0 0.0
    %525 = vmatmul.mubr.f32.gmra.mrb[0].mxu0 %v405
    %v526 = vpop.f32.mrb[0].mxu0
    %v527 = vadd.f32 0.0, %v526
    %v528 = vpop.f32.mrb[0].mxu0
    %529 = vmatprep.mubr.f32.mxu0 0.0
    %530 = vmatmul.mubr.f32.gmra.mrb[0].mxu0 %v408
    %v531 = vpop.f32.mrb[0].mxu0
    %v532 = vadd.f32 0.0, %v531
    %v533 = vpop.f32.mrb[0].mxu0
    %534 = vmatprep.mubr.f32.mxu0 0.0
    %535 = vmatmul.mubr.f32.gmra.mrb[0].mxu0 %v411
    %v536 = vpop.f32.mrb[0].mxu0
    %v537 = vadd.f32 0.0, %v536
    %v538 = vpop.f32.mrb[0].mxu0
    %539 = vmatprep.mubr.f32.mxu0 0.0
    %540 = vmatmul.mubr.f32.gmra.mrb[0].mxu0 %v414
    %v541 = vpop.f32.mrb[0].mxu0
    %v542 = vadd.f32 0.0, %v541
    %v543 = vpop.f32.mrb[0].mxu0
    %544 = vmatprep.mubr.f32.mxu0 0.0
    %545 = vmatmul.mubr.f32.gmra.mrb[0].mxu0 %v417
    %v546 = vpop.f32.mrb[0].mxu0
    %v547 = vadd.f32 0.0, %v546
    %v548 = vpop.f32.mrb[0].mxu0
    %549 = vmatprep.mubr.f32.mxu0 0.0
    %550 = vmatmul.mubr.f32.gmra.mrb[0].mxu0 %v420
    %v551 = vpop.f32.mrb[0].mxu0
    %v552 = vadd.f32 0.0, %v551
    %v553 = vpop.f32.mrb[0].mxu0
    %554 = vmatprep.mubr.f32.mxu0 0.0
    %555 = vmatmul.mubr.f32.gmra.mrb[0].mxu0 %v423
    %v556 = vpop.f32.mrb[0].mxu0
    %v557 = vadd.f32 0.0, %v556
    %v558 = vpop.f32.mrb[0].mxu0
    %559 = vmatprep.mubr.f32.mxu0 0.0
    %560 = vmatmul.mubr.f32.gmra.mrb[0].mxu0 %v426
    %v561 = vpop.f32.mrb[0].mxu0
    %v562 = vadd.f32 0.0, %v561
    %v563 = vpop.f32.mrb[0].mxu0
    %564 = vmatprep.mubr.f32.mxu0 0.0
    %565 = vmatmul.mubr.f32.gmra.mrb[0].mxu0 %v429
    %v566 = vpop.f32.mrb[0].mxu0
    %v567 = vadd.f32 0.0, %v566
    %v568 = vpop.f32.mrb[0].mxu0
    %569 = vmatprep.mubr.f32.mxu0 0.0
    %570 = vmatmul.mubr.f32.gmra.mrb[0].mxu0 %v432
    %v571 = vpop.f32.mrb[0].mxu0
    %v572 = vadd.f32 0.0, %v571
    %v573 = vpop.f32.mrb[0].mxu0
    %574 = vmatprep.mubr.f32.mxu0 0.0
    %575 = vmatmul.mubr.f32.gmra.mrb[0].mxu0 %v435
    %v576 = vpop.f32.mrb[0].mxu0
    %v577 = vadd.f32 0.0, %v576
    %v578 = vpop.f32.mrb[0].mxu0
    %579 = vmatprep.mubr.f32.mxu0 0.0
    %580 = vmatmul.mubr.f32.gmra.mrb[0].mxu0 %v438
    %v581 = vpop.f32.mrb[0].mxu0
    %v582 = vadd.f32 0.0, %v581
    %v583 = vpop.f32.mrb[0].mxu0
    %584 = vdwg.mxu0
    %v585 = vmul.f32 %v507, %v134
    %v586 = vmul.f32 %v512, %v135
    %v587 = vmul.f32 %v517, %v136
    %v588 = vmul.f32 %v522, %v137
    %v589 = vmul.f32 %v527, %v138
    %v590 = vmul.f32 %v532, %v139
    %v591 = vmul.f32 %v537, %v140
    %v592 = vmul.f32 %v542, %v141
    %v593 = vmul.f32 %v547, %v142
    %v594 = vmul.f32 %v552, %v143
    %v595 = vmul.f32 %v557, %v144
    %v596 = vmul.f32 %v562, %v145
    %v597 = vmul.f32 %v567, %v146
    %v598 = vmul.f32 %v572, %v147
    %v599 = vmul.f32 %v577, %v148
    %v600 = vmul.f32 %v582, %v149
    %v601 = vsel %vm178, %v585, 0.0
    %602 = vadd.xlane.f32.xlu0 %v601
    %v603 = vpop.xlane.xlu0 %602
    %v604 = vsel %vm178, %v586, 0.0
    %605 = vadd.xlane.f32.xlu0 %v604
    %v606 = vpop.xlane.xlu0 %605
    %v607 = vsel %vm178, %v587, 0.0
    %608 = vadd.xlane.f32.xlu0 %v607
    %v609 = vpop.xlane.xlu0 %608
    %v610 = vsel %vm178, %v588, 0.0
    %611 = vadd.xlane.f32.xlu0 %v610
    %v612 = vpop.xlane.xlu0 %611
    %v613 = vsel %vm178, %v589, 0.0
    %614 = vadd.xlane.f32.xlu0 %v613
    %v615 = vpop.xlane.xlu0 %614
    %v616 = vsel %vm178, %v590, 0.0
    %617 = vadd.xlane.f32.xlu0 %v616
    %v618 = vpop.xlane.xlu0 %617
    %v619 = vsel %vm178, %v591, 0.0
    %620 = vadd.xlane.f32.xlu0 %v619
    %v621 = vpop.xlane.xlu0 %620
    %v622 = vsel %vm178, %v592, 0.0
    %623 = vadd.xlane.f32.xlu0 %v622
    %v624 = vpop.xlane.xlu0 %623
    %v625 = vsel %vm178, %v593, 0.0
    %626 = vadd.xlane.f32.xlu0 %v625
    %v627 = vpop.xlane.xlu0 %626
    %v628 = vsel %vm178, %v594, 0.0
    %629 = vadd.xlane.f32.xlu0 %v628
    %v630 = vpop.xlane.xlu0 %629
    %v631 = vsel %vm178, %v595, 0.0
    %632 = vadd.xlane.f32.xlu0 %v631
    %v633 = vpop.xlane.xlu0 %632
    %v634 = vsel %vm178, %v596, 0.0
    %635 = vadd.xlane.f32.xlu0 %v634
    %v636 = vpop.xlane.xlu0 %635
    %v637 = vsel %vm178, %v597, 0.0
    %638 = vadd.xlane.f32.xlu0 %v637
    %v639 = vpop.xlane.xlu0 %638
    %v640 = vsel %vm178, %v598, 0.0
    %641 = vadd.xlane.f32.xlu0 %v640
    %v642 = vpop.xlane.xlu0 %641
    %v643 = vsel %vm178, %v599, 0.0
    %644 = vadd.xlane.f32.xlu0 %v643
    %v645 = vpop.xlane.xlu0 %644
    %v646 = vsel %vm178, %v600, 0.0
    %647 = vadd.xlane.f32.xlu0 %v646
    %v648 = vpop.xlane.xlu0 %647
    %v649 = vadd.f32 %v603, %v302
    %v650 = vadd.f32 %v606, %v307
    %v651 = vadd.f32 %v609, %v312
    %v652 = vadd.f32 %v612, %v317
    %v653 = vadd.f32 %v615, %v322
    %v654 = vadd.f32 %v618, %v327
    %v655 = vadd.f32 %v621, %v332
    %v656 = vadd.f32 %v624, %v337
    %v657 = vadd.f32 %v627, %v342
    %v658 = vadd.f32 %v630, %v347
    %v659 = vadd.f32 %v633, %v352
    %v660 = vadd.f32 %v636, %v357
    %v661 = vadd.f32 %v639, %v362
    %v662 = vadd.f32 %v642, %v367
    %v663 = vadd.f32 %v645, %v372
    %v664 = vadd.f32 %v648, %v377
    %vm665 = vcmp.gt.f32.partialorder %v649, 0.0
    %vm666 = vcmp.gt.f32.partialorder %v650, 0.0
    %vm667 = vcmp.gt.f32.partialorder %v651, 0.0
    %vm668 = vcmp.gt.f32.partialorder %v652, 0.0
    %vm669 = vcmp.gt.f32.partialorder %v653, 0.0
    %vm670 = vcmp.gt.f32.partialorder %v654, 0.0
    %vm671 = vcmp.gt.f32.partialorder %v655, 0.0
    %vm672 = vcmp.gt.f32.partialorder %v656, 0.0
    %vm673 = vcmp.gt.f32.partialorder %v657, 0.0
    %vm674 = vcmp.gt.f32.partialorder %v658, 0.0
    %vm675 = vcmp.gt.f32.partialorder %v659, 0.0
    %vm676 = vcmp.gt.f32.partialorder %v660, 0.0
    %vm677 = vcmp.gt.f32.partialorder %v661, 0.0
    %vm678 = vcmp.gt.f32.partialorder %v662, 0.0
    %vm679 = vcmp.gt.f32.partialorder %v663, 0.0
    %vm680 = vcmp.gt.f32.partialorder %v664, 0.0
    %v681 = vmul.f32 %v649, 0.2
    %v682 = vmul.f32 %v650, 0.2
    %v683 = vmul.f32 %v651, 0.2
    %v684 = vmul.f32 %v652, 0.2
    %v685 = vmul.f32 %v653, 0.2
    %v686 = vmul.f32 %v654, 0.2
    %v687 = vmul.f32 %v655, 0.2
    %v688 = vmul.f32 %v656, 0.2
    %v689 = vmul.f32 %v657, 0.2
    %v690 = vmul.f32 %v658, 0.2
    %v691 = vmul.f32 %v659, 0.2
    %v692 = vmul.f32 %v660, 0.2
    %v693 = vmul.f32 %v661, 0.2
    %v694 = vmul.f32 %v662, 0.2
    %v695 = vmul.f32 %v663, 0.2
    %v696 = vmul.f32 %v664, 0.2
    %v697 = vsel %vm665, %v649, %v681
    %v698 = vsel %vm666, %v650, %v682
    %v699 = vsel %vm667, %v651, %v683
    %v700 = vsel %vm668, %v652, %v684
    %v701 = vsel %vm669, %v653, %v685
    %v702 = vsel %vm670, %v654, %v686
    %v703 = vsel %vm671, %v655, %v687
    %v704 = vsel %vm672, %v656, %v688
    %v705 = vsel %vm673, %v657, %v689
    %v706 = vsel %vm674, %v658, %v690
    %v707 = vsel %vm675, %v659, %v691
    %v708 = vsel %vm676, %v660, %v692
    %v709 = vsel %vm677, %v661, %v693
    %v710 = vsel %vm678, %v662, %v694
    %v711 = vsel %vm679, %v663, %v695
    %v712 = vsel %vm680, %v664, %v696
    %v713 = vld [vmem:[%s1] sm:$0xff]
    %v714 = vld [vmem:[%s1 + $0x8] sm:$0xff]
    %v715 = vld [vmem:[%s1 + $0x10] sm:$0xff]
    %v716 = vld [vmem:[%s1 + $0x18] sm:$0xff]
    %v717 = vld [vmem:[%s1 + $0x20] sm:$0xff]
    %v718 = vld [vmem:[%s1 + $0x28] sm:$0xff]
    %v719 = vld [vmem:[%s1 + $0x30] sm:$0xff]
    %v720 = vld [vmem:[%s1 + $0x38] sm:$0xff]
    %v721 = vld [vmem:[%s1 + $0x40] sm:$0xff]
    %v722 = vld [vmem:[%s1 + $0x48] sm:$0xff]
    %v723 = vld [vmem:[%s1 + $0x50] sm:$0xff]
    %v724 = vld [vmem:[%s1 + $0x58] sm:$0xff]
    %v725 = vld [vmem:[%s1 + $0x60] sm:$0xff]
    %v726 = vld [vmem:[%s1 + $0x68] sm:$0xff]
    %v727 = vld [vmem:[%s1 + $0x70] sm:$0xff]
    %v728 = vld [vmem:[%s1 + $0x78] sm:$0xff]
    %v729 = vadd.f32 %v697, %v713
    %v730 = vadd.f32 %v698, %v714
    %v731 = vadd.f32 %v699, %v715
    %v732 = vadd.f32 %v700, %v716
    %v733 = vadd.f32 %v701, %v717
    %v734 = vadd.f32 %v702, %v718
    %v735 = vadd.f32 %v703, %v719
    %v736 = vadd.f32 %v704, %v720
    %v737 = vadd.f32 %v705, %v721
    %v738 = vadd.f32 %v706, %v722
    %v739 = vadd.f32 %v707, %v723
    %v740 = vadd.f32 %v708, %v724
    %v741 = vadd.f32 %v709, %v725
    %v742 = vadd.f32 %v710, %v726
    %v743 = vadd.f32 %v711, %v727
    %v744 = vadd.f32 %v712, %v728
    %v745 = vsel %vm36, %v729, -inf
    %746 = vmax.xlane.f32.xlu0 %v745
    %v747 = vpop.xlane.xlu0 %746
    %v748 = vsel %vm36, %v730, -inf
    %749 = vmax.xlane.f32.xlu0 %v748
    %v750 = vpop.xlane.xlu0 %749
    %v751 = vsel %vm36, %v731, -inf
    %752 = vmax.xlane.f32.xlu0 %v751
    %v753 = vpop.xlane.xlu0 %752
    %v754 = vsel %vm36, %v732, -inf
    %755 = vmax.xlane.f32.xlu0 %v754
    %v756 = vpop.xlane.xlu0 %755
    %v757 = vsel %vm36, %v733, -inf
    %758 = vmax.xlane.f32.xlu0 %v757
    %v759 = vpop.xlane.xlu0 %758
    %v760 = vsel %vm36, %v734, -inf
    %761 = vmax.xlane.f32.xlu0 %v760
    %v762 = vpop.xlane.xlu0 %761
    %v763 = vsel %vm36, %v735, -inf
    %764 = vmax.xlane.f32.xlu0 %v763
    %v765 = vpop.xlane.xlu0 %764
    %v766 = vsel %vm36, %v736, -inf
    %767 = vmax.xlane.f32.xlu0 %v766
    %v768 = vpop.xlane.xlu0 %767
    %v769 = vsel %vm36, %v737, -inf
    %770 = vmax.xlane.f32.xlu0 %v769
    %v771 = vpop.xlane.xlu0 %770
    %v772 = vsel %vm36, %v738, -inf
    %773 = vmax.xlane.f32.xlu0 %v772
    %v774 = vpop.xlane.xlu0 %773
    %v775 = vsel %vm36, %v739, -inf
    %776 = vmax.xlane.f32.xlu0 %v775
    %v777 = vpop.xlane.xlu0 %776
    %v778 = vsel %vm36, %v740, -inf
    %779 = vmax.xlane.f32.xlu0 %v778
    %v780 = vpop.xlane.xlu0 %779
    %v781 = vsel %vm36, %v741, -inf
    %782 = vmax.xlane.f32.xlu0 %v781
    %v783 = vpop.xlane.xlu0 %782
    %v784 = vsel %vm36, %v742, -inf
    %785 = vmax.xlane.f32.xlu0 %v784
    %v786 = vpop.xlane.xlu0 %785
    %v787 = vsel %vm36, %v743, -inf
    %788 = vmax.xlane.f32.xlu0 %v787
    %v789 = vpop.xlane.xlu0 %788
    %v790 = vsel %vm36, %v744, -inf
    %791 = vmax.xlane.f32.xlu0 %v790
    %v792 = vpop.xlane.xlu0 %791
    %v793 = vsub.f32 %v729, %v747
    %v794 = vsub.f32 %v730, %v750
    %v795 = vsub.f32 %v731, %v753
    %v796 = vsub.f32 %v732, %v756
    %v797 = vsub.f32 %v733, %v759
    %v798 = vsub.f32 %v734, %v762
    %v799 = vsub.f32 %v735, %v765
    %v800 = vsub.f32 %v736, %v768
    %v801 = vsub.f32 %v737, %v771
    %v802 = vsub.f32 %v738, %v774
    %v803 = vsub.f32 %v739, %v777
    %v804 = vsub.f32 %v740, %v780
    %v805 = vsub.f32 %v741, %v783
    %v806 = vsub.f32 %v742, %v786
    %v807 = vsub.f32 %v743, %v789
    %v808 = vsub.f32 %v744, %v792
    %v809 = vmul.f32 %v793, 1.442695
    %v810 = vpow.pop %v809
    %v811 = vmul.f32 %v794, 1.442695
    %v812 = vpow.pop %v811
    %v813 = vmul.f32 %v795, 1.442695
    %v814 = vpow.pop %v813
    %v815 = vmul.f32 %v796, 1.442695
    %v816 = vpow.pop %v815
    %v817 = vmul.f32 %v797, 1.442695
    %v818 = vpow.pop %v817
    %v819 = vmul.f32 %v798, 1.442695
    %v820 = vpow.pop %v819
    %v821 = vmul.f32 %v799, 1.442695
    %v822 = vpow.pop %v821
    %v823 = vmul.f32 %v800, 1.442695
    %v824 = vpow.pop %v823
    %v825 = vmul.f32 %v801, 1.442695
    %v826 = vpow.pop %v825
    %v827 = vmul.f32 %v802, 1.442695
    %v828 = vpow.pop %v827
    %v829 = vmul.f32 %v803, 1.442695
    %v830 = vpow.pop %v829
    %v831 = vmul.f32 %v804, 1.442695
    %v832 = vpow.pop %v831
    %v833 = vmul.f32 %v805, 1.442695
    %v834 = vpow.pop %v833
    %v835 = vmul.f32 %v806, 1.442695
    %v836 = vpow.pop %v835
    %v837 = vmul.f32 %v807, 1.442695
    %v838 = vpow.pop %v837
    %v839 = vmul.f32 %v808, 1.442695
    %v840 = vpow.pop %v839
    %v841 = vsel %vm36, %v810, 0.0
    %842 = vadd.xlane.f32.xlu0 %v841
    %v843 = vpop.xlane.xlu0 %842
    %v844 = vsel %vm36, %v812, 0.0
    %845 = vadd.xlane.f32.xlu0 %v844
    %v846 = vpop.xlane.xlu0 %845
    %v847 = vsel %vm36, %v814, 0.0
    %848 = vadd.xlane.f32.xlu0 %v847
    %v849 = vpop.xlane.xlu0 %848
    %v850 = vsel %vm36, %v816, 0.0
    %851 = vadd.xlane.f32.xlu0 %v850
    %v852 = vpop.xlane.xlu0 %851
    %v853 = vsel %vm36, %v818, 0.0
    %854 = vadd.xlane.f32.xlu0 %v853
    %v855 = vpop.xlane.xlu0 %854
    %v856 = vsel %vm36, %v820, 0.0
    %857 = vadd.xlane.f32.xlu0 %v856
    %v858 = vpop.xlane.xlu0 %857
    %v859 = vsel %vm36, %v822, 0.0
    %860 = vadd.xlane.f32.xlu0 %v859
    %v861 = vpop.xlane.xlu0 %860
    %v862 = vsel %vm36, %v824, 0.0
    %863 = vadd.xlane.f32.xlu0 %v862
    %v864 = vpop.xlane.xlu0 %863
    %v865 = vsel %vm36, %v826, 0.0
    %866 = vadd.xlane.f32.xlu0 %v865
    %v867 = vpop.xlane.xlu0 %866
    %v868 = vsel %vm36, %v828, 0.0
    %869 = vadd.xlane.f32.xlu0 %v868
    %v870 = vpop.xlane.xlu0 %869
    %v871 = vsel %vm36, %v830, 0.0
    %872 = vadd.xlane.f32.xlu0 %v871
    %v873 = vpop.xlane.xlu0 %872
    %v874 = vsel %vm36, %v832, 0.0
    %875 = vadd.xlane.f32.xlu0 %v874
    %v876 = vpop.xlane.xlu0 %875
    %v877 = vsel %vm36, %v834, 0.0
    %878 = vadd.xlane.f32.xlu0 %v877
    %v879 = vpop.xlane.xlu0 %878
    %v880 = vsel %vm36, %v836, 0.0
    %881 = vadd.xlane.f32.xlu0 %v880
    %v882 = vpop.xlane.xlu0 %881
    %v883 = vsel %vm36, %v838, 0.0
    %884 = vadd.xlane.f32.xlu0 %v883
    %v885 = vpop.xlane.xlu0 %884
    %v886 = vsel %vm36, %v840, 0.0
    %887 = vadd.xlane.f32.xlu0 %v886
    %v888 = vpop.xlane.xlu0 %887
    %v889 = vrcp.pop %v843
    %v890 = vrcp.pop %v846
    %v891 = vrcp.pop %v849
    %v892 = vrcp.pop %v852
    %v893 = vrcp.pop %v855
    %v894 = vrcp.pop %v858
    %v895 = vrcp.pop %v861
    %v896 = vrcp.pop %v864
    %v897 = vrcp.pop %v867
    %v898 = vrcp.pop %v870
    %v899 = vrcp.pop %v873
    %v900 = vrcp.pop %v876
    %v901 = vrcp.pop %v879
    %v902 = vrcp.pop %v882
    %v903 = vrcp.pop %v885
    %v904 = vrcp.pop %v888
    %v905 = vmul.f32 %v810, %v889
    %v906 = vmul.f32 %v812, %v890
    %v907 = vmul.f32 %v814, %v891
    %v908 = vmul.f32 %v816, %v892
    %v909 = vmul.f32 %v818, %v893
    %v910 = vmul.f32 %v820, %v894
    %v911 = vmul.f32 %v822, %v895
    %v912 = vmul.f32 %v824, %v896
    %v913 = vmul.f32 %v826, %v897
    %v914 = vmul.f32 %v828, %v898
    %v915 = vmul.f32 %v830, %v899
    %v916 = vmul.f32 %v832, %v900
    %v917 = vmul.f32 %v834, %v901
    %v918 = vmul.f32 %v836, %v902
    %v919 = vmul.f32 %v838, %v903
    %v920 = vmul.f32 %v840, %v904
    %v922 = vsel %vm36, %v905, 0
    %v925 = vsel %vm36, %v906, 0
    %v928 = vsel %vm36, %v907, 0
    %v931 = vsel %vm36, %v908, 0
    %v934 = vsel %vm36, %v909, 0
    %v937 = vsel %vm36, %v910, 0
    %v940 = vsel %vm36, %v911, 0
    %v943 = vsel %vm36, %v912, 0
    %v946 = vsel %vm36, %v913, 0
    %v949 = vsel %vm36, %v914, 0
    %v952 = vsel %vm36, %v915, 0
    %v955 = vsel %vm36, %v916, 0
    %v958 = vsel %vm36, %v917, 0
    %v961 = vsel %vm36, %v918, 0
    %v964 = vsel %vm36, %v919, 0
    %v967 = vsel %vm36, %v920, 0
    %969 = vmatprep.subr.mxu0 0.0
    %970 = vmatpush1.msra.mxu0 %v116
    %971 = vmatprep.subr.mxu0 0.0
    %972 = vmatpush1.msra.mxu0 %v121
    %973 = vmatprep.subr.mxu0 0.0
    %974 = vmatpush1.msra.mxu0 %v126
    %975 = vmatprep.subr.mxu0 0.0
    %976 = vmatpush1.msra.mxu0 %v131
    %977 = vmatprep.subr.mxu0 0.0
    %978 = vmatpush1.msra.mxu0 0.0
    %979 = vmatprep.subr.mxu0 0.0
    %980 = vmatpush1.msra.mxu0 0.0
    %981 = vmatprep.subr.mxu0 0.0
    %982 = vmatpush1.msra.mxu0 0.0
    %983 = vmatprep.subr.mxu0 0.0
    %984 = vmatpush1.msra.mxu0 0.0
    %985 = vmatprep.subr.mxu0 0.0
    %986 = vmatpush1.msra.mxu0 0.0
    %987 = vmatprep.subr.mxu0 0.0
    %988 = vmatpush1.msra.mxu0 0.0
    %989 = vmatprep.subr.mxu0 0.0
    %990 = vmatpush1.msra.mxu0 0.0
    %991 = vmatprep.subr.mxu0 0.0
    %992 = vmatpush1.msra.mxu0 0.0
    %993 = vmatprep.subr.mxu0 0.0
    %994 = vmatpush1.msra.mxu0 0.0
    %995 = vmatprep.subr.mxu0 0.0
    %996 = vmatpush1.msra.mxu0 0.0
    %997 = vmatprep.subr.mxu0 0.0
    %998 = vmatpush1.msra.mxu0 0.0
    %999 = vmatprep.subr.mxu0 0.0
    %1000 = vmatpush1.msra.mxu0 0.0
    %1001 = vmatprep.subr.mxu0 0.0
    %1002 = vmatpush1.msra.mxu0 0.0
    %1003 = vmatprep.subr.mxu0 0.0
    %1004 = vmatpush1.msra.mxu0 0.0
    %1005 = vmatprep.subr.mxu0 0.0
    %1006 = vmatpush1.msra.mxu0 0.0
    %1007 = vmatprep.subr.mxu0 0.0
    %1008 = vmatpush1.msra.mxu0 0.0
    %1009 = vmatprep.subr.mxu0 0.0
    %1010 = vmatpush1.msra.mxu0 0.0
    %1011 = vmatprep.subr.mxu0 0.0
    %1012 = vmatpush1.msra.mxu0 0.0
    %1013 = vmatprep.subr.mxu0 0.0
    %1014 = vmatpush1.msra.mxu0 0.0
    %1015 = vmatprep.subr.mxu0 0.0
    %1016 = vmatpush1.msra.mxu0 0.0
    %1017 = vmatprep.subr.mxu0 0.0
    %1018 = vmatpush1.msra.mxu0 0.0
    %1019 = vmatprep.subr.mxu0 0.0
    %1020 = vmatpush1.msra.mxu0 0.0
    %1021 = vmatprep.subr.mxu0 0.0
    %1022 = vmatpush1.msra.mxu0 0.0
    %1023 = vmatprep.subr.mxu0 0.0
    %1024 = vmatpush1.msra.mxu0 0.0
    %1025 = vmatprep.subr.mxu0 0.0
    %1026 = vmatpush1.msra.mxu0 0.0
    %1027 = vmatprep.subr.mxu0 0.0
    %1028 = vmatpush1.msra.mxu0 0.0
    %1029 = vmatprep.subr.mxu0 0.0
    %1030 = vmatpush1.msra.mxu0 0.0
    %1031 = vmatprep.subr.mxu0 0.0
    %1032 = vmatpush1.msra.mxu0 0.0
    %1033 = vmatprep.mubr.f32.mxu0 0.0
    %1034 = vmatmul.mubr.f32.gmra.mrb[0].mxu0 %v922
    %v1035 = vpop.f32.mrb[0].mxu0
    %v1036 = vadd.f32 0.0, %v1035
    %v1037 = vpop.f32.mrb[0].mxu0
    %1038 = vmatprep.mubr.f32.mxu0 0.0
    %1039 = vmatmul.mubr.f32.gmra.mrb[0].mxu0 %v925
    %v1040 = vpop.f32.mrb[0].mxu0
    %v1041 = vadd.f32 0.0, %v1040
    %v1042 = vpop.f32.mrb[0].mxu0
    %1043 = vmatprep.mubr.f32.mxu0 0.0
    %1044 = vmatmul.mubr.f32.gmra.mrb[0].mxu0 %v928
    %v1045 = vpop.f32.mrb[0].mxu0
    %v1046 = vadd.f32 0.0, %v1045
    %v1047 = vpop.f32.mrb[0].mxu0
    %1048 = vmatprep.mubr.f32.mxu0 0.0
    %1049 = vmatmul.mubr.f32.gmra.mrb[0].mxu0 %v931
    %v1050 = vpop.f32.mrb[0].mxu0
    %v1051 = vadd.f32 0.0, %v1050
    %v1052 = vpop.f32.mrb[0].mxu0
    %1053 = vmatprep.mubr.f32.mxu0 0.0
    %1054 = vmatmul.mubr.f32.gmra.mrb[0].mxu0 %v934
    %v1055 = vpop.f32.mrb[0].mxu0
    %v1056 = vadd.f32 0.0, %v1055
    %v1057 = vpop.f32.mrb[0].mxu0
    %1058 = vmatprep.mubr.f32.mxu0 0.0
    %1059 = vmatmul.mubr.f32.gmra.mrb[0].mxu0 %v937
    %v1060 = vpop.f32.mrb[0].mxu0
    %v1061 = vadd.f32 0.0, %v1060
    %v1062 = vpop.f32.mrb[0].mxu0
    %1063 = vmatprep.mubr.f32.mxu0 0.0
    %1064 = vmatmul.mubr.f32.gmra.mrb[0].mxu0 %v940
    %v1065 = vpop.f32.mrb[0].mxu0
    %v1066 = vadd.f32 0.0, %v1065
    %v1067 = vpop.f32.mrb[0].mxu0
    %1068 = vmatprep.mubr.f32.mxu0 0.0
    %1069 = vmatmul.mubr.f32.gmra.mrb[0].mxu0 %v943
    %v1070 = vpop.f32.mrb[0].mxu0
    %v1071 = vadd.f32 0.0, %v1070
    %v1072 = vpop.f32.mrb[0].mxu0
    %1073 = vmatprep.mubr.f32.mxu0 0.0
    %1074 = vmatmul.mubr.f32.gmra.mrb[0].mxu0 %v946
    %v1075 = vpop.f32.mrb[0].mxu0
    %v1076 = vadd.f32 0.0, %v1075
    %v1077 = vpop.f32.mrb[0].mxu0
    %1078 = vmatprep.mubr.f32.mxu0 0.0
    %1079 = vmatmul.mubr.f32.gmra.mrb[0].mxu0 %v949
    %v1080 = vpop.f32.mrb[0].mxu0
    %v1081 = vadd.f32 0.0, %v1080
    %v1082 = vpop.f32.mrb[0].mxu0
    %1083 = vmatprep.mubr.f32.mxu0 0.0
    %1084 = vmatmul.mubr.f32.gmra.mrb[0].mxu0 %v952
    %v1085 = vpop.f32.mrb[0].mxu0
    %v1086 = vadd.f32 0.0, %v1085
    %v1087 = vpop.f32.mrb[0].mxu0
    %1088 = vmatprep.mubr.f32.mxu0 0.0
    %1089 = vmatmul.mubr.f32.gmra.mrb[0].mxu0 %v955
    %v1090 = vpop.f32.mrb[0].mxu0
    %v1091 = vadd.f32 0.0, %v1090
    %v1092 = vpop.f32.mrb[0].mxu0
    %1093 = vmatprep.mubr.f32.mxu0 0.0
    %1094 = vmatmul.mubr.f32.gmra.mrb[0].mxu0 %v958
    %v1095 = vpop.f32.mrb[0].mxu0
    %v1096 = vadd.f32 0.0, %v1095
    %v1097 = vpop.f32.mrb[0].mxu0
    %1098 = vmatprep.mubr.f32.mxu0 0.0
    %1099 = vmatmul.mubr.f32.gmra.mrb[0].mxu0 %v961
    %v1100 = vpop.f32.mrb[0].mxu0
    %v1101 = vadd.f32 0.0, %v1100
    %v1102 = vpop.f32.mrb[0].mxu0
    %1103 = vmatprep.mubr.f32.mxu0 0.0
    %1104 = vmatmul.mubr.f32.gmra.mrb[0].mxu0 %v964
    %v1105 = vpop.f32.mrb[0].mxu0
    %v1106 = vadd.f32 0.0, %v1105
    %v1107 = vpop.f32.mrb[0].mxu0
    %1108 = vmatprep.mubr.f32.mxu0 0.0
    %1109 = vmatmul.mubr.f32.gmra.mrb[0].mxu0 %v967
    %v1110 = vpop.f32.mrb[0].mxu0
    %v1111 = vadd.f32 0.0, %v1110
    %v1112 = vpop.f32.mrb[0].mxu0
    %1113 = vdwg.mxu0
    %v1114 = vld [vmem:[#allocation2 + $0x1a0] sm:$0xf]
    %v1115 = vlaneseq
    %v1116 = vshrl.u32 %v1115, 7
    %v1117 = vsub.s32 0, %v1116
    %v1118 = vrot.slane %v1114, %v1117
    %v1119 = vmul.f32 %v1036, %v1118
    %v1120 = vmul.f32 %v1041, %v1118
    %v1121 = vmul.f32 %v1046, %v1118
    %v1122 = vmul.f32 %v1051, %v1118
    %v1123 = vlaneseq
    %v1124 = vshrl.u32 %v1123, 7
    %v1125 = vsub.s32 1, %v1124
    %v1126 = vrot.slane %v1114, %v1125
    %v1127 = vmul.f32 %v1056, %v1126
    %v1128 = vmul.f32 %v1061, %v1126
    %v1129 = vmul.f32 %v1066, %v1126
    %v1130 = vmul.f32 %v1071, %v1126
    %v1131 = vadd.f32 %v1119, %v1127
    %v1132 = vadd.f32 %v1120, %v1128
    %v1133 = vadd.f32 %v1121, %v1129
    %v1134 = vadd.f32 %v1122, %v1130
    %v1135 = vlaneseq
    %v1136 = vshrl.u32 %v1135, 7
    %v1137 = vsub.s32 2, %v1136
    %v1138 = vrot.slane %v1114, %v1137
    %v1139 = vmul.f32 %v1076, %v1138
    %v1140 = vmul.f32 %v1081, %v1138
    %v1141 = vmul.f32 %v1086, %v1138
    %v1142 = vmul.f32 %v1091, %v1138
    %v1143 = vadd.f32 %v1131, %v1139
    %v1144 = vadd.f32 %v1132, %v1140
    %v1145 = vadd.f32 %v1133, %v1141
    %v1146 = vadd.f32 %v1134, %v1142
    %v1147 = vlaneseq
    %v1148 = vshrl.u32 %v1147, 7
    %v1149 = vsub.s32 3, %v1148
    %v1150 = vrot.slane %v1114, %v1149
    %v1151 = vmul.f32 %v1096, %v1150
    %v1152 = vmul.f32 %v1101, %v1150
    %v1153 = vmul.f32 %v1106, %v1150
    %v1154 = vmul.f32 %v1111, %v1150
    %v1155 = vadd.f32 %v1143, %v1151
    %v1156 = vadd.f32 %v1144, %v1152
    %v1157 = vadd.f32 %v1145, %v1153
    %v1158 = vadd.f32 %v1146, %v1154
    %v1159 = vld [vmem:[#allocation2 + $0x360] sm:$0x1]
    %v1160 = vlaneseq
    %v1161 = vshrl.u32 %v1160, 7
    %v1162 = vsub.s32 0, %v1161
    %v1163 = vrot.slane %v1159, %v1162
    %v1164 = vadd.f32 %v1155, %v1163
    %v1165 = vadd.f32 %v1156, %v1163
    %v1166 = vadd.f32 %v1157, %v1163
    %v1167 = vadd.f32 %v1158, %v1163
    %vm1168 = vcmp.gt.f32.partialorder %v1164, 0.0
    %vm1169 = vcmp.gt.f32.partialorder %v1165, 0.0
    %vm1170 = vcmp.gt.f32.partialorder %v1166, 0.0
    %vm1171 = vcmp.gt.f32.partialorder %v1167, 0.0
    %v1172 = vmin.f32 %v1164, 0.0
    %v1173 = vmin.f32 %v1165, 0.0
    %v1174 = vmin.f32 %v1166, 0.0
    %v1175 = vmin.f32 %v1167, 0.0
    %v1176 = vmul.f32 %v1172, 1.442695
    %v1177 = vpow.pop %v1176
    %v1178 = vmul.f32 %v1173, 1.442695
    %v1179 = vpow.pop %v1178
    %v1180 = vmul.f32 %v1174, 1.442695
    %v1181 = vpow.pop %v1180
    %v1182 = vmul.f32 %v1175, 1.442695
    %v1183 = vpow.pop %v1182
    %v1184 = vsub.f32 %v1177, 1.0
    %v1185 = vsub.f32 %v1179, 1.0
    %v1186 = vsub.f32 %v1181, 1.0
    %v1187 = vsub.f32 %v1183, 1.0
    %v1188 = vsel %vm1168, %v1164, %v1184
    %v1189 = vsel %vm1169, %v1165, %v1185
    %v1190 = vsel %vm1170, %v1166, %v1186
    %v1191 = vsel %vm1171, %v1167, %v1187
    %v1192 = vld [vmem:[#allocation2 + $0x20] sm:$0xff]
    %v1193 = vld [vmem:[#allocation2 + $0x28] sm:$0xff]
    %v1194 = vld [vmem:[#allocation2 + $0x30] sm:$0xff]
    %v1195 = vld [vmem:[#allocation2 + $0x38] sm:$0xff]
    %v1197 = vsel %vm36, %v1188, 0
    %v1200 = vsel %vm36, %v1189, 0
    %v1203 = vsel %vm36, %v1190, 0
    %v1206 = vsel %vm36, %v1191, 0
    %1208 = vmatprep.subr.mxu0 0.0
    %1209 = vmatpush1.msra.mxu0 %v1192
    %1210 = vmatprep.subr.mxu0 0.0
    %1211 = vmatpush1.msra.mxu0 %v1193
    %1212 = vmatprep.subr.mxu0 0.0
    %1213 = vmatpush1.msra.mxu0 %v1194
    %1214 = vmatprep.subr.mxu0 0.0
    %1215 = vmatpush1.msra.mxu0 %v1195
    %1216 = vmatprep.subr.mxu0 0.0
    %1217 = vmatpush1.msra.mxu0 0.0
    %1218 = vmatprep.subr.mxu0 0.0
    %1219 = vmatpush1.msra.mxu0 0.0
    %1220 = vmatprep.subr.mxu0 0.0
    %1221 = vmatpush1.msra.mxu0 0.0
    %1222 = vmatprep.subr.mxu0 0.0
    %1223 = vmatpush1.msra.mxu0 0.0
    %1224 = vmatprep.subr.mxu0 0.0
    %1225 = vmatpush1.msra.mxu0 0.0
    %1226 = vmatprep.subr.mxu0 0.0
    %1227 = vmatpush1.msra.mxu0 0.0
    %1228 = vmatprep.subr.mxu0 0.0
    %1229 = vmatpush1.msra.mxu0 0.0
    %1230 = vmatprep.subr.mxu0 0.0
    %1231 = vmatpush1.msra.mxu0 0.0
    %1232 = vmatprep.subr.mxu0 0.0
    %1233 = vmatpush1.msra.mxu0 0.0
    %1234 = vmatprep.subr.mxu0 0.0
    %1235 = vmatpush1.msra.mxu0 0.0
    %1236 = vmatprep.subr.mxu0 0.0
    %1237 = vmatpush1.msra.mxu0 0.0
    %1238 = vmatprep.subr.mxu0 0.0
    %1239 = vmatpush1.msra.mxu0 0.0
    %1240 = vmatprep.subr.mxu0 0.0
    %1241 = vmatpush1.msra.mxu0 0.0
    %1242 = vmatprep.subr.mxu0 0.0
    %1243 = vmatpush1.msra.mxu0 0.0
    %1244 = vmatprep.subr.mxu0 0.0
    %1245 = vmatpush1.msra.mxu0 0.0
    %1246 = vmatprep.subr.mxu0 0.0
    %1247 = vmatpush1.msra.mxu0 0.0
    %1248 = vmatprep.subr.mxu0 0.0
    %1249 = vmatpush1.msra.mxu0 0.0
    %1250 = vmatprep.subr.mxu0 0.0
    %1251 = vmatpush1.msra.mxu0 0.0
    %1252 = vmatprep.subr.mxu0 0.0
    %1253 = vmatpush1.msra.mxu0 0.0
    %1254 = vmatprep.subr.mxu0 0.0
    %1255 = vmatpush1.msra.mxu0 0.0
    %1256 = vmatprep.subr.mxu0 0.0
    %1257 = vmatpush1.msra.mxu0 0.0
    %1258 = vmatprep.subr.mxu0 0.0
    %1259 = vmatpush1.msra.mxu0 0.0
    %1260 = vmatprep.subr.mxu0 0.0
    %1261 = vmatpush1.msra.mxu0 0.0
    %1262 = vmatprep.subr.mxu0 0.0
    %1263 = vmatpush1.msra.mxu0 0.0
    %1264 = vmatprep.subr.mxu0 0.0
    %1265 = vmatpush1.msra.mxu0 0.0
    %1266 = vmatprep.subr.mxu0 0.0
    %1267 = vmatpush1.msra.mxu0 0.0
    %1268 = vmatprep.subr.mxu0 0.0
    %1269 = vmatpush1.msra.mxu0 0.0
    %1270 = vmatprep.subr.mxu0 0.0
    %1271 = vmatpush1.msra.mxu0 0.0
    %1272 = vmatprep.mubr.f32.mxu0 0.0
    %1273 = vmatmul.mubr.f32.gmra.mrb[0].mxu0 %v1197
    %v1274 = vpop.f32.mrb[0].mxu0
    %v1275 = vadd.f32 0.0, %v1274
    %v1276 = vpop.f32.mrb[0].mxu0
    %1277 = vmatprep.mubr.f32.mxu0 0.0
    %1278 = vmatmul.mubr.f32.gmra.mrb[0].mxu0 %v1200
    %v1279 = vpop.f32.mrb[0].mxu0
    %v1280 = vadd.f32 0.0, %v1279
    %v1281 = vpop.f32.mrb[0].mxu0
    %1282 = vmatprep.mubr.f32.mxu0 0.0
    %1283 = vmatmul.mubr.f32.gmra.mrb[0].mxu0 %v1203
    %v1284 = vpop.f32.mrb[0].mxu0
    %v1285 = vadd.f32 0.0, %v1284
    %v1286 = vpop.f32.mrb[0].mxu0
    %1287 = vmatprep.mubr.f32.mxu0 0.0
    %1288 = vmatmul.mubr.f32.gmra.mrb[0].mxu0 %v1206
    %v1289 = vpop.f32.mrb[0].mxu0
    %v1290 = vadd.f32 0.0, %v1289
    %v1291 = vpop.f32.mrb[0].mxu0
    %1292 = vdwg.mxu0
    %v1293 = vld [vmem:[#allocation2 + $0x140] sm:$0xff]
    %v1294 = vld [vmem:[#allocation2 + $0x148] sm:$0xff]
    %v1295 = vld [vmem:[#allocation2 + $0x150] sm:$0xff]
    %v1296 = vld [vmem:[#allocation2 + $0x158] sm:$0xff]
    %v1297 = vld [vmem:[#allocation2 + $0x160] sm:$0xff]
    %v1298 = vld [vmem:[#allocation2 + $0x168] sm:$0xff]
    %v1299 = vld [vmem:[#allocation2 + $0x170] sm:$0xff]
    %v1300 = vld [vmem:[#allocation2 + $0x178] sm:$0xff]
    %v1301 = vld [vmem:[#allocation2 + $0x180] sm:$0xff]
    %v1302 = vld [vmem:[#allocation2 + $0x188] sm:$0xff]
    %v1303 = vld [vmem:[#allocation2 + $0x190] sm:$0xff]
    %v1304 = vld [vmem:[#allocation2 + $0x198] sm:$0xff]
    %v1305 = vld [vmem:[#allocation2 + $0x40] sm:$0xff]
    %v1306 = vld [vmem:[#allocation2 + $0x48] sm:$0xff]
    %v1307 = vld [vmem:[#allocation2 + $0x50] sm:$0xff]
    %v1308 = vld [vmem:[#allocation2 + $0x58] sm:$0xff]
    %v1309 = vld [vmem:[#allocation2 + $0x60] sm:$0xff]
    %v1310 = vld [vmem:[#allocation2 + $0x68] sm:$0xff]
    %v1311 = vld [vmem:[#allocation2 + $0x70] sm:$0xff]
    %v1312 = vld [vmem:[#allocation2 + $0x78] sm:$0xff]
    %v1313 = vld [vmem:[#allocation2 + $0x80] sm:$0xff]
    %v1314 = vld [vmem:[#allocation2 + $0x88] sm:$0xff]
    %v1315 = vld [vmem:[#allocation2 + $0x90] sm:$0xff]
    %v1316 = vld [vmem:[#allocation2 + $0x98] sm:$0xff]
    %1321 = vrot.lane.b32.xlu0 %v1275, 80
    %v1322 = vpop.permute.xlu0 %1321
    %1323 = vrot.lane.b32.xlu0 %v1280, 80
    %v1324 = vpop.permute.xlu0 %1323
    %1325 = vrot.lane.b32.xlu0 %v1285, 80
    %v1326 = vpop.permute.xlu0 %1325
    %1327 = vrot.lane.b32.xlu0 %v1290, 80
    %v1328 = vpop.permute.xlu0 %1327
    %vm1329 = vcmask 23552
    %v1331 = vsel %vm1329, %v1293, 0
    %v1334 = vsel %vm1329, %v1294, 0
    %v1337 = vsel %vm1329, %v1295, 0
    %v1340 = vsel %vm1329, %v1296, 0
    %v1343 = vsel %vm1329, %v1297, 0
    %v1346 = vsel %vm1329, %v1298, 0
    %v1349 = vsel %vm1329, %v1299, 0
    %v1352 = vsel %vm1329, %v1300, 0
    %v1355 = vsel %vm1329, %v1301, 0
    %v1358 = vsel %vm1329, %v1302, 0
    %v1361 = vsel %vm1329, %v1303, 0
    %v1364 = vsel %vm1329, %v1304, 0
    %v1366 = vsel %vm1329, %v1322, 0
    %v1368 = vsel %vm1329, %v1324, 0
    %v1370 = vsel %vm1329, %v1326, 0
    %v1372 = vsel %vm1329, %v1328, 0
    %1374 = vmatprep.subr.mxu0 0.0
    %1375 = vmatpush1.xpose.msra.mxu0 %v1366
    %1376 = vmatprep.subr.mxu0 0.0
    %1377 = vmatpush1.xpose.msra.mxu0 %v1368
    %1378 = vmatprep.subr.mxu0 0.0
    %1379 = vmatpush1.xpose.msra.mxu0 %v1370
    %1380 = vmatprep.subr.mxu0 0.0
    %1381 = vmatpush1.xpose.msra.mxu0 %v1372
    %1382 = vmatprep.subr.mxu0 0.0
    %1383 = vmatpush1.xpose.msra.mxu0 0.0
    %1384 = vmatprep.subr.mxu0 0.0
    %1385 = vmatpush1.xpose.msra.mxu0 0.0
    %1386 = vmatprep.subr.mxu0 0.0
    %1387 = vmatpush1.xpose.msra.mxu0 0.0
    %1388 = vmatprep.subr.mxu0 0.0
    %1389 = vmatpush1.xpose.msra.mxu0 0.0
    %1390 = vmatprep.subr.mxu0 0.0
    %1391 = vmatpush1.xpose.msra.mxu0 0.0
    %1392 = vmatprep.subr.mxu0 0.0
    %1393 = vmatpush1.xpose.msra.mxu0 0.0
    %1394 = vmatprep.subr.mxu0 0.0
    %1395 = vmatpush1.xpose.msra.mxu0 0.0
    %1396 = vmatprep.subr.mxu0 0.0
    %1397 = vmatpush1.xpose.msra.mxu0 0.0
    %1398 = vmatprep.subr.mxu0 0.0
    %1399 = vmatpush1.xpose.msra.mxu0 0.0
    %1400 = vmatprep.subr.mxu0 0.0
    %1401 = vmatpush1.xpose.msra.mxu0 0.0
    %1402 = vmatprep.subr.mxu0 0.0
    %1403 = vmatpush1.xpose.msra.mxu0 0.0
    %1404 = vmatprep.subr.mxu0 0.0
    %1405 = vmatpush1.xpose.msra.mxu0 0.0
    %1406 = vmatprep.subr.mxu0 0.0
    %1407 = vmatpush1.xpose.msra.mxu0 0.0
    %1408 = vmatprep.subr.mxu0 0.0
    %1409 = vmatpush1.xpose.msra.mxu0 0.0
    %1410 = vmatprep.subr.mxu0 0.0
    %1411 = vmatpush1.xpose.msra.mxu0 0.0
    %1412 = vmatprep.subr.mxu0 0.0
    %1413 = vmatpush1.xpose.msra.mxu0 0.0
    %1414 = vmatprep.subr.mxu0 0.0
    %1415 = vmatpush1.xpose.msra.mxu0 0.0
    %1416 = vmatprep.subr.mxu0 0.0
    %1417 = vmatpush1.xpose.msra.mxu0 0.0
    %1418 = vmatprep.subr.mxu0 0.0
    %1419 = vmatpush1.xpose.msra.mxu0 0.0
    %1420 = vmatprep.subr.mxu0 0.0
    %1421 = vmatpush1.xpose.msra.mxu0 0.0
    %1422 = vmatprep.subr.mxu0 0.0
    %1423 = vmatpush1.xpose.msra.mxu0 0.0
    %1424 = vmatprep.subr.mxu0 0.0
    %1425 = vmatpush1.xpose.msra.mxu0 0.0
    %1426 = vmatprep.subr.mxu0 0.0
    %1427 = vmatpush1.xpose.msra.mxu0 0.0
    %1428 = vmatprep.subr.mxu0 0.0
    %1429 = vmatpush1.xpose.msra.mxu0 0.0
    %1430 = vmatprep.subr.mxu0 0.0
    %1431 = vmatpush1.xpose.msra.mxu0 0.0
    %1432 = vmatprep.subr.mxu0 0.0
    %1433 = vmatpush1.xpose.msra.mxu0 0.0
    %1434 = vmatprep.subr.mxu0 0.0
    %1435 = vmatpush1.xpose.msra.mxu0 0.0
    %1436 = vmatprep.subr.mxu0 0.0
    %1437 = vmatpush1.xpose.msra.mxu0 0.0
    %1438 = vmatprep.mubr.f32.mxu0 0.0
    %1439 = vmatmul.mubr.f32.gmra.mrb[0].mxu0 %v1331
    %v1440 = vpop.f32.mrb[0].mxu0
    %v1441 = vadd.f32 0.0, %v1440
    %v1442 = vpop.f32.mrb[0].mxu0
    %1443 = vmatprep.mubr.f32.mxu0 0.0
    %1444 = vmatmul.mubr.f32.gmra.mrb[0].mxu0 %v1334
    %v1445 = vpop.f32.mrb[0].mxu0
    %v1446 = vadd.f32 0.0, %v1445
    %v1447 = vpop.f32.mrb[0].mxu0
    %1448 = vmatprep.mubr.f32.mxu0 0.0
    %1449 = vmatmul.mubr.f32.gmra.mrb[0].mxu0 %v1337
    %v1450 = vpop.f32.mrb[0].mxu0
    %v1451 = vadd.f32 0.0, %v1450
    %v1452 = vpop.f32.mrb[0].mxu0
    %1453 = vmatprep.mubr.f32.mxu0 0.0
    %1454 = vmatmul.mubr.f32.gmra.mrb[0].mxu0 %v1340
    %v1455 = vpop.f32.mrb[0].mxu0
    %v1456 = vadd.f32 0.0, %v1455
    %v1457 = vpop.f32.mrb[0].mxu0
    %1458 = vmatprep.mubr.f32.mxu0 0.0
    %1459 = vmatmul.mubr.f32.gmra.mrb[0].mxu0 %v1343
    %v1460 = vpop.f32.mrb[0].mxu0
    %v1461 = vadd.f32 0.0, %v1460
    %v1462 = vpop.f32.mrb[0].mxu0
    %1463 = vmatprep.mubr.f32.mxu0 0.0
    %1464 = vmatmul.mubr.f32.gmra.mrb[0].mxu0 %v1346
    %v1465 = vpop.f32.mrb[0].mxu0
    %v1466 = vadd.f32 0.0, %v1465
    %v1467 = vpop.f32.mrb[0].mxu0
    %1468 = vmatprep.mubr.f32.mxu0 0.0
    %1469 = vmatmul.mubr.f32.gmra.mrb[0].mxu0 %v1349
    %v1470 = vpop.f32.mrb[0].mxu0
    %v1471 = vadd.f32 0.0, %v1470
    %v1472 = vpop.f32.mrb[0].mxu0
    %1473 = vmatprep.mubr.f32.mxu0 0.0
    %1474 = vmatmul.mubr.f32.gmra.mrb[0].mxu0 %v1352
    %v1475 = vpop.f32.mrb[0].mxu0
    %v1476 = vadd.f32 0.0, %v1475
    %v1477 = vpop.f32.mrb[0].mxu0
    %1478 = vmatprep.mubr.f32.mxu0 0.0
    %1479 = vmatmul.mubr.f32.gmra.mrb[0].mxu0 %v1355
    %v1480 = vpop.f32.mrb[0].mxu0
    %v1481 = vadd.f32 0.0, %v1480
    %v1482 = vpop.f32.mrb[0].mxu0
    %1483 = vmatprep.mubr.f32.mxu0 0.0
    %1484 = vmatmul.mubr.f32.gmra.mrb[0].mxu0 %v1358
    %v1485 = vpop.f32.mrb[0].mxu0
    %v1486 = vadd.f32 0.0, %v1485
    %v1487 = vpop.f32.mrb[0].mxu0
    %1488 = vmatprep.mubr.f32.mxu0 0.0
    %1489 = vmatmul.mubr.f32.gmra.mrb[0].mxu0 %v1361
    %v1490 = vpop.f32.mrb[0].mxu0
    %v1491 = vadd.f32 0.0, %v1490
    %v1492 = vpop.f32.mrb[0].mxu0
    %1493 = vmatprep.mubr.f32.mxu0 0.0
    %1494 = vmatmul.mubr.f32.gmra.mrb[0].mxu0 %v1364
    %v1495 = vpop.f32.mrb[0].mxu0
    %v1496 = vadd.f32 0.0, %v1495
    %v1497 = vpop.f32.mrb[0].mxu0
    %1498 = vdwg.mxu0
    %1499 = vrot.lane.b32.xlu0 %v1275, 77
    %v1500 = vpop.permute.xlu0 %1499
    %1501 = vrot.lane.b32.xlu0 %v1280, 77
    %v1502 = vpop.permute.xlu0 %1501
    %1503 = vrot.lane.b32.xlu0 %v1285, 77
    %v1504 = vpop.permute.xlu0 %1503
    %1505 = vrot.lane.b32.xlu0 %v1290, 77
    %v1506 = vpop.permute.xlu0 %1505
    %v1512 = vsel %vm36, %v1305, 0
    %v1515 = vsel %vm36, %v1306, 0
    %v1518 = vsel %vm36, %v1307, 0
    %v1521 = vsel %vm36, %v1308, 0
    %v1524 = vsel %vm36, %v1309, 0
    %v1527 = vsel %vm36, %v1310, 0
    %v1530 = vsel %vm36, %v1311, 0
    %v1533 = vsel %vm36, %v1312, 0
    %v1536 = vsel %vm36, %v1313, 0
    %v1539 = vsel %vm36, %v1314, 0
    %v1542 = vsel %vm36, %v1315, 0
    %v1545 = vsel %vm36, %v1316, 0
    %1547 = vmatprep.subr.mxu0 0.0
    %1548 = vmatpush1.msra.mxu0 %v1500
    %1549 = vmatprep.subr.mxu0 0.0
    %1550 = vmatpush1.msra.mxu0 %v1502
    %1551 = vmatprep.subr.mxu0 0.0
    %1552 = vmatpush1.msra.mxu0 %v1504
    %1553 = vmatprep.subr.mxu0 0.0
    %1554 = vmatpush1.msra.mxu0 %v1506
    %1555 = vmatprep.subr.mxu0 0.0
    %1556 = vmatpush1.msra.mxu0 0.0
    %1557 = vmatprep.subr.mxu0 0.0
    %1558 = vmatpush1.msra.mxu0 0.0
    %1559 = vmatprep.subr.mxu0 0.0
    %1560 = vmatpush1.msra.mxu0 0.0
    %1561 = vmatprep.subr.mxu0 0.0
    %1562 = vmatpush1.msra.mxu0 0.0
    %1563 = vmatprep.subr.mxu0 0.0
    %1564 = vmatpush1.msra.mxu0 0.0
    %1565 = vmatprep.subr.mxu0 0.0
    %1566 = vmatpush1.msra.mxu0 0.0
    %1567 = vmatprep.subr.mxu0 0.0
    %1568 = vmatpush1.msra.mxu0 0.0
    %1569 = vmatprep.subr.mxu0 0.0
    %1570 = vmatpush1.msra.mxu0 0.0
    %1571 = vmatprep.subr.mxu0 0.0
    %1572 = vmatpush1.msra.mxu0 0.0
    %1573 = vmatprep.subr.mxu0 0.0
    %1574 = vmatpush1.msra.mxu0 0.0
    %1575 = vmatprep.subr.mxu0 0.0
    %1576 = vmatpush1.msra.mxu0 0.0
    %1577 = vmatprep.subr.mxu0 0.0
    %1578 = vmatpush1.msra.mxu0 0.0
    %1579 = vmatprep.subr.mxu0 0.0
    %1580 = vmatpush1.msra.mxu0 0.0
    %1581 = vmatprep.subr.mxu0 0.0
    %1582 = vmatpush1.msra.mxu0 0.0
    %1583 = vmatprep.subr.mxu0 0.0
    %1584 = vmatpush1.msra.mxu0 0.0
    %1585 = vmatprep.subr.mxu0 0.0
    %1586 = vmatpush1.msra.mxu0 0.0
    %1587 = vmatprep.subr.mxu0 0.0
    %1588 = vmatpush1.msra.mxu0 0.0
    %1589 = vmatprep.subr.mxu0 0.0
    %1590 = vmatpush1.msra.mxu0 0.0
    %1591 = vmatprep.subr.mxu0 0.0
    %1592 = vmatpush1.msra.mxu0 0.0
    %1593 = vmatprep.subr.mxu0 0.0
    %1594 = vmatpush1.msra.mxu0 0.0
    %1595 = vmatprep.subr.mxu0 0.0
    %1596 = vmatpush1.msra.mxu0 0.0
    %1597 = vmatprep.subr.mxu0 0.0
    %1598 = vmatpush1.msra.mxu0 0.0
    %1599 = vmatprep.subr.mxu0 0.0
    %1600 = vmatpush1.msra.mxu0 0.0
    %1601 = vmatprep.subr.mxu0 0.0
    %1602 = vmatpush1.msra.mxu0 0.0
    %1603 = vmatprep.subr.mxu0 0.0
    %1604 = vmatpush1.msra.mxu0 0.0
    %1605 = vmatprep.subr.mxu0 0.0
    %1606 = vmatpush1.msra.mxu0 0.0
    %1607 = vmatprep.subr.mxu0 0.0
    %1608 = vmatpush1.msra.mxu0 0.0
    %1609 = vmatprep.subr.mxu0 0.0
    %1610 = vmatpush1.msra.mxu0 0.0
    %1611 = vmatprep.mubr.f32.mxu0 0.0
    %1612 = vmatmul.mubr.f32.gmra.mrb[0].mxu0 %v1512
    %v1613 = vpop.f32.mrb[0].mxu0
    %v1614 = vadd.f32 0.0, %v1613
    %v1615 = vpop.f32.mrb[0].mxu0
    %1616 = vmatprep.mubr.f32.mxu0 0.0
    %1617 = vmatmul.mubr.f32.gmra.mrb[0].mxu0 %v1515
    %v1618 = vpop.f32.mrb[0].mxu0
    %v1619 = vadd.f32 0.0, %v1618
    %v1620 = vpop.f32.mrb[0].mxu0
    %1621 = vmatprep.mubr.f32.mxu0 0.0
    %1622 = vmatmul.mubr.f32.gmra.mrb[0].mxu0 %v1518
    %v1623 = vpop.f32.mrb[0].mxu0
    %v1624 = vadd.f32 0.0, %v1623
    %v1625 = vpop.f32.mrb[0].mxu0
    %1626 = vmatprep.mubr.f32.mxu0 0.0
    %1627 = vmatmul.mubr.f32.gmra.mrb[0].mxu0 %v1521
    %v1628 = vpop.f32.mrb[0].mxu0
    %v1629 = vadd.f32 0.0, %v1628
    %v1630 = vpop.f32.mrb[0].mxu0
    %1631 = vmatprep.mubr.f32.mxu0 0.0
    %1632 = vmatmul.mubr.f32.gmra.mrb[0].mxu0 %v1524
    %v1633 = vpop.f32.mrb[0].mxu0
    %v1634 = vadd.f32 0.0, %v1633
    %v1635 = vpop.f32.mrb[0].mxu0
    %1636 = vmatprep.mubr.f32.mxu0 0.0
    %1637 = vmatmul.mubr.f32.gmra.mrb[0].mxu0 %v1527
    %v1638 = vpop.f32.mrb[0].mxu0
    %v1639 = vadd.f32 0.0, %v1638
    %v1640 = vpop.f32.mrb[0].mxu0
    %1641 = vmatprep.mubr.f32.mxu0 0.0
    %1642 = vmatmul.mubr.f32.gmra.mrb[0].mxu0 %v1530
    %v1643 = vpop.f32.mrb[0].mxu0
    %v1644 = vadd.f32 0.0, %v1643
    %v1645 = vpop.f32.mrb[0].mxu0
    %1646 = vmatprep.mubr.f32.mxu0 0.0
    %1647 = vmatmul.mubr.f32.gmra.mrb[0].mxu0 %v1533
    %v1648 = vpop.f32.mrb[0].mxu0
    %v1649 = vadd.f32 0.0, %v1648
    %v1650 = vpop.f32.mrb[0].mxu0
    %1651 = vmatprep.mubr.f32.mxu0 0.0
    %1652 = vmatmul.mubr.f32.gmra.mrb[0].mxu0 %v1536
    %v1653 = vpop.f32.mrb[0].mxu0
    %v1654 = vadd.f32 0.0, %v1653
    %v1655 = vpop.f32.mrb[0].mxu0
    %1656 = vmatprep.mubr.f32.mxu0 0.0
    %1657 = vmatmul.mubr.f32.gmra.mrb[0].mxu0 %v1539
    %v1658 = vpop.f32.mrb[0].mxu0
    %v1659 = vadd.f32 0.0, %v1658
    %v1660 = vpop.f32.mrb[0].mxu0
    %1661 = vmatprep.mubr.f32.mxu0 0.0
    %1662 = vmatmul.mubr.f32.gmra.mrb[0].mxu0 %v1542
    %v1663 = vpop.f32.mrb[0].mxu0
    %v1664 = vadd.f32 0.0, %v1663
    %v1665 = vpop.f32.mrb[0].mxu0
    %1666 = vmatprep.mubr.f32.mxu0 0.0
    %1667 = vmatmul.mubr.f32.gmra.mrb[0].mxu0 %v1545
    %v1668 = vpop.f32.mrb[0].mxu0
    %v1669 = vadd.f32 0.0, %v1668
    %v1670 = vpop.f32.mrb[0].mxu0
    %1671 = vdwg.mxu0
    %v1672 = vmul.f32 %v1614, %v1293
    %v1673 = vmul.f32 %v1619, %v1294
    %v1674 = vmul.f32 %v1624, %v1295
    %v1675 = vmul.f32 %v1629, %v1296
    %v1676 = vmul.f32 %v1634, %v1297
    %v1677 = vmul.f32 %v1639, %v1298
    %v1678 = vmul.f32 %v1644, %v1299
    %v1679 = vmul.f32 %v1649, %v1300
    %v1680 = vmul.f32 %v1654, %v1301
    %v1681 = vmul.f32 %v1659, %v1302
    %v1682 = vmul.f32 %v1664, %v1303
    %v1683 = vmul.f32 %v1669, %v1304
    %v1684 = vsel %vm1329, %v1672, 0.0
    %1685 = vadd.xlane.f32.xlu0 %v1684
    %v1686 = vpop.xlane.xlu0 %1685
    %v1687 = vsel %vm1329, %v1673, 0.0
    %1688 = vadd.xlane.f32.xlu0 %v1687
    %v1689 = vpop.xlane.xlu0 %1688
    %v1690 = vsel %vm1329, %v1674, 0.0
    %1691 = vadd.xlane.f32.xlu0 %v1690
    %v1692 = vpop.xlane.xlu0 %1691
    %v1693 = vsel %vm1329, %v1675, 0.0
    %1694 = vadd.xlane.f32.xlu0 %v1693
    %v1695 = vpop.xlane.xlu0 %1694
    %v1696 = vsel %vm1329, %v1676, 0.0
    %1697 = vadd.xlane.f32.xlu0 %v1696
    %v1698 = vpop.xlane.xlu0 %1697
    %v1699 = vsel %vm1329, %v1677, 0.0
    %1700 = vadd.xlane.f32.xlu0 %v1699
    %v1701 = vpop.xlane.xlu0 %1700
    %v1702 = vsel %vm1329, %v1678, 0.0
    %1703 = vadd.xlane.f32.xlu0 %v1702
    %v1704 = vpop.xlane.xlu0 %1703
    %v1705 = vsel %vm1329, %v1679, 0.0
    %1706 = vadd.xlane.f32.xlu0 %v1705
    %v1707 = vpop.xlane.xlu0 %1706
    %v1708 = vsel %vm1329, %v1680, 0.0
    %1709 = vadd.xlane.f32.xlu0 %v1708
    %v1710 = vpop.xlane.xlu0 %1709
    %v1711 = vsel %vm1329, %v1681, 0.0
    %1712 = vadd.xlane.f32.xlu0 %v1711
    %v1713 = vpop.xlane.xlu0 %1712
    %v1714 = vsel %vm1329, %v1682, 0.0
    %1715 = vadd.xlane.f32.xlu0 %v1714
    %v1716 = vpop.xlane.xlu0 %1715
    %v1717 = vsel %vm1329, %v1683, 0.0
    %1718 = vadd.xlane.f32.xlu0 %v1717
    %v1719 = vpop.xlane.xlu0 %1718
    %v1720 = vadd.f32 %v1686, %v1441
    %v1721 = vadd.f32 %v1689, %v1446
    %v1722 = vadd.f32 %v1692, %v1451
    %v1723 = vadd.f32 %v1695, %v1456
    %v1724 = vadd.f32 %v1698, %v1461
    %v1725 = vadd.f32 %v1701, %v1466
    %v1726 = vadd.f32 %v1704, %v1471
    %v1727 = vadd.f32 %v1707, %v1476
    %v1728 = vadd.f32 %v1710, %v1481
    %v1729 = vadd.f32 %v1713, %v1486
    %v1730 = vadd.f32 %v1716, %v1491
    %v1731 = vadd.f32 %v1719, %v1496
    %vm1732 = vcmp.gt.f32.partialorder %v1720, 0.0
    %vm1733 = vcmp.gt.f32.partialorder %v1721, 0.0
    %vm1734 = vcmp.gt.f32.partialorder %v1722, 0.0
    %vm1735 = vcmp.gt.f32.partialorder %v1723, 0.0
    %vm1736 = vcmp.gt.f32.partialorder %v1724, 0.0
    %vm1737 = vcmp.gt.f32.partialorder %v1725, 0.0
    %vm1738 = vcmp.gt.f32.partialorder %v1726, 0.0
    %vm1739 = vcmp.gt.f32.partialorder %v1727, 0.0
    %vm1740 = vcmp.gt.f32.partialorder %v1728, 0.0
    %vm1741 = vcmp.gt.f32.partialorder %v1729, 0.0
    %vm1742 = vcmp.gt.f32.partialorder %v1730, 0.0
    %vm1743 = vcmp.gt.f32.partialorder %v1731, 0.0
    %v1744 = vmul.f32 %v1720, 0.2
    %v1745 = vmul.f32 %v1721, 0.2
    %v1746 = vmul.f32 %v1722, 0.2
    %v1747 = vmul.f32 %v1723, 0.2
    %v1748 = vmul.f32 %v1724, 0.2
    %v1749 = vmul.f32 %v1725, 0.2
    %v1750 = vmul.f32 %v1726, 0.2
    %v1751 = vmul.f32 %v1727, 0.2
    %v1752 = vmul.f32 %v1728, 0.2
    %v1753 = vmul.f32 %v1729, 0.2
    %v1754 = vmul.f32 %v1730, 0.2
    %v1755 = vmul.f32 %v1731, 0.2
    %v1756 = vsel %vm1732, %v1720, %v1744
    %v1757 = vsel %vm1733, %v1721, %v1745
    %v1758 = vsel %vm1734, %v1722, %v1746
    %v1759 = vsel %vm1735, %v1723, %v1747
    %v1760 = vsel %vm1736, %v1724, %v1748
    %v1761 = vsel %vm1737, %v1725, %v1749
    %v1762 = vsel %vm1738, %v1726, %v1750
    %v1763 = vsel %vm1739, %v1727, %v1751
    %v1764 = vsel %vm1740, %v1728, %v1752
    %v1765 = vsel %vm1741, %v1729, %v1753
    %v1766 = vsel %vm1742, %v1730, %v1754
    %v1767 = vsel %vm1743, %v1731, %v1755
    %v1768 = vld [vmem:[%s1] sm:$0xff]
    %v1769 = vld [vmem:[%s1 + $0x8] sm:$0xff]
    %v1770 = vld [vmem:[%s1 + $0x10] sm:$0xff]
    %v1771 = vld [vmem:[%s1 + $0x18] sm:$0xff]
    %v1772 = vld [vmem:[%s1 + $0x20] sm:$0xff]
    %v1773 = vld [vmem:[%s1 + $0x28] sm:$0xff]
    %v1774 = vld [vmem:[%s1 + $0x30] sm:$0xff]
    %v1775 = vld [vmem:[%s1 + $0x38] sm:$0xff]
    %v1776 = vld [vmem:[%s1 + $0x40] sm:$0xff]
    %v1777 = vld [vmem:[%s1 + $0x48] sm:$0xff]
    %v1778 = vld [vmem:[%s1 + $0x50] sm:$0xff]
    %v1779 = vld [vmem:[%s1 + $0x58] sm:$0xff]
    %v1780 = vadd.f32 %v1756, %v1768
    %v1781 = vadd.f32 %v1757, %v1769
    %v1782 = vadd.f32 %v1758, %v1770
    %v1783 = vadd.f32 %v1759, %v1771
    %v1784 = vadd.f32 %v1760, %v1772
    %v1785 = vadd.f32 %v1761, %v1773
    %v1786 = vadd.f32 %v1762, %v1774
    %v1787 = vadd.f32 %v1763, %v1775
    %v1788 = vadd.f32 %v1764, %v1776
    %v1789 = vadd.f32 %v1765, %v1777
    %v1790 = vadd.f32 %v1766, %v1778
    %v1791 = vadd.f32 %v1767, %v1779
    %v1792 = vsel %vm36, %v1780, -inf
    %1793 = vmax.xlane.f32.xlu0 %v1792
    %v1794 = vpop.xlane.xlu0 %1793
    %v1795 = vsel %vm36, %v1781, -inf
    %1796 = vmax.xlane.f32.xlu0 %v1795
    %v1797 = vpop.xlane.xlu0 %1796
    %v1798 = vsel %vm36, %v1782, -inf
    %1799 = vmax.xlane.f32.xlu0 %v1798
    %v1800 = vpop.xlane.xlu0 %1799
    %v1801 = vsel %vm36, %v1783, -inf
    %1802 = vmax.xlane.f32.xlu0 %v1801
    %v1803 = vpop.xlane.xlu0 %1802
    %v1804 = vsel %vm36, %v1784, -inf
    %1805 = vmax.xlane.f32.xlu0 %v1804
    %v1806 = vpop.xlane.xlu0 %1805
    %v1807 = vsel %vm36, %v1785, -inf
    %1808 = vmax.xlane.f32.xlu0 %v1807
    %v1809 = vpop.xlane.xlu0 %1808
    %v1810 = vsel %vm36, %v1786, -inf
    %1811 = vmax.xlane.f32.xlu0 %v1810
    %v1812 = vpop.xlane.xlu0 %1811
    %v1813 = vsel %vm36, %v1787, -inf
    %1814 = vmax.xlane.f32.xlu0 %v1813
    %v1815 = vpop.xlane.xlu0 %1814
    %v1816 = vsel %vm36, %v1788, -inf
    %1817 = vmax.xlane.f32.xlu0 %v1816
    %v1818 = vpop.xlane.xlu0 %1817
    %v1819 = vsel %vm36, %v1789, -inf
    %1820 = vmax.xlane.f32.xlu0 %v1819
    %v1821 = vpop.xlane.xlu0 %1820
    %v1822 = vsel %vm36, %v1790, -inf
    %1823 = vmax.xlane.f32.xlu0 %v1822
    %v1824 = vpop.xlane.xlu0 %1823
    %v1825 = vsel %vm36, %v1791, -inf
    %1826 = vmax.xlane.f32.xlu0 %v1825
    %v1827 = vpop.xlane.xlu0 %1826
    %v1828 = vsub.f32 %v1780, %v1794
    %v1829 = vsub.f32 %v1781, %v1797
    %v1830 = vsub.f32 %v1782, %v1800
    %v1831 = vsub.f32 %v1783, %v1803
    %v1832 = vsub.f32 %v1784, %v1806
    %v1833 = vsub.f32 %v1785, %v1809
    %v1834 = vsub.f32 %v1786, %v1812
    %v1835 = vsub.f32 %v1787, %v1815
    %v1836 = vsub.f32 %v1788, %v1818
    %v1837 = vsub.f32 %v1789, %v1821
    %v1838 = vsub.f32 %v1790, %v1824
    %v1839 = vsub.f32 %v1791, %v1827
    %v1840 = vmul.f32 %v1828, 1.442695
    %v1841 = vpow.pop %v1840
    %v1842 = vmul.f32 %v1829, 1.442695
    %v1843 = vpow.pop %v1842
    %v1844 = vmul.f32 %v1830, 1.442695
    %v1845 = vpow.pop %v1844
    %v1846 = vmul.f32 %v1831, 1.442695
    %v1847 = vpow.pop %v1846
    %v1848 = vmul.f32 %v1832, 1.442695
    %v1849 = vpow.pop %v1848
    %v1850 = vmul.f32 %v1833, 1.442695
    %v1851 = vpow.pop %v1850
    %v1852 = vmul.f32 %v1834, 1.442695
    %v1853 = vpow.pop %v1852
    %v1854 = vmul.f32 %v1835, 1.442695
    %v1855 = vpow.pop %v1854
    %v1856 = vmul.f32 %v1836, 1.442695
    %v1857 = vpow.pop %v1856
    %v1858 = vmul.f32 %v1837, 1.442695
    %v1859 = vpow.pop %v1858
    %v1860 = vmul.f32 %v1838, 1.442695
    %v1861 = vpow.pop %v1860
    %v1862 = vmul.f32 %v1839, 1.442695
    %v1863 = vpow.pop %v1862
    %v1864 = vsel %vm36, %v1841, 0.0
    %1865 = vadd.xlane.f32.xlu0 %v1864
    %v1866 = vpop.xlane.xlu0 %1865
    %v1867 = vsel %vm36, %v1843, 0.0
    %1868 = vadd.xlane.f32.xlu0 %v1867
    %v1869 = vpop.xlane.xlu0 %1868
    %v1870 = vsel %vm36, %v1845, 0.0
    %1871 = vadd.xlane.f32.xlu0 %v1870
    %v1872 = vpop.xlane.xlu0 %1871
    %v1873 = vsel %vm36, %v1847, 0.0
    %1874 = vadd.xlane.f32.xlu0 %v1873
    %v1875 = vpop.xlane.xlu0 %1874
    %v1876 = vsel %vm36, %v1849, 0.0
    %1877 = vadd.xlane.f32.xlu0 %v1876
    %v1878 = vpop.xlane.xlu0 %1877
    %v1879 = vsel %vm36, %v1851, 0.0
    %1880 = vadd.xlane.f32.xlu0 %v1879
    %v1881 = vpop.xlane.xlu0 %1880
    %v1882 = vsel %vm36, %v1853, 0.0
    %1883 = vadd.xlane.f32.xlu0 %v1882
    %v1884 = vpop.xlane.xlu0 %1883
    %v1885 = vsel %vm36, %v1855, 0.0
    %1886 = vadd.xlane.f32.xlu0 %v1885
    %v1887 = vpop.xlane.xlu0 %1886
    %v1888 = vsel %vm36, %v1857, 0.0
    %1889 = vadd.xlane.f32.xlu0 %v1888
    %v1890 = vpop.xlane.xlu0 %1889
    %v1891 = vsel %vm36, %v1859, 0.0
    %1892 = vadd.xlane.f32.xlu0 %v1891
    %v1893 = vpop.xlane.xlu0 %1892
    %v1894 = vsel %vm36, %v1861, 0.0
    %1895 = vadd.xlane.f32.xlu0 %v1894
    %v1896 = vpop.xlane.xlu0 %1895
    %v1897 = vsel %vm36, %v1863, 0.0
    %1898 = vadd.xlane.f32.xlu0 %v1897
    %v1899 = vpop.xlane.xlu0 %1898
    %v1900 = vrcp.pop %v1866
    %v1901 = vrcp.pop %v1869
    %v1902 = vrcp.pop %v1872
    %v1903 = vrcp.pop %v1875
    %v1904 = vrcp.pop %v1878
    %v1905 = vrcp.pop %v1881
    %v1906 = vrcp.pop %v1884
    %v1907 = vrcp.pop %v1887
    %v1908 = vrcp.pop %v1890
    %v1909 = vrcp.pop %v1893
    %v1910 = vrcp.pop %v1896
    %v1911 = vrcp.pop %v1899
    %v1912 = vmul.f32 %v1841, %v1900
    %v1913 = vmul.f32 %v1843, %v1901
    %v1914 = vmul.f32 %v1845, %v1902
    %v1915 = vmul.f32 %v1847, %v1903
    %v1916 = vmul.f32 %v1849, %v1904
    %v1917 = vmul.f32 %v1851, %v1905
    %v1918 = vmul.f32 %v1853, %v1906
    %v1919 = vmul.f32 %v1855, %v1907
    %v1920 = vmul.f32 %v1857, %v1908
    %v1921 = vmul.f32 %v1859, %v1909
    %v1922 = vmul.f32 %v1861, %v1910
    %v1923 = vmul.f32 %v1863, %v1911
    %v1925 = vsel %vm36, %v1912, 0
    %v1928 = vsel %vm36, %v1913, 0
    %v1931 = vsel %vm36, %v1914, 0
    %v1934 = vsel %vm36, %v1915, 0
    %v1937 = vsel %vm36, %v1916, 0
    %v1940 = vsel %vm36, %v1917, 0
    %v1943 = vsel %vm36, %v1918, 0
    %v1946 = vsel %vm36, %v1919, 0
    %v1949 = vsel %vm36, %v1920, 0
    %v1952 = vsel %vm36, %v1921, 0
    %v1955 = vsel %vm36, %v1922, 0
    %v1958 = vsel %vm36, %v1923, 0
    %1960 = vmatprep.subr.mxu0 0.0
    %1961 = vmatpush1.msra.mxu0 %v1275
    %1962 = vmatprep.subr.mxu0 0.0
    %1963 = vmatpush1.msra.mxu0 %v1280
    %1964 = vmatprep.subr.mxu0 0.0
    %1965 = vmatpush1.msra.mxu0 %v1285
    %1966 = vmatprep.subr.mxu0 0.0
    %1967 = vmatpush1.msra.mxu0 %v1290
    %1968 = vmatprep.subr.mxu0 0.0
    %1969 = vmatpush1.msra.mxu0 0.0
    %1970 = vmatprep.subr.mxu0 0.0
    %1971 = vmatpush1.msra.mxu0 0.0
    %1972 = vmatprep.subr.mxu0 0.0
    %1973 = vmatpush1.msra.mxu0 0.0
    %1974 = vmatprep.subr.mxu0 0.0
    %1975 = vmatpush1.msra.mxu0 0.0
    %1976 = vmatprep.subr.mxu0 0.0
    %1977 = vmatpush1.msra.mxu0 0.0
    %1978 = vmatprep.subr.mxu0 0.0
    %1979 = vmatpush1.msra.mxu0 0.0
    %1980 = vmatprep.subr.mxu0 0.0
    %1981 = vmatpush1.msra.mxu0 0.0
    %1982 = vmatprep.subr.mxu0 0.0
    %1983 = vmatpush1.msra.mxu0 0.0
    %1984 = vmatprep.subr.mxu0 0.0
    %1985 = vmatpush1.msra.mxu0 0.0
    %1986 = vmatprep.subr.mxu0 0.0
    %1987 = vmatpush1.msra.mxu0 0.0
    %1988 = vmatprep.subr.mxu0 0.0
    %1989 = vmatpush1.msra.mxu0 0.0
    %1990 = vmatprep.subr.mxu0 0.0
    %1991 = vmatpush1.msra.mxu0 0.0
    %1992 = vmatprep.subr.mxu0 0.0
    %1993 = vmatpush1.msra.mxu0 0.0
    %1994 = vmatprep.subr.mxu0 0.0
    %1995 = vmatpush1.msra.mxu0 0.0
    %1996 = vmatprep.subr.mxu0 0.0
    %1997 = vmatpush1.msra.mxu0 0.0
    %1998 = vmatprep.subr.mxu0 0.0
    %1999 = vmatpush1.msra.mxu0 0.0
    %2000 = vmatprep.subr.mxu0 0.0
    %2001 = vmatpush1.msra.mxu0 0.0
    %2002 = vmatprep.subr.mxu0 0.0
    %2003 = vmatpush1.msra.mxu0 0.0
    %2004 = vmatprep.subr.mxu0 0.0
    %2005 = vmatpush1.msra.mxu0 0.0
    %2006 = vmatprep.subr.mxu0 0.0
    %2007 = vmatpush1.msra.mxu0 0.0
    %2008 = vmatprep.subr.mxu0 0.0
    %2009 = vmatpush1.msra.mxu0 0.0
    %2010 = vmatprep.subr.mxu0 0.0
    %2011 = vmatpush1.msra.mxu0 0.0
    %2012 = vmatprep.subr.mxu0 0.0
    %2013 = vmatpush1.msra.mxu0 0.0
    %2014 = vmatprep.subr.mxu0 0.0
    %2015 = vmatpush1.msra.mxu0 0.0
    %2016 = vmatprep.subr.mxu0 0.0
    %2017 = vmatpush1.msra.mxu0 0.0
    %2018 = vmatprep.subr.mxu0 0.0
    %2019 = vmatpush1.msra.mxu0 0.0
    %2020 = vmatprep.subr.mxu0 0.0
    %2021 = vmatpush1.msra.mxu0 0.0
    %2022 = vmatprep.subr.mxu0 0.0
    %2023 = vmatpush1.msra.mxu0 0.0
    %2024 = vmatprep.mubr.f32.mxu0 0.0
    %2025 = vmatmul.mubr.f32.gmra.mrb[0].mxu0 %v1925
    %v2026 = vpop.f32.mrb[0].mxu0
    %v2027 = vadd.f32 0.0, %v2026
    %v2028 = vpop.f32.mrb[0].mxu0
    %2029 = vmatprep.mubr.f32.mxu0 0.0
    %2030 = vmatmul.mubr.f32.gmra.mrb[0].mxu0 %v1928
    %v2031 = vpop.f32.mrb[0].mxu0
    %v2032 = vadd.f32 0.0, %v2031
    %v2033 = vpop.f32.mrb[0].mxu0
    %2034 = vmatprep.mubr.f32.mxu0 0.0
    %2035 = vmatmul.mubr.f32.gmra.mrb[0].mxu0 %v1931
    %v2036 = vpop.f32.mrb[0].mxu0
    %v2037 = vadd.f32 0.0, %v2036
    %v2038 = vpop.f32.mrb[0].mxu0
    %2039 = vmatprep.mubr.f32.mxu0 0.0
    %2040 = vmatmul.mubr.f32.gmra.mrb[0].mxu0 %v1934
    %v2041 = vpop.f32.mrb[0].mxu0
    %v2042 = vadd.f32 0.0, %v2041
    %v2043 = vpop.f32.mrb[0].mxu0
    %2044 = vmatprep.mubr.f32.mxu0 0.0
    %2045 = vmatmul.mubr.f32.gmra.mrb[0].mxu0 %v1937
    %v2046 = vpop.f32.mrb[0].mxu0
    %v2047 = vadd.f32 0.0, %v2046
    %v2048 = vpop.f32.mrb[0].mxu0
    %2049 = vmatprep.mubr.f32.mxu0 0.0
    %2050 = vmatmul.mubr.f32.gmra.mrb[0].mxu0 %v1940
    %v2051 = vpop.f32.mrb[0].mxu0
    %v2052 = vadd.f32 0.0, %v2051
    %v2053 = vpop.f32.mrb[0].mxu0
    %2054 = vmatprep.mubr.f32.mxu0 0.0
    %2055 = vmatmul.mubr.f32.gmra.mrb[0].mxu0 %v1943
    %v2056 = vpop.f32.mrb[0].mxu0
    %v2057 = vadd.f32 0.0, %v2056
    %v2058 = vpop.f32.mrb[0].mxu0
    %2059 = vmatprep.mubr.f32.mxu0 0.0
    %2060 = vmatmul.mubr.f32.gmra.mrb[0].mxu0 %v1946
    %v2061 = vpop.f32.mrb[0].mxu0
    %v2062 = vadd.f32 0.0, %v2061
    %v2063 = vpop.f32.mrb[0].mxu0
    %2064 = vmatprep.mubr.f32.mxu0 0.0
    %2065 = vmatmul.mubr.f32.gmra.mrb[0].mxu0 %v1949
    %v2066 = vpop.f32.mrb[0].mxu0
    %v2067 = vadd.f32 0.0, %v2066
    %v2068 = vpop.f32.mrb[0].mxu0
    %2069 = vmatprep.mubr.f32.mxu0 0.0
    %2070 = vmatmul.mubr.f32.gmra.mrb[0].mxu0 %v1952
    %v2071 = vpop.f32.mrb[0].mxu0
    %v2072 = vadd.f32 0.0, %v2071
    %v2073 = vpop.f32.mrb[0].mxu0
    %2074 = vmatprep.mubr.f32.mxu0 0.0
    %2075 = vmatmul.mubr.f32.gmra.mrb[0].mxu0 %v1955
    %v2076 = vpop.f32.mrb[0].mxu0
    %v2077 = vadd.f32 0.0, %v2076
    %v2078 = vpop.f32.mrb[0].mxu0
    %2079 = vmatprep.mubr.f32.mxu0 0.0
    %2080 = vmatmul.mubr.f32.gmra.mrb[0].mxu0 %v1958
    %v2081 = vpop.f32.mrb[0].mxu0
    %v2082 = vadd.f32 0.0, %v2081
    %v2083 = vpop.f32.mrb[0].mxu0
    %2084 = vdwg.mxu0
    %v2085 = vld [vmem:[#allocation2 + $0x1a8] sm:$0x7]
    %v2086 = vlaneseq
    %v2087 = vshrl.u32 %v2086, 7
    %v2088 = vsub.s32 0, %v2087
    %v2089 = vrot.slane %v2085, %v2088
    %v2090 = vmul.f32 %v2027, %v2089
    %v2091 = vmul.f32 %v2032, %v2089
    %v2092 = vmul.f32 %v2037, %v2089
    %v2093 = vmul.f32 %v2042, %v2089
    %v2094 = vlaneseq
    %v2095 = vshrl.u32 %v2094, 7
    %v2096 = vsub.s32 1, %v2095
    %v2097 = vrot.slane %v2085, %v2096
    %v2098 = vmul.f32 %v2047, %v2097
    %v2099 = vmul.f32 %v2052, %v2097
    %v2100 = vmul.f32 %v2057, %v2097
    %v2101 = vmul.f32 %v2062, %v2097
    %v2102 = vadd.f32 %v2090, %v2098
    %v2103 = vadd.f32 %v2091, %v2099
    %v2104 = vadd.f32 %v2092, %v2100
    %v2105 = vadd.f32 %v2093, %v2101
    %v2106 = vlaneseq
    %v2107 = vshrl.u32 %v2106, 7
    %v2108 = vsub.s32 2, %v2107
    %v2109 = vrot.slane %v2085, %v2108
    %v2110 = vmul.f32 %v2067, %v2109
    %v2111 = vmul.f32 %v2072, %v2109
    %v2112 = vmul.f32 %v2077, %v2109
    %v2113 = vmul.f32 %v2082, %v2109
    %v2114 = vadd.f32 %v2102, %v2110
    %v2115 = vadd.f32 %v2103, %v2111
    %v2116 = vadd.f32 %v2104, %v2112
    %v2117 = vadd.f32 %v2105, %v2113
    %v2118 = vld [vmem:[#allocation2 + $0x368] sm:$0x1]
    %v2119 = vlaneseq
    %v2120 = vshrl.u32 %v2119, 7
    %v2121 = vsub.s32 0, %v2120
    %v2122 = vrot.slane %v2118, %v2121
    %v2123 = vadd.f32 %v2114, %v2122
    %v2124 = vadd.f32 %v2115, %v2122
    %v2125 = vadd.f32 %v2116, %v2122
    %v2126 = vadd.f32 %v2117, %v2122
    %vm2127 = vcmp.gt.f32.partialorder %v2123, 0.0
    %vm2128 = vcmp.gt.f32.partialorder %v2124, 0.0
    %vm2129 = vcmp.gt.f32.partialorder %v2125, 0.0
    %vm2130 = vcmp.gt.f32.partialorder %v2126, 0.0
    %v2131 = vmin.f32 %v2123, 0.0
    %v2132 = vmin.f32 %v2124, 0.0
    %v2133 = vmin.f32 %v2125, 0.0
    %v2134 = vmin.f32 %v2126, 0.0
    %v2135 = vmul.f32 %v2131, 1.442695
    %v2136 = vpow.pop %v2135
    %v2137 = vmul.f32 %v2132, 1.442695
    %v2138 = vpow.pop %v2137
    %v2139 = vmul.f32 %v2133, 1.442695
    %v2140 = vpow.pop %v2139
    %v2141 = vmul.f32 %v2134, 1.442695
    %v2142 = vpow.pop %v2141
    %v2143 = vsub.f32 %v2136, 1.0
    %v2144 = vsub.f32 %v2138, 1.0
    %v2145 = vsub.f32 %v2140, 1.0
    %v2146 = vsub.f32 %v2142, 1.0
    %v2147 = vsel %vm2127, %v2123, %v2143
    %v2148 = vsel %vm2128, %v2124, %v2144
    %v2149 = vsel %vm2129, %v2125, %v2145
    %v2150 = vsel %vm2130, %v2126, %v2146
    %2151 = vrot.lane.b32.xlu0 %v1188, 32
    %v2152 = vpop.permute.xlu0 %2151
    %2153 = vrot.lane.b32.xlu0 %v1189, 32
    %v2154 = vpop.permute.xlu0 %2153
    %2155 = vrot.lane.b32.xlu0 %v1190, 32
    %v2156 = vpop.permute.xlu0 %2155
    %2157 = vrot.lane.b32.xlu0 %v1191, 32
    %v2158 = vpop.permute.xlu0 %2157
    %2167 = vrot.lane.b32.xlu0 %v2147, 64
    %v2168 = vpop.permute.xlu0 %2167
    %2169 = vrot.lane.b32.xlu0 %v2148, 64
    %v2170 = vpop.permute.xlu0 %2169
    %2171 = vrot.lane.b32.xlu0 %v2149, 64
    %v2172 = vpop.permute.xlu0 %2171
    %2173 = vrot.lane.b32.xlu0 %v2150, 64
    %v2174 = vpop.permute.xlu0 %2173
    %v2179 = vsel %vm36, %v28, %v2152
    %v2180 = vsel %vm36, %v29, %v2154
    %v2181 = vsel %vm36, %v30, %v2156
    %v2182 = vsel %vm36, %v31, %v2158
    %vm2183 = vcmask 523264
    %v2184 = vsel %vm2183, %v2179, %v2168
    %v2185 = vsel %vm2183, %v2180, %v2170
    %v2186 = vsel %vm2183, %v2181, %v2172
    %v2187 = vsel %vm2183, %v2182, %v2174
    %v2188 = vld [vmem:[#allocation2 + $0x1b0] sm:$0xff]
    %v2189 = vld [vmem:[#allocation2 + $0x1b8] sm:$0xff]
    %v2190 = vld [vmem:[#allocation2 + $0x1c0] sm:$0xff]
    %v2191 = vld [vmem:[#allocation2 + $0x1c8] sm:$0xff]
    %v2192 = vld [vmem:[#allocation2 + $0x1d0] sm:$0xff]
    %v2193 = vld [vmem:[#allocation2 + $0x1d8] sm:$0xff]
    %v2194 = vld [vmem:[#allocation2 + $0x1e0] sm:$0xff]
    %v2195 = vld [vmem:[#allocation2 + $0x1e8] sm:$0xff]
    %v2196 = vld [vmem:[#allocation2 + $0x1f0] sm:$0xff]
    %v2197 = vld [vmem:[#allocation2 + $0x1f8] sm:$0xff]
    %v2198 = vld [vmem:[#allocation2 + $0x200] sm:$0xff]
    %v2199 = vld [vmem:[#allocation2 + $0x208] sm:$0xff]
    %v2200 = vld [vmem:[#allocation2 + $0x210] sm:$0xff]
    %v2201 = vld [vmem:[#allocation2 + $0x218] sm:$0xff]
    %vm2202 = vcmask 916480
    %v2204 = vsel %vm2202, %v2184, 0
    %v2207 = vsel %vm2202, %v2185, 0
    %v2210 = vsel %vm2202, %v2186, 0
    %v2213 = vsel %vm2202, %v2187, 0
    %2215 = vmatprep.subr.mxu0 0.0
    %2216 = vmatpush1.msra.mxu0 %v2188
    %2217 = vmatprep.subr.mxu0 0.0
    %2218 = vmatpush1.msra.mxu0 %v2189
    %2219 = vmatprep.subr.mxu0 0.0
    %2220 = vmatpush1.msra.mxu0 %v2190
    %2221 = vmatprep.subr.mxu0 0.0
    %2222 = vmatpush1.msra.mxu0 %v2191
    %2223 = vmatprep.subr.mxu0 0.0
    %2224 = vmatpush1.msra.mxu0 %v2192
    %2225 = vmatprep.subr.mxu0 0.0
    %2226 = vmatpush1.msra.mxu0 %v2193
    %2227 = vmatprep.subr.mxu0 0.0
    %2228 = vmatpush1.msra.mxu0 %v2194
    %2229 = vmatprep.subr.mxu0 0.0
    %2230 = vmatpush1.msra.mxu0 %v2195
    %2231 = vmatprep.subr.mxu0 0.0
    %2232 = vmatpush1.msra.mxu0 %v2196
    %2233 = vmatprep.subr.mxu0 0.0
    %2234 = vmatpush1.msra.mxu0 %v2197
    %2235 = vmatprep.subr.mxu0 0.0
    %2236 = vmatpush1.msra.mxu0 %v2198
    %2237 = vmatprep.subr.mxu0 0.0
    %2238 = vmatpush1.msra.mxu0 %v2199
    %2239 = vmatprep.subr.mxu0 0.0
    %2240 = vmatpush1.msra.mxu0 %v2200
    %2241 = vmatprep.subr.mxu0 0.0
    %2242 = vmatpush1.msra.mxu0 %v2201
    %2243 = vmatprep.subr.mxu0 0.0
    %2244 = vmatpush1.msra.mxu0 0.0
    %2245 = vmatprep.subr.mxu0 0.0
    %2246 = vmatpush1.msra.mxu0 0.0
    %2247 = vmatprep.subr.mxu0 0.0
    %2248 = vmatpush1.msra.mxu0 0.0
    %2249 = vmatprep.subr.mxu0 0.0
    %2250 = vmatpush1.msra.mxu0 0.0
    %2251 = vmatprep.subr.mxu0 0.0
    %2252 = vmatpush1.msra.mxu0 0.0
    %2253 = vmatprep.subr.mxu0 0.0
    %2254 = vmatpush1.msra.mxu0 0.0
    %2255 = vmatprep.subr.mxu0 0.0
    %2256 = vmatpush1.msra.mxu0 0.0
    %2257 = vmatprep.subr.mxu0 0.0
    %2258 = vmatpush1.msra.mxu0 0.0
    %2259 = vmatprep.subr.mxu0 0.0
    %2260 = vmatpush1.msra.mxu0 0.0
    %2261 = vmatprep.subr.mxu0 0.0
    %2262 = vmatpush1.msra.mxu0 0.0
    %2263 = vmatprep.subr.mxu0 0.0
    %2264 = vmatpush1.msra.mxu0 0.0
    %2265 = vmatprep.subr.mxu0 0.0
    %2266 = vmatpush1.msra.mxu0 0.0
    %2267 = vmatprep.subr.mxu0 0.0
    %2268 = vmatpush1.msra.mxu0 0.0
    %2269 = vmatprep.subr.mxu0 0.0
    %2270 = vmatpush1.msra.mxu0 0.0
    %2271 = vmatprep.subr.mxu0 0.0
    %2272 = vmatpush1.msra.mxu0 0.0
    %2273 = vmatprep.subr.mxu0 0.0
    %2274 = vmatpush1.msra.mxu0 0.0
    %2275 = vmatprep.subr.mxu0 0.0
    %2276 = vmatpush1.msra.mxu0 0.0
    %2277 = vmatprep.subr.mxu0 0.0
    %2278 = vmatpush1.msra.mxu0 0.0
    %2279 = vmatprep.mubr.f32.mxu0 0.0
    %2280 = vmatmul.mubr.f32.gmra.mrb[0].mxu0 %v2204
    %v2281 = vpop.f32.mrb[0].mxu0
    %v2282 = vadd.f32 0.0, %v2281
    %v2283 = vpop.f32.mrb[0].mxu0
    %2284 = vmatprep.mubr.f32.mxu0 0.0
    %2285 = vmatmul.mubr.f32.gmra.mrb[0].mxu0 %v2207
    %v2286 = vpop.f32.mrb[0].mxu0
    %v2287 = vadd.f32 0.0, %v2286
    %v2288 = vpop.f32.mrb[0].mxu0
    %2289 = vmatprep.mubr.f32.mxu0 0.0
    %2290 = vmatmul.mubr.f32.gmra.mrb[0].mxu0 %v2210
    %v2291 = vpop.f32.mrb[0].mxu0
    %v2292 = vadd.f32 0.0, %v2291
    %v2293 = vpop.f32.mrb[0].mxu0
    %2294 = vmatprep.mubr.f32.mxu0 0.0
    %2295 = vmatmul.mubr.f32.gmra.mrb[0].mxu0 %v2213
    %v2296 = vpop.f32.mrb[0].mxu0
    %v2297 = vadd.f32 0.0, %v2296
    %v2298 = vpop.f32.mrb[0].mxu0
    %2299 = vdwg.mxu0
    %v2300 = vld [vmem:[#allocation2 + $0x220] sm:$0x7]
    %v2302 = vsel %vm1329, %v2282, 0
    %v2305 = vsel %vm1329, %v2287, 0
    %v2308 = vsel %vm1329, %v2292, 0
    %v2311 = vsel %vm1329, %v2297, 0
    %vm2313 = vcmask 1042432
    %v2315 = vsel %vm2313, %v2300, 0
    %2317 = vmatprep.subr.mxu0 0.0
    %2318 = vmatpush1.msra.mxu0 %v2315
    %2319 = vmatprep.subr.mxu0 0.0
    %2320 = vmatpush1.msra.mxu0 0.0
    %2321 = vmatprep.subr.mxu0 0.0
    %2322 = vmatpush1.msra.mxu0 0.0
    %2323 = vmatprep.subr.mxu0 0.0
    %2324 = vmatpush1.msra.mxu0 0.0
    %2325 = vmatprep.subr.mxu0 0.0
    %2326 = vmatpush1.msra.mxu0 0.0
    %2327 = vmatprep.subr.mxu0 0.0
    %2328 = vmatpush1.msra.mxu0 0.0
    %2329 = vmatprep.subr.mxu0 0.0
    %2330 = vmatpush1.msra.mxu0 0.0
    %2331 = vmatprep.subr.mxu0 0.0
    %2332 = vmatpush1.msra.mxu0 0.0
    %2333 = vmatprep.subr.mxu0 0.0
    %2334 = vmatpush1.msra.mxu0 0.0
    %2335 = vmatprep.subr.mxu0 0.0
    %2336 = vmatpush1.msra.mxu0 0.0
    %2337 = vmatprep.subr.mxu0 0.0
    %2338 = vmatpush1.msra.mxu0 0.0
    %2339 = vmatprep.subr.mxu0 0.0
    %2340 = vmatpush1.msra.mxu0 0.0
    %2341 = vmatprep.subr.mxu0 0.0
    %2342 = vmatpush1.msra.mxu0 0.0
    %2343 = vmatprep.subr.mxu0 0.0
    %2344 = vmatpush1.msra.mxu0 0.0
    %2345 = vmatprep.subr.mxu0 0.0
    %2346 = vmatpush1.msra.mxu0 0.0
    %2347 = vmatprep.subr.mxu0 0.0
    %2348 = vmatpush1.msra.mxu0 0.0
    %2349 = vmatprep.subr.mxu0 0.0
    %2350 = vmatpush1.msra.mxu0 0.0
    %2351 = vmatprep.subr.mxu0 0.0
    %2352 = vmatpush1.msra.mxu0 0.0
    %2353 = vmatprep.subr.mxu0 0.0
    %2354 = vmatpush1.msra.mxu0 0.0
    %2355 = vmatprep.subr.mxu0 0.0
    %2356 = vmatpush1.msra.mxu0 0.0
    %2357 = vmatprep.subr.mxu0 0.0
    %2358 = vmatpush1.msra.mxu0 0.0
    %2359 = vmatprep.subr.mxu0 0.0
    %2360 = vmatpush1.msra.mxu0 0.0
    %2361 = vmatprep.subr.mxu0 0.0
    %2362 = vmatpush1.msra.mxu0 0.0
    %2363 = vmatprep.subr.mxu0 0.0
    %2364 = vmatpush1.msra.mxu0 0.0
    %2365 = vmatprep.subr.mxu0 0.0
    %2366 = vmatpush1.msra.mxu0 0.0
    %2367 = vmatprep.subr.mxu0 0.0
    %2368 = vmatpush1.msra.mxu0 0.0
    %2369 = vmatprep.subr.mxu0 0.0
    %2370 = vmatpush1.msra.mxu0 0.0
    %2371 = vmatprep.subr.mxu0 0.0
    %2372 = vmatpush1.msra.mxu0 0.0
    %2373 = vmatprep.subr.mxu0 0.0
    %2374 = vmatpush1.msra.mxu0 0.0
    %2375 = vmatprep.subr.mxu0 0.0
    %2376 = vmatpush1.msra.mxu0 0.0
    %2377 = vmatprep.subr.mxu0 0.0
    %2378 = vmatpush1.msra.mxu0 0.0
    %2379 = vmatprep.subr.mxu0 0.0
    %2380 = vmatpush1.msra.mxu0 0.0
    %2381 = vmatprep.mubr.f32.mxu0 0.0
    %2382 = vmatmul.mubr.f32.gmra.mrb[0].mxu0 %v2302
    %v2383 = vpop.f32.mrb[0].mxu0
    %v2384 = vadd.f32 0.0, %v2383
    %v2385 = vpop.f32.mrb[0].mxu0
    %2386 = vmatprep.mubr.f32.mxu0 0.0
    %2387 = vmatmul.mubr.f32.gmra.mrb[0].mxu0 %v2305
    %v2388 = vpop.f32.mrb[0].mxu0
    %v2389 = vadd.f32 0.0, %v2388
    %v2390 = vpop.f32.mrb[0].mxu0
    %2391 = vmatprep.mubr.f32.mxu0 0.0
    %2392 = vmatmul.mubr.f32.gmra.mrb[0].mxu0 %v2308
    %v2393 = vpop.f32.mrb[0].mxu0
    %v2394 = vadd.f32 0.0, %v2393
    %v2395 = vpop.f32.mrb[0].mxu0
    %2396 = vmatprep.mubr.f32.mxu0 0.0
    %2397 = vmatmul.mubr.f32.gmra.mrb[0].mxu0 %v2311
    %v2398 = vpop.f32.mrb[0].mxu0
    %v2399 = vadd.f32 0.0, %v2398
    %v2400 = vpop.f32.mrb[0].mxu0
    %2401 = vdwg.mxu0
    %v2402 = vld [vmem:[#allocation2 + $0x228] sm:$0xff]
    %v2403 = vld [vmem:[#allocation2 + $0x230] sm:$0xff]
    %v2404 = vld [vmem:[#allocation2 + $0x238] sm:$0xff]
    %v2405 = vld [vmem:[#allocation2 + $0x240] sm:$0xff]
    %v2406 = vmul.f32 %v2384, %v2402
    %v2407 = vmul.f32 %v2389, %v2403
    %v2408 = vmul.f32 %v2394, %v2404
    %v2409 = vmul.f32 %v2399, %v2405
    %v2410 = vld [vmem:[#allocation2 + $0x248] sm:$0x3]
    %v2411 = vld [vmem:[#allocation2 + $0x370] sm:$0x1]
    %v2412 = vlaneseq
    %v2413 = vshrl.u32 %v2412, 7
    %v2414 = vsub.s32 0, %v2413
    %v2415 = vrot.slane %v2411, %v2414
    %v2417 = vsel %vm36, %v2410, 0
    %2419 = vmatprep.subr.mxu0 0.0
    %2420 = vmatpush1.msra.mxu0 %v2406
    %2421 = vmatprep.subr.mxu0 0.0
    %2422 = vmatpush1.msra.mxu0 %v2407
    %2423 = vmatprep.subr.mxu0 0.0
    %2424 = vmatpush1.msra.mxu0 %v2408
    %2425 = vmatprep.subr.mxu0 0.0
    %2426 = vmatpush1.msra.mxu0 %v2409
    %2427 = vmatprep.subr.mxu0 0.0
    %2428 = vmatpush1.msra.mxu0 0.0
    %2429 = vmatprep.subr.mxu0 0.0
    %2430 = vmatpush1.msra.mxu0 0.0
    %2431 = vmatprep.subr.mxu0 0.0
    %2432 = vmatpush1.msra.mxu0 0.0
    %2433 = vmatprep.subr.mxu0 0.0
    %2434 = vmatpush1.msra.mxu0 0.0
    %2435 = vmatprep.subr.mxu0 0.0
    %2436 = vmatpush1.msra.mxu0 0.0
    %2437 = vmatprep.subr.mxu0 0.0
    %2438 = vmatpush1.msra.mxu0 0.0
    %2439 = vmatprep.subr.mxu0 0.0
    %2440 = vmatpush1.msra.mxu0 0.0
    %2441 = vmatprep.subr.mxu0 0.0
    %2442 = vmatpush1.msra.mxu0 0.0
    %2443 = vmatprep.subr.mxu0 0.0
    %2444 = vmatpush1.msra.mxu0 0.0
    %2445 = vmatprep.subr.mxu0 0.0
    %2446 = vmatpush1.msra.mxu0 0.0
    %2447 = vmatprep.subr.mxu0 0.0
    %2448 = vmatpush1.msra.mxu0 0.0
    %2449 = vmatprep.subr.mxu0 0.0
    %2450 = vmatpush1.msra.mxu0 0.0
    %2451 = vmatprep.subr.mxu0 0.0
    %2452 = vmatpush1.msra.mxu0 0.0
    %2453 = vmatprep.subr.mxu0 0.0
    %2454 = vmatpush1.msra.mxu0 0.0
    %2455 = vmatprep.subr.mxu0 0.0
    %2456 = vmatpush1.msra.mxu0 0.0
    %2457 = vmatprep.subr.mxu0 0.0
    %2458 = vmatpush1.msra.mxu0 0.0
    %2459 = vmatprep.subr.mxu0 0.0
    %2460 = vmatpush1.msra.mxu0 0.0
    %2461 = vmatprep.subr.mxu0 0.0
    %2462 = vmatpush1.msra.mxu0 0.0
    %2463 = vmatprep.subr.mxu0 0.0
    %2464 = vmatpush1.msra.mxu0 0.0
    %2465 = vmatprep.subr.mxu0 0.0
    %2466 = vmatpush1.msra.mxu0 0.0
    %2467 = vmatprep.subr.mxu0 0.0
    %2468 = vmatpush1.msra.mxu0 0.0
    %2469 = vmatprep.subr.mxu0 0.0
    %2470 = vmatpush1.msra.mxu0 0.0
    %2471 = vmatprep.subr.mxu0 0.0
    %2472 = vmatpush1.msra.mxu0 0.0
    %2473 = vmatprep.subr.mxu0 0.0
    %2474 = vmatpush1.msra.mxu0 0.0
    %2475 = vmatprep.subr.mxu0 0.0
    %2476 = vmatpush1.msra.mxu0 0.0
    %2477 = vmatprep.subr.mxu0 0.0
    %2478 = vmatpush1.msra.mxu0 0.0
    %2479 = vmatprep.subr.mxu0 0.0
    %2480 = vmatpush1.msra.mxu0 0.0
    %2481 = vmatprep.subr.mxu0 0.0
    %2482 = vmatpush1.msra.mxu0 0.0
    %2483 = vmatprep.mubr.f32.mxu0 0.0
    %2484 = vmatmul.mubr.f32.gmra.mrb[0].mxu0 %v2417
    %v2485 = vpop.f32.mrb[0].mxu0
    %v2486 = vadd.f32 %v2415, %v2485
    %v2487 = vpop.f32.mrb[0].mxu0
    %2488 = vdwg.mxu0
    %v2489 = vld [vmem:[#allocation2 + $0x250] sm:$0xff]
    %v2490 = vld [vmem:[#allocation2 + $0x258] sm:$0xff]
    %v2491 = vld [vmem:[#allocation2 + $0x260] sm:$0xff]
    %v2492 = vld [vmem:[#allocation2 + $0x268] sm:$0xff]
    %v2493 = vld [vmem:[#allocation2 + $0x270] sm:$0xff]
    %v2494 = vld [vmem:[#allocation2 + $0x278] sm:$0xff]
    %vm2495 = vcmask 392192
    %v2497 = vsel %vm2495, %v2486, 0
    %2499 = vmatprep.subr.mxu0 0.0
    %2500 = vmatpush1.msra.mxu0 %v2489
    %2501 = vmatprep.subr.mxu0 0.0
    %2502 = vmatpush1.msra.mxu0 %v2490
    %2503 = vmatprep.subr.mxu0 0.0
    %2504 = vmatpush1.msra.mxu0 %v2491
    %2505 = vmatprep.subr.mxu0 0.0
    %2506 = vmatpush1.msra.mxu0 %v2492
    %2507 = vmatprep.subr.mxu0 0.0
    %2508 = vmatpush1.msra.mxu0 %v2493
    %2509 = vmatprep.subr.mxu0 0.0
    %2510 = vmatpush1.msra.mxu0 %v2494
    %2511 = vmatprep.subr.mxu0 0.0
    %2512 = vmatpush1.msra.mxu0 0.0
    %2513 = vmatprep.subr.mxu0 0.0
    %2514 = vmatpush1.msra.mxu0 0.0
    %2515 = vmatprep.subr.mxu0 0.0
    %2516 = vmatpush1.msra.mxu0 0.0
    %2517 = vmatprep.subr.mxu0 0.0
    %2518 = vmatpush1.msra.mxu0 0.0
    %2519 = vmatprep.subr.mxu0 0.0
    %2520 = vmatpush1.msra.mxu0 0.0
    %2521 = vmatprep.subr.mxu0 0.0
    %2522 = vmatpush1.msra.mxu0 0.0
    %2523 = vmatprep.subr.mxu0 0.0
    %2524 = vmatpush1.msra.mxu0 0.0
    %2525 = vmatprep.subr.mxu0 0.0
    %2526 = vmatpush1.msra.mxu0 0.0
    %2527 = vmatprep.subr.mxu0 0.0
    %2528 = vmatpush1.msra.mxu0 0.0
    %2529 = vmatprep.subr.mxu0 0.0
    %2530 = vmatpush1.msra.mxu0 0.0
    %2531 = vmatprep.subr.mxu0 0.0
    %2532 = vmatpush1.msra.mxu0 0.0
    %2533 = vmatprep.subr.mxu0 0.0
    %2534 = vmatpush1.msra.mxu0 0.0
    %2535 = vmatprep.subr.mxu0 0.0
    %2536 = vmatpush1.msra.mxu0 0.0
    %2537 = vmatprep.subr.mxu0 0.0
    %2538 = vmatpush1.msra.mxu0 0.0
    %2539 = vmatprep.subr.mxu0 0.0
    %2540 = vmatpush1.msra.mxu0 0.0
    %2541 = vmatprep.subr.mxu0 0.0
    %2542 = vmatpush1.msra.mxu0 0.0
    %2543 = vmatprep.subr.mxu0 0.0
    %2544 = vmatpush1.msra.mxu0 0.0
    %2545 = vmatprep.subr.mxu0 0.0
    %2546 = vmatpush1.msra.mxu0 0.0
    %2547 = vmatprep.subr.mxu0 0.0
    %2548 = vmatpush1.msra.mxu0 0.0
    %2549 = vmatprep.subr.mxu0 0.0
    %2550 = vmatpush1.msra.mxu0 0.0
    %2551 = vmatprep.subr.mxu0 0.0
    %2552 = vmatpush1.msra.mxu0 0.0
    %2553 = vmatprep.subr.mxu0 0.0
    %2554 = vmatpush1.msra.mxu0 0.0
    %2555 = vmatprep.subr.mxu0 0.0
    %2556 = vmatpush1.msra.mxu0 0.0
    %2557 = vmatprep.subr.mxu0 0.0
    %2558 = vmatpush1.msra.mxu0 0.0
    %2559 = vmatprep.subr.mxu0 0.0
    %2560 = vmatpush1.msra.mxu0 0.0
    %2561 = vmatprep.subr.mxu0 0.0
    %2562 = vmatpush1.msra.mxu0 0.0
    %2563 = vmatprep.mubr.f32.mxu0 0.0
    %2564 = vmatmul.mubr.f32.gmra.mrb[0].mxu0 %v2497
    %v2565 = vpop.f32.mrb[0].mxu0
    %v2566 = vadd.f32 0.0, %v2565
    %v2567 = vpop.f32.mrb[0].mxu0
    %2568 = vdwg.mxu0
    %v2569 = vsub.f32 %v2486, %v2566
    %v2570 = vmul.f32 %v2569, %v2569
    %v2572 = vsel %vm2495, %v2570, 0
    %2574 = vmatprep.subr.mxu0 0.0
    %2575 = vmatpush1.msra.mxu0 %v2489
    %2576 = vmatprep.subr.mxu0 0.0
    %2577 = vmatpush1.msra.mxu0 %v2490
    %2578 = vmatprep.subr.mxu0 0.0
    %2579 = vmatpush1.msra.mxu0 %v2491
    %2580 = vmatprep.subr.mxu0 0.0
    %2581 = vmatpush1.msra.mxu0 %v2492
    %2582 = vmatprep.subr.mxu0 0.0
    %2583 = vmatpush1.msra.mxu0 %v2493
    %2584 = vmatprep.subr.mxu0 0.0
    %2585 = vmatpush1.msra.mxu0 %v2494
    %2586 = vmatprep.subr.mxu0 0.0
    %2587 = vmatpush1.msra.mxu0 0.0
    %2588 = vmatprep.subr.mxu0 0.0
    %2589 = vmatpush1.msra.mxu0 0.0
    %2590 = vmatprep.subr.mxu0 0.0
    %2591 = vmatpush1.msra.mxu0 0.0
    %2592 = vmatprep.subr.mxu0 0.0
    %2593 = vmatpush1.msra.mxu0 0.0
    %2594 = vmatprep.subr.mxu0 0.0
    %2595 = vmatpush1.msra.mxu0 0.0
    %2596 = vmatprep.subr.mxu0 0.0
    %2597 = vmatpush1.msra.mxu0 0.0
    %2598 = vmatprep.subr.mxu0 0.0
    %2599 = vmatpush1.msra.mxu0 0.0
    %2600 = vmatprep.subr.mxu0 0.0
    %2601 = vmatpush1.msra.mxu0 0.0
    %2602 = vmatprep.subr.mxu0 0.0
    %2603 = vmatpush1.msra.mxu0 0.0
    %2604 = vmatprep.subr.mxu0 0.0
    %2605 = vmatpush1.msra.mxu0 0.0
    %2606 = vmatprep.subr.mxu0 0.0
    %2607 = vmatpush1.msra.mxu0 0.0
    %2608 = vmatprep.subr.mxu0 0.0
    %2609 = vmatpush1.msra.mxu0 0.0
    %2610 = vmatprep.subr.mxu0 0.0
    %2611 = vmatpush1.msra.mxu0 0.0
    %2612 = vmatprep.subr.mxu0 0.0
    %2613 = vmatpush1.msra.mxu0 0.0
    %2614 = vmatprep.subr.mxu0 0.0
    %2615 = vmatpush1.msra.mxu0 0.0
    %2616 = vmatprep.subr.mxu0 0.0
    %2617 = vmatpush1.msra.mxu0 0.0
    %2618 = vmatprep.subr.mxu0 0.0
    %2619 = vmatpush1.msra.mxu0 0.0
    %2620 = vmatprep.subr.mxu0 0.0
    %2621 = vmatpush1.msra.mxu0 0.0
    %2622 = vmatprep.subr.mxu0 0.0
    %2623 = vmatpush1.msra.mxu0 0.0
    %2624 = vmatprep.subr.mxu0 0.0
    %2625 = vmatpush1.msra.mxu0 0.0
    %2626 = vmatprep.subr.mxu0 0.0
    %2627 = vmatpush1.msra.mxu0 0.0
    %2628 = vmatprep.subr.mxu0 0.0
    %2629 = vmatpush1.msra.mxu0 0.0
    %2630 = vmatprep.subr.mxu0 0.0
    %2631 = vmatpush1.msra.mxu0 0.0
    %2632 = vmatprep.subr.mxu0 0.0
    %2633 = vmatpush1.msra.mxu0 0.0
    %2634 = vmatprep.subr.mxu0 0.0
    %2635 = vmatpush1.msra.mxu0 0.0
    %2636 = vmatprep.subr.mxu0 0.0
    %2637 = vmatpush1.msra.mxu0 0.0
    %2638 = vmatprep.mubr.f32.mxu0 0.0
    %2639 = vmatmul.mubr.f32.gmra.mrb[0].mxu0 %v2572
    %v2640 = vpop.f32.mrb[0].mxu0
    %v2641 = vadd.f32 1e-05, %v2640
    %v2642 = vpop.f32.mrb[0].mxu0
    %2643 = vdwg.mxu0
    %v2644 = vrsqrt.pop %v2641
    %v2645 = vmul.f32 %v2569, %v2644
    %v2646 = vld [vmem:[#allocation2 + $0x378] sm:$0x1]
    %v2647 = vlaneseq
    %v2648 = vshrl.u32 %v2647, 7
    %v2649 = vsub.s32 0, %v2648
    %v2650 = vrot.slane %v2646, %v2649
    %v2651 = vmul.f32 %v2645, %v2650
    %v2652 = vld [vmem:[#allocation2 + $0x380] sm:$0x1]
    %v2653 = vlaneseq
    %v2654 = vshrl.u32 %v2653, 7
    %v2655 = vsub.s32 0, %v2654
    %v2656 = vrot.slane %v2652, %v2655
    %v2657 = vadd.f32 %v2651, %v2656
    %v2658 = vld [vmem:[#allocation2 + $0x280] sm:$0xff]
    %v2659 = vld [vmem:[#allocation2 + $0x288] sm:$0xff]
    %v2660 = vld [vmem:[#allocation2 + $0x290] sm:$0xff]
    %v2661 = vld [vmem:[#allocation2 + $0x298] sm:$0xff]
    %v2662 = vld [vmem:[#allocation2 + $0x2a0] sm:$0xff]
    %v2663 = vld [vmem:[#allocation2 + $0x2a8] sm:$0xff]
    %v2664 = vld [vmem:[#allocation2 + $0x388] sm:$0x1]
    %v2665 = vlaneseq
    %v2666 = vshrl.u32 %v2665, 7
    %v2667 = vsub.s32 0, %v2666
    %v2668 = vrot.slane %v2664, %v2667
    %v2670 = vsel %vm2495, %v2657, 0
    %2672 = vmatprep.subr.mxu0 0.0
    %2673 = vmatpush1.msra.mxu0 %v2658
    %2674 = vmatprep.subr.mxu0 0.0
    %2675 = vmatpush1.msra.mxu0 %v2659
    %2676 = vmatprep.subr.mxu0 0.0
    %2677 = vmatpush1.msra.mxu0 %v2660
    %2678 = vmatprep.subr.mxu0 0.0
    %2679 = vmatpush1.msra.mxu0 %v2661
    %2680 = vmatprep.subr.mxu0 0.0
    %2681 = vmatpush1.msra.mxu0 %v2662
    %2682 = vmatprep.subr.mxu0 0.0
    %2683 = vmatpush1.msra.mxu0 %v2663
    %2684 = vmatprep.subr.mxu0 0.0
    %2685 = vmatpush1.msra.mxu0 0.0
    %2686 = vmatprep.subr.mxu0 0.0
    %2687 = vmatpush1.msra.mxu0 0.0
    %2688 = vmatprep.subr.mxu0 0.0
    %2689 = vmatpush1.msra.mxu0 0.0
    %2690 = vmatprep.subr.mxu0 0.0
    %2691 = vmatpush1.msra.mxu0 0.0
    %2692 = vmatprep.subr.mxu0 0.0
    %2693 = vmatpush1.msra.mxu0 0.0
    %2694 = vmatprep.subr.mxu0 0.0
    %2695 = vmatpush1.msra.mxu0 0.0
    %2696 = vmatprep.subr.mxu0 0.0
    %2697 = vmatpush1.msra.mxu0 0.0
    %2698 = vmatprep.subr.mxu0 0.0
    %2699 = vmatpush1.msra.mxu0 0.0
    %2700 = vmatprep.subr.mxu0 0.0
    %2701 = vmatpush1.msra.mxu0 0.0
    %2702 = vmatprep.subr.mxu0 0.0
    %2703 = vmatpush1.msra.mxu0 0.0
    %2704 = vmatprep.subr.mxu0 0.0
    %2705 = vmatpush1.msra.mxu0 0.0
    %2706 = vmatprep.subr.mxu0 0.0
    %2707 = vmatpush1.msra.mxu0 0.0
    %2708 = vmatprep.subr.mxu0 0.0
    %2709 = vmatpush1.msra.mxu0 0.0
    %2710 = vmatprep.subr.mxu0 0.0
    %2711 = vmatpush1.msra.mxu0 0.0
    %2712 = vmatprep.subr.mxu0 0.0
    %2713 = vmatpush1.msra.mxu0 0.0
    %2714 = vmatprep.subr.mxu0 0.0
    %2715 = vmatpush1.msra.mxu0 0.0
    %2716 = vmatprep.subr.mxu0 0.0
    %2717 = vmatpush1.msra.mxu0 0.0
    %2718 = vmatprep.subr.mxu0 0.0
    %2719 = vmatpush1.msra.mxu0 0.0
    %2720 = vmatprep.subr.mxu0 0.0
    %2721 = vmatpush1.msra.mxu0 0.0
    %2722 = vmatprep.subr.mxu0 0.0
    %2723 = vmatpush1.msra.mxu0 0.0
    %2724 = vmatprep.subr.mxu0 0.0
    %2725 = vmatpush1.msra.mxu0 0.0
    %2726 = vmatprep.subr.mxu0 0.0
    %2727 = vmatpush1.msra.mxu0 0.0
    %2728 = vmatprep.subr.mxu0 0.0
    %2729 = vmatpush1.msra.mxu0 0.0
    %2730 = vmatprep.subr.mxu0 0.0
    %2731 = vmatpush1.msra.mxu0 0.0
    %2732 = vmatprep.subr.mxu0 0.0
    %2733 = vmatpush1.msra.mxu0 0.0
    %2734 = vmatprep.subr.mxu0 0.0
    %2735 = vmatpush1.msra.mxu0 0.0
    %2736 = vmatprep.mubr.f32.mxu0 0.0
    %2737 = vmatmul.mubr.f32.gmra.mrb[0].mxu0 %v2670
    %v2738 = vpop.f32.mrb[0].mxu0
    %v2739 = vadd.f32 %v2668, %v2738
    %v2740 = vpop.f32.mrb[0].mxu0
    %2741 = vdwg.mxu0
    %vm2742 = vcmp.gt.f32.partialorder %v2739, 0.0
    %v2743 = vmin.f32 %v2739, 0.0
    %v2744 = vmul.f32 %v2743, 1.442695
    %v2745 = vpow.pop %v2744
    %v2746 = vsub.f32 %v2745, 1.0
    %v2747 = vsel %vm2742, %v2739, %v2746
    %v2748 = vld [vmem:[#allocation2 + $0x2b0] sm:$0xff]
    %v2749 = vld [vmem:[#allocation2 + $0x2b8] sm:$0xff]
    %v2750 = vld [vmem:[#allocation2 + $0x2c0] sm:$0xff]
    %v2751 = vld [vmem:[#allocation2 + $0x2c8] sm:$0xff]
    %v2752 = vld [vmem:[#allocation2 + $0x2d0] sm:$0xff]
    %v2753 = vld [vmem:[#allocation2 + $0x2d8] sm:$0xff]
    %v2754 = vld [vmem:[#allocation2 + $0x2e0] sm:$0xff]
    %v2755 = vld [vmem:[#allocation2 + $0x2e8] sm:$0xff]
    %v2756 = vld [vmem:[#allocation2 + $0x390] sm:$0x1]
    %v2757 = vlaneseq
    %v2758 = vshrl.u32 %v2757, 7
    %v2759 = vsub.s32 0, %v2758
    %v2760 = vrot.slane %v2756, %v2759
    %v2762 = vsel %vm2183, %v2747, 0
    %2764 = vmatprep.subr.mxu0 0.0
    %2765 = vmatpush1.msra.mxu0 %v2748
    %2766 = vmatprep.subr.mxu0 0.0
    %2767 = vmatpush1.msra.mxu0 %v2749
    %2768 = vmatprep.subr.mxu0 0.0
    %2769 = vmatpush1.msra.mxu0 %v2750
    %2770 = vmatprep.subr.mxu0 0.0
    %2771 = vmatpush1.msra.mxu0 %v2751
    %2772 = vmatprep.subr.mxu0 0.0
    %2773 = vmatpush1.msra.mxu0 %v2752
    %2774 = vmatprep.subr.mxu0 0.0
    %2775 = vmatpush1.msra.mxu0 %v2753
    %2776 = vmatprep.subr.mxu0 0.0
    %2777 = vmatpush1.msra.mxu0 %v2754
    %2778 = vmatprep.subr.mxu0 0.0
    %2779 = vmatpush1.msra.mxu0 %v2755
    %2780 = vmatprep.subr.mxu0 0.0
    %2781 = vmatpush1.msra.mxu0 0.0
    %2782 = vmatprep.subr.mxu0 0.0
    %2783 = vmatpush1.msra.mxu0 0.0
    %2784 = vmatprep.subr.mxu0 0.0
    %2785 = vmatpush1.msra.mxu0 0.0
    %2786 = vmatprep.subr.mxu0 0.0
    %2787 = vmatpush1.msra.mxu0 0.0
    %2788 = vmatprep.subr.mxu0 0.0
    %2789 = vmatpush1.msra.mxu0 0.0
    %2790 = vmatprep.subr.mxu0 0.0
    %2791 = vmatpush1.msra.mxu0 0.0
    %2792 = vmatprep.subr.mxu0 0.0
    %2793 = vmatpush1.msra.mxu0 0.0
    %2794 = vmatprep.subr.mxu0 0.0
    %2795 = vmatpush1.msra.mxu0 0.0
    %2796 = vmatprep.subr.mxu0 0.0
    %2797 = vmatpush1.msra.mxu0 0.0
    %2798 = vmatprep.subr.mxu0 0.0
    %2799 = vmatpush1.msra.mxu0 0.0
    %2800 = vmatprep.subr.mxu0 0.0
    %2801 = vmatpush1.msra.mxu0 0.0
    %2802 = vmatprep.subr.mxu0 0.0
    %2803 = vmatpush1.msra.mxu0 0.0
    %2804 = vmatprep.subr.mxu0 0.0
    %2805 = vmatpush1.msra.mxu0 0.0
    %2806 = vmatprep.subr.mxu0 0.0
    %2807 = vmatpush1.msra.mxu0 0.0
    %2808 = vmatprep.subr.mxu0 0.0
    %2809 = vmatpush1.msra.mxu0 0.0
    %2810 = vmatprep.subr.mxu0 0.0
    %2811 = vmatpush1.msra.mxu0 0.0
    %2812 = vmatprep.subr.mxu0 0.0
    %2813 = vmatpush1.msra.mxu0 0.0
    %2814 = vmatprep.subr.mxu0 0.0
    %2815 = vmatpush1.msra.mxu0 0.0
    %2816 = vmatprep.subr.mxu0 0.0
    %2817 = vmatpush1.msra.mxu0 0.0
    %2818 = vmatprep.subr.mxu0 0.0
    %2819 = vmatpush1.msra.mxu0 0.0
    %2820 = vmatprep.subr.mxu0 0.0
    %2821 = vmatpush1.msra.mxu0 0.0
    %2822 = vmatprep.subr.mxu0 0.0
    %2823 = vmatpush1.msra.mxu0 0.0
    %2824 = vmatprep.subr.mxu0 0.0
    %2825 = vmatpush1.msra.mxu0 0.0
    %2826 = vmatprep.subr.mxu0 0.0
    %2827 = vmatpush1.msra.mxu0 0.0
    %2828 = vmatprep.mubr.f32.mxu0 0.0
    %2829 = vmatmul.mubr.f32.gmra.mrb[0].mxu0 %v2762
    %v2830 = vpop.f32.mrb[0].mxu0
    %v2831 = vadd.f32 %v2760, %v2830
    %v2832 = vpop.f32.mrb[0].mxu0
    %2833 = vdwg.mxu0
    %vm2834 = vcmp.gt.f32.partialorder %v2831, 0.0
    %v2835 = vmin.f32 %v2831, 0.0
    %v2836 = vmul.f32 %v2835, 1.442695
    %v2837 = vpow.pop %v2836
    %v2838 = vsub.f32 %v2837, 1.0
    %v2839 = vsel %vm2834, %v2831, %v2838
    %v2840 = vld [vmem:[#allocation2 + $0x2f0] sm:$0xff]
    %v2841 = vld [vmem:[#allocation2 + $0x2f8] sm:$0xff]
    %v2842 = vld [vmem:[#allocation2 + $0x300] sm:$0xff]
    %v2843 = vld [vmem:[#allocation2 + $0x308] sm:$0xff]
    %v2844 = vld [vmem:[#allocation2 + $0x310] sm:$0xff]
    %v2845 = vld [vmem:[#allocation2 + $0x318] sm:$0xff]
    %v2846 = vld [vmem:[#allocation2 + $0x398] sm:$0x1]
    %v2847 = vlaneseq
    %v2848 = vshrl.u32 %v2847, 7
    %v2849 = vsub.s32 0, %v2848
    %v2850 = vrot.slane %v2846, %v2849
    %v2852 = vsel %vm2495, %v2839, 0
    %2854 = vmatprep.subr.mxu0 0.0
    %2855 = vmatpush1.msra.mxu0 %v2840
    %2856 = vmatprep.subr.mxu0 0.0
    %2857 = vmatpush1.msra.mxu0 %v2841
    %2858 = vmatprep.subr.mxu0 0.0
    %2859 = vmatpush1.msra.mxu0 %v2842
    %2860 = vmatprep.subr.mxu0 0.0
    %2861 = vmatpush1.msra.mxu0 %v2843
    %2862 = vmatprep.subr.mxu0 0.0
    %2863 = vmatpush1.msra.mxu0 %v2844
    %2864 = vmatprep.subr.mxu0 0.0
    %2865 = vmatpush1.msra.mxu0 %v2845
    %2866 = vmatprep.subr.mxu0 0.0
    %2867 = vmatpush1.msra.mxu0 0.0
    %2868 = vmatprep.subr.mxu0 0.0
    %2869 = vmatpush1.msra.mxu0 0.0
    %2870 = vmatprep.subr.mxu0 0.0
    %2871 = vmatpush1.msra.mxu0 0.0
    %2872 = vmatprep.subr.mxu0 0.0
    %2873 = vmatpush1.msra.mxu0 0.0
    %2874 = vmatprep.subr.mxu0 0.0
    %2875 = vmatpush1.msra.mxu0 0.0
    %2876 = vmatprep.subr.mxu0 0.0
    %2877 = vmatpush1.msra.mxu0 0.0
    %2878 = vmatprep.subr.mxu0 0.0
    %2879 = vmatpush1.msra.mxu0 0.0
    %2880 = vmatprep.subr.mxu0 0.0
    %2881 = vmatpush1.msra.mxu0 0.0
    %2882 = vmatprep.subr.mxu0 0.0
    %2883 = vmatpush1.msra.mxu0 0.0
    %2884 = vmatprep.subr.mxu0 0.0
    %2885 = vmatpush1.msra.mxu0 0.0
    %2886 = vmatprep.subr.mxu0 0.0
    %2887 = vmatpush1.msra.mxu0 0.0
    %2888 = vmatprep.subr.mxu0 0.0
    %2889 = vmatpush1.msra.mxu0 0.0
    %2890 = vmatprep.subr.mxu0 0.0
    %2891 = vmatpush1.msra.mxu0 0.0
    %2892 = vmatprep.subr.mxu0 0.0
    %2893 = vmatpush1.msra.mxu0 0.0
    %2894 = vmatprep.subr.mxu0 0.0
    %2895 = vmatpush1.msra.mxu0 0.0
    %2896 = vmatprep.subr.mxu0 0.0
    %2897 = vmatpush1.msra.mxu0 0.0
    %2898 = vmatprep.subr.mxu0 0.0
    %2899 = vmatpush1.msra.mxu0 0.0
    %2900 = vmatprep.subr.mxu0 0.0
    %2901 = vmatpush1.msra.mxu0 0.0
    %2902 = vmatprep.subr.mxu0 0.0
    %2903 = vmatpush1.msra.mxu0 0.0
    %2904 = vmatprep.subr.mxu0 0.0
    %2905 = vmatpush1.msra.mxu0 0.0
    %2906 = vmatprep.subr.mxu0 0.0
    %2907 = vmatpush1.msra.mxu0 0.0
    %2908 = vmatprep.subr.mxu0 0.0
    %2909 = vmatpush1.msra.mxu0 0.0
    %2910 = vmatprep.subr.mxu0 0.0
    %2911 = vmatpush1.msra.mxu0 0.0
    %2912 = vmatprep.subr.mxu0 0.0
    %2913 = vmatpush1.msra.mxu0 0.0
    %2914 = vmatprep.subr.mxu0 0.0
    %2915 = vmatpush1.msra.mxu0 0.0
    %2916 = vmatprep.subr.mxu0 0.0
    %2917 = vmatpush1.msra.mxu0 0.0
    %2918 = vmatprep.mubr.f32.mxu0 0.0
    %2919 = vmatmul.mubr.f32.gmra.mrb[0].mxu0 %v2852
    %v2920 = vpop.f32.mrb[0].mxu0
    %v2921 = vadd.f32 %v2850, %v2920
    %v2922 = vpop.f32.mrb[0].mxu0
    %2923 = vdwg.mxu0
    %vm2924 = vcmp.gt.f32.partialorder %v2921, 0.0
    %v2925 = vmin.f32 %v2921, 0.0
    %v2926 = vmul.f32 %v2925, 1.442695
    %v2927 = vpow.pop %v2926
    %v2928 = vsub.f32 %v2927, 1.0
    %v2929 = vsel %vm2924, %v2921, %v2928
    %v2930 = vld [vmem:[#allocation2 + $0x320] sm:$0xff]
    %v2931 = vld [vmem:[#allocation2 + $0x328] sm:$0xff]
    %v2932 = vld [vmem:[#allocation2 + $0x330] sm:$0xff]
    %v2933 = vld [vmem:[#allocation2 + $0x338] sm:$0xff]
    %v2934 = vld [vmem:[#allocation2 + $0x3a0] sm:$0x1]
    %v2935 = vlaneseq
    %v2936 = vshrl.u32 %v2935, 7
    %v2937 = vsub.s32 0, %v2936
    %v2938 = vrot.slane %v2934, %v2937
    %v2940 = vsel %vm36, %v2929, 0
    %2942 = vmatprep.subr.mxu0 0.0
    %2943 = vmatpush1.msra.mxu0 %v2930
    %2944 = vmatprep.subr.mxu0 0.0
    %2945 = vmatpush1.msra.mxu0 %v2931
    %2946 = vmatprep.subr.mxu0 0.0
    %2947 = vmatpush1.msra.mxu0 %v2932
    %2948 = vmatprep.subr.mxu0 0.0
    %2949 = vmatpush1.msra.mxu0 %v2933
    %2950 = vmatprep.subr.mxu0 0.0
    %2951 = vmatpush1.msra.mxu0 0.0
    %2952 = vmatprep.subr.mxu0 0.0
    %2953 = vmatpush1.msra.mxu0 0.0
    %2954 = vmatprep.subr.mxu0 0.0
    %2955 = vmatpush1.msra.mxu0 0.0
    %2956 = vmatprep.subr.mxu0 0.0
    %2957 = vmatpush1.msra.mxu0 0.0
    %2958 = vmatprep.subr.mxu0 0.0
    %2959 = vmatpush1.msra.mxu0 0.0
    %2960 = vmatprep.subr.mxu0 0.0
    %2961 = vmatpush1.msra.mxu0 0.0
    %2962 = vmatprep.subr.mxu0 0.0
    %2963 = vmatpush1.msra.mxu0 0.0
    %2964 = vmatprep.subr.mxu0 0.0
    %2965 = vmatpush1.msra.mxu0 0.0
    %2966 = vmatprep.subr.mxu0 0.0
    %2967 = vmatpush1.msra.mxu0 0.0
    %2968 = vmatprep.subr.mxu0 0.0
    %2969 = vmatpush1.msra.mxu0 0.0
    %2970 = vmatprep.subr.mxu0 0.0
    %2971 = vmatpush1.msra.mxu0 0.0
    %2972 = vmatprep.subr.mxu0 0.0
    %2973 = vmatpush1.msra.mxu0 0.0
    %2974 = vmatprep.subr.mxu0 0.0
    %2975 = vmatpush1.msra.mxu0 0.0
    %2976 = vmatprep.subr.mxu0 0.0
    %2977 = vmatpush1.msra.mxu0 0.0
    %2978 = vmatprep.subr.mxu0 0.0
    %2979 = vmatpush1.msra.mxu0 0.0
    %2980 = vmatprep.subr.mxu0 0.0
    %2981 = vmatpush1.msra.mxu0 0.0
    %2982 = vmatprep.subr.mxu0 0.0
    %2983 = vmatpush1.msra.mxu0 0.0
    %2984 = vmatprep.subr.mxu0 0.0
    %2985 = vmatpush1.msra.mxu0 0.0
    %2986 = vmatprep.subr.mxu0 0.0
    %2987 = vmatpush1.msra.mxu0 0.0
    %2988 = vmatprep.subr.mxu0 0.0
    %2989 = vmatpush1.msra.mxu0 0.0
    %2990 = vmatprep.subr.mxu0 0.0
    %2991 = vmatpush1.msra.mxu0 0.0
    %2992 = vmatprep.subr.mxu0 0.0
    %2993 = vmatpush1.msra.mxu0 0.0
    %2994 = vmatprep.subr.mxu0 0.0
    %2995 = vmatpush1.msra.mxu0 0.0
    %2996 = vmatprep.subr.mxu0 0.0
    %2997 = vmatpush1.msra.mxu0 0.0
    %2998 = vmatprep.subr.mxu0 0.0
    %2999 = vmatpush1.msra.mxu0 0.0
    %3000 = vmatprep.subr.mxu0 0.0
    %3001 = vmatpush1.msra.mxu0 0.0
    %3002 = vmatprep.subr.mxu0 0.0
    %3003 = vmatpush1.msra.mxu0 0.0
    %3004 = vmatprep.subr.mxu0 0.0
    %3005 = vmatpush1.msra.mxu0 0.0
    %3006 = vmatprep.mubr.f32.mxu0 0.0
    %3007 = vmatmul.mubr.f32.gmra.mrb[0].mxu0 %v2940
    %v3008 = vpop.f32.mrb[0].mxu0
    %v3009 = vadd.f32 %v2938, %v3008
    %v3010 = vpop.f32.mrb[0].mxu0
    %3011 = vdwg.mxu0
    %vm3012 = vcmp.gt.f32.partialorder %v3009, 0.0
    %v3013 = vmin.f32 %v3009, 0.0
    %v3014 = vmul.f32 %v3013, 1.442695
    %v3015 = vpow.pop %v3014
    %v3016 = vsub.f32 %v3015, 1.0
    %v3017 = vsel %vm3012, %v3009, %v3016
    %v3018 = vld [vmem:[#allocation2 + $0x340] sm:$0xff]
    %v3019 = vld [vmem:[#allocation2 + $0x348] sm:$0xff]
    %v3020 = vld [vmem:[#allocation2 + $0x350] sm:$0xff]
    %v3021 = vld [vmem:[#allocation2 + $0x358] sm:$0xff]
    %v3022 = vld [vmem:[#allocation2 + $0x3a8] sm:$0x1]
    %v3023 = vlaneseq
    %v3024 = vshrl.u32 %v3023, 7
    %v3025 = vsub.s32 0, %v3024
    %v3026 = vrot.slane %v3022, %v3025
    %v3028 = vsel %vm36, %v3017, 0
    %3030 = vmatprep.subr.mxu0 0.0
    %3031 = vmatpush1.msra.mxu0 %v3018
    %3032 = vmatprep.subr.mxu0 0.0
    %3033 = vmatpush1.msra.mxu0 %v3019
    %3034 = vmatprep.subr.mxu0 0.0
    %3035 = vmatpush1.msra.mxu0 %v3020
    %3036 = vmatprep.subr.mxu0 0.0
    %3037 = vmatpush1.msra.mxu0 %v3021
    %3038 = vmatprep.subr.mxu0 0.0
    %3039 = vmatpush1.msra.mxu0 0.0
    %3040 = vmatprep.subr.mxu0 0.0
    %3041 = vmatpush1.msra.mxu0 0.0
    %3042 = vmatprep.subr.mxu0 0.0
    %3043 = vmatpush1.msra.mxu0 0.0
    %3044 = vmatprep.subr.mxu0 0.0
    %3045 = vmatpush1.msra.mxu0 0.0
    %3046 = vmatprep.subr.mxu0 0.0
    %3047 = vmatpush1.msra.mxu0 0.0
    %3048 = vmatprep.subr.mxu0 0.0
    %3049 = vmatpush1.msra.mxu0 0.0
    %3050 = vmatprep.subr.mxu0 0.0
    %3051 = vmatpush1.msra.mxu0 0.0
    %3052 = vmatprep.subr.mxu0 0.0
    %3053 = vmatpush1.msra.mxu0 0.0
    %3054 = vmatprep.subr.mxu0 0.0
    %3055 = vmatpush1.msra.mxu0 0.0
    %3056 = vmatprep.subr.mxu0 0.0
    %3057 = vmatpush1.msra.mxu0 0.0
    %3058 = vmatprep.subr.mxu0 0.0
    %3059 = vmatpush1.msra.mxu0 0.0
    %3060 = vmatprep.subr.mxu0 0.0
    %3061 = vmatpush1.msra.mxu0 0.0
    %3062 = vmatprep.subr.mxu0 0.0
    %3063 = vmatpush1.msra.mxu0 0.0
    %3064 = vmatprep.subr.mxu0 0.0
    %3065 = vmatpush1.msra.mxu0 0.0
    %3066 = vmatprep.subr.mxu0 0.0
    %3067 = vmatpush1.msra.mxu0 0.0
    %3068 = vmatprep.subr.mxu0 0.0
    %3069 = vmatpush1.msra.mxu0 0.0
    %3070 = vmatprep.subr.mxu0 0.0
    %3071 = vmatpush1.msra.mxu0 0.0
    %3072 = vmatprep.subr.mxu0 0.0
    %3073 = vmatpush1.msra.mxu0 0.0
    %3074 = vmatprep.subr.mxu0 0.0
    %3075 = vmatpush1.msra.mxu0 0.0
    %3076 = vmatprep.subr.mxu0 0.0
    %3077 = vmatpush1.msra.mxu0 0.0
    %3078 = vmatprep.subr.mxu0 0.0
    %3079 = vmatpush1.msra.mxu0 0.0
    %3080 = vmatprep.subr.mxu0 0.0
    %3081 = vmatpush1.msra.mxu0 0.0
    %3082 = vmatprep.subr.mxu0 0.0
    %3083 = vmatpush1.msra.mxu0 0.0
    %3084 = vmatprep.subr.mxu0 0.0
    %3085 = vmatpush1.msra.mxu0 0.0
    %3086 = vmatprep.subr.mxu0 0.0
    %3087 = vmatpush1.msra.mxu0 0.0
    %3088 = vmatprep.subr.mxu0 0.0
    %3089 = vmatpush1.msra.mxu0 0.0
    %3090 = vmatprep.subr.mxu0 0.0
    %3091 = vmatpush1.msra.mxu0 0.0
    %3092 = vmatprep.subr.mxu0 0.0
    %3093 = vmatpush1.msra.mxu0 0.0
    %3094 = vmatprep.mubr.f32.mxu0 0.0
    %3095 = vmatmul.mubr.f32.gmra.mrb[0].mxu0 %v3028
    %v3096 = vpop.f32.mrb[0].mxu0
    %v3097 = vadd.f32 %v3026, %v3096
    %v3098 = vpop.f32.mrb[0].mxu0
    %3099 = vdwg.mxu0
    %v3100 = vsub.f32 0.0, %v3097
    %v3101 = vmul.f32 %v3100, 1.442695
    %v3102 = vpow.pop %v3101
    %v3103 = vadd.f32 %v3102, 1.0
    %v3104 = vrcp.pop %v3103
    %v3105 = vmul.f32 1.0, %v3104
    %v3106 = vmul.f32 %v3105, 6.0
    %v3107 = vsub.f32 %v3106, 3.0
    %3108 = vrot.lane.b32.xlu0 %v3017, 48
    %v3109 = vpop.permute.xlu0 %3108
    %3112 = vrot.lane.b32.xlu0 %v3107, 80
    %v3113 = vpop.permute.xlu0 %3112
    %v3115 = vsel %vm2495, %v2657, %v3109
    %vm3116 = vcmask 654336
    %v3117 = vsel %vm3116, %v3115, %v3113
    %vm3118 = vcmask 662528
    %v3119 = vsel %vm3118, %v3117, 0.0
    %3120 = vst [vmem:[%s3] sm:$0x3] %v3119
    // Predicated region
    $region18: #{gat_forward.1} parent=1 // pred_check
      _
    $region19: #{gat_forward.1} parent=1 // pred_check_branch
      %3122 = sbr.rel (0) target = $region21
    $region20: #{gat_forward.1} parent=1 // pred_region
      _
    $region21: #{gat_forward.1} parent=1 // pred_fallthru
      _
    // Predicated region
    $region22: #{gat_forward.1} parent=1 // pred_check
      _
    $region23: #{gat_forward.1} parent=1 // pred_check_branch
      %3124 = sbr.rel (0) target = $region25
    $region24: #{gat_forward.1} parent=1 // pred_region
      _
    $region25: #{gat_forward.1} parent=1 // pred_fallthru
      _
    %3125 = vsyncpa [#allocation3], 1

</llo_original>
